<compile_context>
chip_gen: v6e
topology: v6e:2x2x1
jax: 0.10.0
libtpu: 0.0.40
codegen_flags: <defaults>
</compile_context>

<pallas_src>
import functools

import jax
import jax.numpy as jnp
from jax import lax
from jax.experimental import pallas as pl
from jax.experimental.pallas import tpu as pltpu

_VMEM_LIMIT_BYTES = 32 * 1024 * 1024   # explicit scoped-VMEM budget (safe v5e/v6e/v7x)
_TM_TARGET = 512                       # M-tile rows: multiple of 8 and of 128 (v5e MXU)
_LANE = 128                            # lane width for lane-dense output padding


def _choose_tm(m, target=_TM_TARGET):
    # Full-array block for small M (always legal), otherwise a 512-row tile
    # (multiple of 8/128); partial last block is masked by Pallas.
    return m if m <= target else target


# ---------------------------------------------------------------------------
# Kernel 1: y = activation(x @ w + b)   (bf16 MXU inputs, f32 accumulate)
# ---------------------------------------------------------------------------
def _matmul_bias_act_kernel(x_ref, w_ref, b_ref, o_ref, *, activation):
    y = jnp.dot(x_ref[...], w_ref[...], preferred_element_type=jnp.float32)
    y = y + b_ref[...]                       # bias + activation in f32 (v5e-safe)
    if activation == "leaky_relu":           # nn.LeakyReLU default slope = 0.01
        y = jnp.where(y >= 0.0, y, 0.01 * y)
    elif activation == "relu":
        y = jnp.maximum(y, 0.0)
    o_ref[...] = y.astype(o_ref.dtype)


def pallas_linear(x, w, b, *, activation="none", out_dtype=jnp.float32):
    """activation(x @ w + b).  x: (M, K), w: (K, N), b: (N,). Tiled over M."""
    M, K = x.shape
    K2, N = w.shape
    assert K == K2, (K, K2)
    x = x.astype(jnp.bfloat16)
    w = w.astype(jnp.bfloat16)
    b = b.reshape(1, N).astype(jnp.float32)
    tm = _choose_tm(M)
    kern = functools.partial(_matmul_bias_act_kernel, activation=activation)
    return pl.pallas_call(
        kern,
        out_shape=jax.ShapeDtypeStruct((M, N), out_dtype),
        grid=(pl.cdiv(M, tm),),
        in_specs=[
            pl.BlockSpec((tm, K), lambda i: (i, 0)),   # x: M-tiled
            pl.BlockSpec((K, N), lambda i: (0, 0)),    # w: resident across grid
            pl.BlockSpec((1, N), lambda i: (0, 0)),    # b
        ],
        out_specs=pl.BlockSpec((tm, N), lambda i: (i, 0)),
        compiler_params=pltpu.CompilerParams(
            dimension_semantics=("parallel",),
            vmem_limit_bytes=_VMEM_LIMIT_BYTES,
        ),
    )(x, w, b)


# ---------------------------------------------------------------------------
# Kernel 2: fused inverse model
#   pred = relu(phi1 @ W1a + phi2 @ W1b + b1) @ W2 + b2   (hidden never hits HBM)
# ---------------------------------------------------------------------------
def _inverse_model_kernel(p1_ref, p2_ref, w1a_ref, w1b_ref, b1_ref,
                          w2_ref, b2_ref, o_ref):
    h = jnp.dot(p1_ref[...].astype(jnp.bfloat16), w1a_ref[...],
                preferred_element_type=jnp.float32)
    h = h + jnp.dot(p2_ref[...].astype(jnp.bfloat16), w1b_ref[...],
                    preferred_element_type=jnp.float32)
    h = jnp.maximum(h + b1_ref[...], 0.0)
    y = jnp.dot(h.astype(jnp.bfloat16), w2_ref[...],
                preferred_element_type=jnp.float32)
    o_ref[...] = y + b2_ref[...]


def pallas_inverse_model(phi1, phi2, w1a, w1b, b1, w2p, b2p):
    M, F = phi1.shape
    Np = w2p.shape[1]                       # lane-padded output width (multiple of 128)
    b1 = b1.reshape(1, F).astype(jnp.float32)
    b2p = b2p.reshape(1, Np).astype(jnp.float32)
    tm = _choose_tm(M)
    return pl.pallas_call(
        _inverse_model_kernel,
        out_shape=jax.ShapeDtypeStruct((M, Np), jnp.float32),
        grid=(pl.cdiv(M, tm),),
        in_specs=[
            pl.BlockSpec((tm, F), lambda i: (i, 0)),
            pl.BlockSpec((tm, F), lambda i: (i, 0)),
            pl.BlockSpec((F, F), lambda i: (0, 0)),
            pl.BlockSpec((F, F), lambda i: (0, 0)),
            pl.BlockSpec((1, F), lambda i: (0, 0)),
            pl.BlockSpec((F, Np), lambda i: (0, 0)),
            pl.BlockSpec((1, Np), lambda i: (0, 0)),
        ],
        out_specs=pl.BlockSpec((tm, Np), lambda i: (i, 0)),
        compiler_params=pltpu.CompilerParams(
            dimension_semantics=("parallel",),
            vmem_limit_bytes=_VMEM_LIMIT_BYTES,
        ),
    )(phi1, phi2, w1a.astype(jnp.bfloat16), w1b.astype(jnp.bfloat16), b1,
      w2p.astype(jnp.bfloat16), b2p)


# ---------------------------------------------------------------------------
# Conv2d (valid padding) in NHWC via shifted-slice im2col + Pallas matmul
# ---------------------------------------------------------------------------
def _im2col_nhwc(x, kh, kw, stride):
    """x: (N, H, W, C) -> (N*OH*OW, kh*kw*C), K ordered (dy, dx, c) with c fastest."""
    N, H, W, C = x.shape
    OH = (H - kh) // stride + 1
    OW = (W - kw) // stride + 1
    taps = []
    for dy in range(kh):
        for dx in range(kw):
            taps.append(lax.slice(
                x,
                (0, dy, dx, 0),
                (N, dy + (OH - 1) * stride + 1, dx + (OW - 1) * stride + 1, C),
                (1, stride, stride, 1)))
    patches = jnp.concatenate(taps, axis=-1)            # (N, OH, OW, kh*kw*C)
    return patches.reshape(N * OH * OW, kh * kw * C), OH, OW


def pallas_conv2d_nhwc(x, w2d, b, *, kh, kw, stride, activation,
                       out_dtype=jnp.bfloat16):
    """x: (N, H, W, Cin); w2d: (kh*kw*Cin, Cout) tap-major / Cin-fastest."""
    N = x.shape[0]
    patches, OH, OW = _im2col_nhwc(x, kh, kw, stride)
    y = pallas_linear(patches, w2d, b, activation=activation, out_dtype=out_dtype)
    Cout = w2d.shape[1]
    return y.reshape(N, OH, OW, Cout)                   # stays NHWC, no transpose


# ---------------------------------------------------------------------------
# Parameters: PyTorch-layout init + one-time conversion to kernel layout
# ---------------------------------------------------------------------------
def _conv_out_hw(h, w):
    h1, w1 = (h - 8) // 4 + 1, (w - 8) // 4 + 1
    h2, w2 = (h1 - 4) // 2 + 1, (w1 - 4) // 2 + 1
    return h2 - 3 + 1, w2 - 3 + 1


def init_params(key, image_shape, action_size, feature_size=512):
    """Deterministic PyTorch-layout parameters (uniform fan-in bounds)."""
    c, h, w = image_shape
    oh, ow = _conv_out_hw(h, w)
    conv_out = 64 * oh * ow
    ks = jax.random.split(key, 12)

    def u(k, shape, fan_in):
        bound = 1.0 / float(fan_in) ** 0.5
        return jax.random.uniform(k, shape, jnp.float32, -bound, bound)

    return {
        # BurdaHead encoder (PyTorch layouts)
        "c1w": u(ks[0], (32, c, 8, 8), c * 8 * 8),  "c1b": u(ks[1], (32,), c * 8 * 8),
        "c2w": u(ks[2], (64, 32, 4, 4), 32 * 16),   "c2b": u(ks[3], (64,), 32 * 16),
        "c3w": u(ks[4], (64, 64, 3, 3), 64 * 9),    "c3b": u(ks[5], (64,), 64 * 9),
        # fc weight stored (in, out); rows in torch (C, H, W)-flatten order
        "fcw": u(ks[6], (conv_out, feature_size), conv_out),
        "fcb": u(ks[7], (feature_size,), conv_out),
        # inverse model, stored (in, out)
        "i1w": u(ks[8], (2 * feature_size, feature_size), 2 * feature_size),
        "i1b": u(ks[9], (feature_size,), 2 * feature_size),
        "i2w": u(ks[10], (feature_size, action_size), feature_size),
        "i2b": u(ks[11], (action_size,), feature_size),
    }


def prepare_params(p, image_shape, action_size, feature_size=512):
    """One-time conversion PyTorch layout -> NHWC/bf16 kernel layout."""
    _, h, w = image_shape
    oh, ow = _conv_out_hw(h, w)

    def conv_w(wt):  # (Cout, Cin, kh, kw) -> (kh*kw*Cin, Cout), Cin fastest
        co, ci, kh, kw = wt.shape
        return wt.transpose(2, 3, 1, 0).reshape(kh * kw * ci, co).astype(jnp.bfloat16)

    # Fold torch NCHW-flatten ordering into the fc weight (rows reordered C,H,W -> H,W,C)
    fcw_hwc = (p["fcw"].reshape(64, oh, ow, feature_size)
               .transpose(1, 2, 0, 3)
               .reshape(oh * ow * 64, feature_size)
               .astype(jnp.bfloat16))

    # Lane-dense final head: pad action columns to a multiple of 128 (sliced later)
    npad = max(_LANE, -(-action_size // _LANE) * _LANE)
    i2w_p = jnp.zeros((feature_size, npad), jnp.float32).at[:, :action_size].set(p["i2w"])
    i2b_p = jnp.zeros((npad,), jnp.float32).at[:action_size].set(p["i2b"])

    return {
        "c1w": conv_w(p["c1w"]), "c1b": p["c1b"].astype(jnp.float32),
        "c2w": conv_w(p["c2w"]), "c2b": p["c2b"].astype(jnp.float32),
        "c3w": conv_w(p["c3w"]), "c3b": p["c3b"].astype(jnp.float32),
        "fcw": fcw_hwc, "fcb": p["fcb"].astype(jnp.float32),
        "i1wa": p["i1w"][:feature_size].astype(jnp.bfloat16),   # phi1 half of W1
        "i1wb": p["i1w"][feature_size:].astype(jnp.bfloat16),   # phi2 half of W1
        "i1b": p["i1b"].astype(jnp.float32),
        "i2w": i2w_p.astype(jnp.bfloat16), "i2b": i2b_p,
    }


# ---------------------------------------------------------------------------
# Forward pass (matches EpisodicCuriosity.forward semantics)
# ---------------------------------------------------------------------------
def episodic_curiosity_forward(params, obs1, obs2, *, action_size, feature_size=512):
    T, B = obs1.shape[:2]
    C, H, W = obs1.shape[2:]
    TB = T * B

    # Batch obs1/obs2 through the encoder in one pass; NCHW -> NHWC exactly once.
    obs = jnp.concatenate([obs1.reshape(TB, C, H, W),
                           obs2.reshape(TB, C, H, W)], axis=0)
    x = jnp.transpose(obs, (0, 2, 3, 1)).astype(jnp.bfloat16)      # (2*TB, H, W, C)

    h = pallas_conv2d_nhwc(x, params["c1w"], params["c1b"],
                           kh=8, kw=8, stride=4, activation="leaky_relu")
    h = pallas_conv2d_nhwc(h, params["c2w"], params["c2b"],
                           kh=4, kw=4, stride=2, activation="leaky_relu")
    h = pallas_conv2d_nhwc(h, params["c3w"], params["c3b"],
                           kh=3, kw=3, stride=1, activation="leaky_relu")
    flat = h.reshape(2 * TB, -1)                 # NHWC flatten; fcw rows pre-permuted
    phi = pallas_linear(flat, params["fcw"], params["fcb"],
                        activation="none", out_dtype=jnp.float32)  # (2*TB, 512)
    phi1, phi2 = phi[:TB], phi[TB:]

    pred = pallas_inverse_model(phi1, phi2, params["i1wa"], params["i1wb"],
                                params["i1b"], params["i2w"], params["i2b"])
    pred = pred[:, :action_size]                 # strip lane padding

    return phi1.reshape(T, B, feature_size), pred.reshape(T, B, action_size)


if __name__ == "__main__":
    # Small, self-consistent shapes:
    #   image_shape=(4, 36, 36) -> conv out (64, 1, 1) -> conv_output_size = 64
    #   T = 2, B = 4, action_size = 6, feature_size = 512
    #   (conv1 im2col M = 2*T*B*8*8 = 1024 -> exercises the 2-block M grid)
    image_shape = (4, 36, 36)
    action_size = 6
    feature_size = 512
    T, B = 2, 4

    key = jax.random.PRNGKey(0)
    kp, k1, k2 = jax.random.split(key, 3)
    torch_layout_params = init_params(kp, image_shape, action_size, feature_size)
    params = prepare_params(torch_layout_params, image_shape, action_size, feature_size)

    obs1 = jax.random.normal(k1, (T, B) + image_shape, dtype=jnp.float32)
    obs2 = jax.random.normal(k2, (T, B) + image_shape, dtype=jnp.float32)

    fwd = jax.jit(functools.partial(episodic_curiosity_forward,
                                    action_size=action_size,
                                    feature_size=feature_size))
    phi1, predicted_action = fwd(params, obs1, obs2)
    jax.block_until_ready((phi1, predicted_action))

    assert phi1.shape == (T, B, feature_size)
    assert predicted_action.shape == (T, B, action_size)
    assert bool(jnp.all(jnp.isfinite(phi1)))
    assert bool(jnp.all(jnp.isfinite(predicted_action)))
    print("KERNEL_OK")
</pallas_src>

<mosaic_0001>
module attributes {stable_mosaic.version = 11 : i64} {
  func.func @_matmul_bias_act_kernel(%arg0: i32, %arg1: memref<512x256xbf16, #tpu.memory_space<vmem>>, %arg2: memref<256x32xbf16, #tpu.memory_space<vmem>>, %arg3: memref<1x32xf32, #tpu.memory_space<vmem>>, %arg4: memref<512x32xbf16, #tpu.memory_space<vmem>>) attributes {dimension_semantics = [#tpu.dimension_semantics<parallel>], iteration_bounds = array<i64: 2>, scalar_prefetch = 0 : i64, scratch_operands = 0 : i64, tpu.core_type = #tpu.core_type<tc>, window_params = [{transform_indices = @transform_0, window_bounds = array<i64: 512, 256>}, {pipeline_mode = #tpu.pipeline_mode<synchronous>, transform_indices = @transform_1, window_bounds = array<i64: 256, 32>}, {pipeline_mode = #tpu.pipeline_mode<synchronous>, transform_indices = @transform_2, window_bounds = array<i64: 1, 32>}, {transform_indices = @transform_3, window_bounds = array<i64: 512, 32>}]} {
    %c0 = arith.constant 0 : index
    %c0_0 = arith.constant 0 : index
    %0 = vector.load %arg1[%c0, %c0_0] : memref<512x256xbf16, #tpu.memory_space<vmem>>, vector<512x256xbf16>
    %c0_1 = arith.constant 0 : index
    %c0_2 = arith.constant 0 : index
    %1 = vector.load %arg2[%c0_1, %c0_2] : memref<256x32xbf16, #tpu.memory_space<vmem>>, vector<256x32xbf16>
    %cst = arith.constant dense<0.000000e+00> : vector<512x32xf32>
    %2 = tpu.matmul %0, %1, %cst {dimension_numbers = #tpu.dot_dimension_numbers<[1], [0], [0], [1], [0, 0, 1, 1], [], []>} : vector<512x256xbf16>, vector<256x32xbf16>, vector<512x32xf32> -> vector<512x32xf32>
    %c0_3 = arith.constant 0 : index
    %c0_4 = arith.constant 0 : index
    %3 = vector.load %arg3[%c0_3, %c0_4] : memref<1x32xf32, #tpu.memory_space<vmem>>, vector<1x32xf32>
    %4 = vector.broadcast %3 : vector<1x32xf32> to vector<512x32xf32>
    %5 = arith.addf %2, %4 : vector<512x32xf32>
    %cst_5 = arith.constant 0.000000e+00 : f32
    %6 = vector.broadcast %cst_5 : f32 to vector<512x32xf32>
    %7 = arith.cmpf oge, %5, %6 : vector<512x32xf32>
    %cst_6 = arith.constant 0.00999999977 : f32
    %8 = vector.broadcast %cst_6 : f32 to vector<512x32xf32>
    %9 = arith.mulf %8, %5 : vector<512x32xf32>
    %10 = arith.select %7, %5, %9 : vector<512x32xi1>, vector<512x32xf32>
    %11 = arith.truncf %10 : vector<512x32xf32> to vector<512x32xbf16>
    %c0_7 = arith.constant 0 : index
    %c0_8 = arith.constant 0 : index
    %12 = vector.load %arg4[%c0_7, %c0_8] : memref<512x32xbf16, #tpu.memory_space<vmem>>, vector<512x32xbf16>
    tpu.vector_store %arg4[%c0_7, %c0_8], %11 {strides = array<i32>} : memref<512x32xbf16, #tpu.memory_space<vmem>>, vector<512x32xbf16>,
    return
  }
  func.func @transform_0(%arg0: i32) -> (i32, i32) {
    %c0_i32 = arith.constant 0 : i32
    %c0_i32_0 = arith.constant 0 : i32
    return %arg0, %c0_i32 : i32, i32
  }
  func.func @transform_1(%arg0: i32) -> (i32, i32) {
    %c0_i32 = arith.constant 0 : i32
    %c0_i32_0 = arith.constant 0 : i32
    %c0_i32_1 = arith.constant 0 : i32
    return %c0_i32, %c0_i32_0 : i32, i32
  }
  func.func @transform_2(%arg0: i32) -> (i32, i32) {
    %c0_i32 = arith.constant 0 : i32
    %c0_i32_0 = arith.constant 0 : i32
    %c0_i32_1 = arith.constant 0 : i32
    return %c0_i32, %c0_i32_0 : i32, i32
  }
  func.func @transform_3(%arg0: i32) -> (i32, i32) {
    %c0_i32 = arith.constant 0 : i32
    %c0_i32_0 = arith.constant 0 : i32
    return %arg0, %c0_i32 : i32, i32
  }
}

module attributes {stable_mosaic.version = 11 : i64} {
  func.func @_matmul_bias_act_kernel(%arg0: i32, %arg1: memref<144x512xbf16, #tpu.memory_space<vmem>>, %arg2: memref<512x64xbf16, #tpu.memory_space<vmem>>, %arg3: memref<1x64xf32, #tpu.memory_space<vmem>>, %arg4: memref<144x64xbf16, #tpu.memory_space<vmem>>) attributes {dimension_semantics = [#tpu.dimension_semantics<parallel>], iteration_bounds = array<i64: 1>, scalar_prefetch = 0 : i64, scratch_operands = 0 : i64, tpu.core_type = #tpu.core_type<tc>, window_params = [{transform_indices = @transform_0, window_bounds = array<i64: 144, 512>}, {pipeline_mode = #tpu.pipeline_mode<synchronous>, transform_indices = @transform_1, window_bounds = array<i64: 512, 64>}, {pipeline_mode = #tpu.pipeline_mode<synchronous>, transform_indices = @transform_2, window_bounds = array<i64: 1, 64>}, {transform_indices = @transform_3, window_bounds = array<i64: 144, 64>}]} {
    %c0 = arith.constant 0 : index
    %c0_0 = arith.constant 0 : index
    %0 = vector.load %arg1[%c0, %c0_0] : memref<144x512xbf16, #tpu.memory_space<vmem>>, vector<144x512xbf16>
    %c0_1 = arith.constant 0 : index
    %c0_2 = arith.constant 0 : index
    %1 = vector.load %arg2[%c0_1, %c0_2] : memref<512x64xbf16, #tpu.memory_space<vmem>>, vector<512x64xbf16>
    %cst = arith.constant dense<0.000000e+00> : vector<144x64xf32>
    %2 = tpu.matmul %0, %1, %cst {dimension_numbers = #tpu.dot_dimension_numbers<[1], [0], [0], [1], [0, 0, 1, 1], [], []>} : vector<144x512xbf16>, vector<512x64xbf16>, vector<144x64xf32> -> vector<144x64xf32>
    %c0_3 = arith.constant 0 : index
    %c0_4 = arith.constant 0 : index
    %3 = vector.load %arg3[%c0_3, %c0_4] : memref<1x64xf32, #tpu.memory_space<vmem>>, vector<1x64xf32>
    %4 = vector.broadcast %3 : vector<1x64xf32> to vector<144x64xf32>
    %5 = arith.addf %2, %4 : vector<144x64xf32>
    %cst_5 = arith.constant 0.000000e+00 : f32
    %6 = vector.broadcast %cst_5 : f32 to vector<144x64xf32>
    %7 = arith.cmpf oge, %5, %6 : vector<144x64xf32>
    %cst_6 = arith.constant 0.00999999977 : f32
    %8 = vector.broadcast %cst_6 : f32 to vector<144x64xf32>
    %9 = arith.mulf %8, %5 : vector<144x64xf32>
    %10 = arith.select %7, %5, %9 : vector<144x64xi1>, vector<144x64xf32>
    %11 = arith.truncf %10 : vector<144x64xf32> to vector<144x64xbf16>
    %c0_7 = arith.constant 0 : index
    %c0_8 = arith.constant 0 : index
    %12 = vector.load %arg4[%c0_7, %c0_8] : memref<144x64xbf16, #tpu.memory_space<vmem>>, vector<144x64xbf16>
    tpu.vector_store %arg4[%c0_7, %c0_8], %11 {strides = array<i32>} : memref<144x64xbf16, #tpu.memory_space<vmem>>, vector<144x64xbf16>,
    return
  }
  func.func @transform_0(%arg0: i32) -> (i32, i32) {
    %c0_i32 = arith.constant 0 : i32
    %c0_i32_0 = arith.constant 0 : i32
    return %arg0, %c0_i32 : i32, i32
  }
  func.func @transform_1(%arg0: i32) -> (i32, i32) {
    %c0_i32 = arith.constant 0 : i32
    %c0_i32_0 = arith.constant 0 : i32
    %c0_i32_1 = arith.constant 0 : i32
    return %c0_i32, %c0_i32_0 : i32, i32
  }
  func.func @transform_2(%arg0: i32) -> (i32, i32) {
    %c0_i32 = arith.constant 0 : i32
    %c0_i32_0 = arith.constant 0 : i32
    %c0_i32_1 = arith.constant 0 : i32
    return %c0_i32, %c0_i32_0 : i32, i32
  }
  func.func @transform_3(%arg0: i32) -> (i32, i32) {
    %c0_i32 = arith.constant 0 : i32
    %c0_i32_0 = arith.constant 0 : i32
    return %arg0, %c0_i32 : i32, i32
  }
}

module attributes {stable_mosaic.version = 11 : i64} {
  func.func @_matmul_bias_act_kernel(%arg0: i32, %arg1: memref<16x576xbf16, #tpu.memory_space<vmem>>, %arg2: memref<576x64xbf16, #tpu.memory_space<vmem>>, %arg3: memref<1x64xf32, #tpu.memory_space<vmem>>, %arg4: memref<16x64xbf16, #tpu.memory_space<vmem>>) attributes {dimension_semantics = [#tpu.dimension_semantics<parallel>], iteration_bounds = array<i64: 1>, scalar_prefetch = 0 : i64, scratch_operands = 0 : i64, tpu.core_type = #tpu.core_type<tc>, window_params = [{transform_indices = @transform_0, window_bounds = array<i64: 16, 576>}, {pipeline_mode = #tpu.pipeline_mode<synchronous>, transform_indices = @transform_1, window_bounds = array<i64: 576, 64>}, {pipeline_mode = #tpu.pipeline_mode<synchronous>, transform_indices = @transform_2, window_bounds = array<i64: 1, 64>}, {transform_indices = @transform_3, window_bounds = array<i64: 16, 64>}]} {
    %c0 = arith.constant 0 : index
    %c0_0 = arith.constant 0 : index
    %0 = vector.load %arg1[%c0, %c0_0] : memref<16x576xbf16, #tpu.memory_space<vmem>>, vector<16x576xbf16>
    %c0_1 = arith.constant 0 : index
    %c0_2 = arith.constant 0 : index
    %1 = vector.load %arg2[%c0_1, %c0_2] : memref<576x64xbf16, #tpu.memory_space<vmem>>, vector<576x64xbf16>
    %cst = arith.constant dense<0.000000e+00> : vector<16x64xf32>
    %2 = tpu.matmul %0, %1, %cst {dimension_numbers = #tpu.dot_dimension_numbers<[1], [0], [0], [1], [0, 0, 1, 1], [], []>} : vector<16x576xbf16>, vector<576x64xbf16>, vector<16x64xf32> -> vector<16x64xf32>
    %c0_3 = arith.constant 0 : index
    %c0_4 = arith.constant 0 : index
    %3 = vector.load %arg3[%c0_3, %c0_4] : memref<1x64xf32, #tpu.memory_space<vmem>>, vector<1x64xf32>
    %4 = vector.broadcast %3 : vector<1x64xf32> to vector<16x64xf32>
    %5 = arith.addf %2, %4 : vector<16x64xf32>
    %cst_5 = arith.constant 0.000000e+00 : f32
    %6 = vector.broadcast %cst_5 : f32 to vector<16x64xf32>
    %7 = arith.cmpf oge, %5, %6 : vector<16x64xf32>
    %cst_6 = arith.constant 0.00999999977 : f32
    %8 = vector.broadcast %cst_6 : f32 to vector<16x64xf32>
    %9 = arith.mulf %8, %5 : vector<16x64xf32>
    %10 = arith.select %7, %5, %9 : vector<16x64xi1>, vector<16x64xf32>
    %11 = arith.truncf %10 : vector<16x64xf32> to vector<16x64xbf16>
    %c0_7 = arith.constant 0 : index
    %c0_8 = arith.constant 0 : index
    %12 = vector.load %arg4[%c0_7, %c0_8] : memref<16x64xbf16, #tpu.memory_space<vmem>>, vector<16x64xbf16>
    tpu.vector_store %arg4[%c0_7, %c0_8], %11 {strides = array<i32>} : memref<16x64xbf16, #tpu.memory_space<vmem>>, vector<16x64xbf16>,
    return
  }
  func.func @transform_0(%arg0: i32) -> (i32, i32) {
    %c0_i32 = arith.constant 0 : i32
    %c0_i32_0 = arith.constant 0 : i32
    return %arg0, %c0_i32 : i32, i32
  }
  func.func @transform_1(%arg0: i32) -> (i32, i32) {
    %c0_i32 = arith.constant 0 : i32
    %c0_i32_0 = arith.constant 0 : i32
    %c0_i32_1 = arith.constant 0 : i32
    return %c0_i32, %c0_i32_0 : i32, i32
  }
  func.func @transform_2(%arg0: i32) -> (i32, i32) {
    %c0_i32 = arith.constant 0 : i32
    %c0_i32_0 = arith.constant 0 : i32
    %c0_i32_1 = arith.constant 0 : i32
    return %c0_i32, %c0_i32_0 : i32, i32
  }
  func.func @transform_3(%arg0: i32) -> (i32, i32) {
    %c0_i32 = arith.constant 0 : i32
    %c0_i32_0 = arith.constant 0 : i32
    return %arg0, %c0_i32 : i32, i32
  }
}

module attributes {stable_mosaic.version = 11 : i64} {
  func.func @_matmul_bias_act_kernel(%arg0: i32, %arg1: memref<16x64xbf16, #tpu.memory_space<vmem>>, %arg2: memref<64x512xbf16, #tpu.memory_space<vmem>>, %arg3: memref<1x512xf32, #tpu.memory_space<vmem>>, %arg4: memref<16x512xf32, #tpu.memory_space<vmem>>) attributes {dimension_semantics = [#tpu.dimension_semantics<parallel>], iteration_bounds = array<i64: 1>, scalar_prefetch = 0 : i64, scratch_operands = 0 : i64, tpu.core_type = #tpu.core_type<tc>, window_params = [{transform_indices = @transform_0, window_bounds = array<i64: 16, 64>}, {pipeline_mode = #tpu.pipeline_mode<synchronous>, transform_indices = @transform_1, window_bounds = array<i64: 64, 512>}, {pipeline_mode = #tpu.pipeline_mode<synchronous>, transform_indices = @transform_2, window_bounds = array<i64: 1, 512>}, {transform_indices = @transform_3, window_bounds = array<i64: 16, 512>}]} {
    %c0 = arith.constant 0 : index
    %c0_0 = arith.constant 0 : index
    %0 = vector.load %arg1[%c0, %c0_0] : memref<16x64xbf16, #tpu.memory_space<vmem>>, vector<16x64xbf16>
    %c0_1 = arith.constant 0 : index
    %c0_2 = arith.constant 0 : index
    %1 = vector.load %arg2[%c0_1, %c0_2] : memref<64x512xbf16, #tpu.memory_space<vmem>>, vector<64x512xbf16>
    %cst = arith.constant dense<0.000000e+00> : vector<16x512xf32>
    %2 = tpu.matmul %0, %1, %cst {dimension_numbers = #tpu.dot_dimension_numbers<[1], [0], [0], [1], [0, 0, 1, 1], [], []>} : vector<16x64xbf16>, vector<64x512xbf16>, vector<16x512xf32> -> vector<16x512xf32>
    %c0_3 = arith.constant 0 : index
    %c0_4 = arith.constant 0 : index
    %3 = vector.load %arg3[%c0_3, %c0_4] : memref<1x512xf32, #tpu.memory_space<vmem>>, vector<1x512xf32>
    %4 = vector.broadcast %3 : vector<1x512xf32> to vector<16x512xf32>
    %5 = arith.addf %2, %4 : vector<16x512xf32>
    %c0_5 = arith.constant 0 : index
    %c0_6 = arith.constant 0 : index
    %6 = vector.load %arg4[%c0_5, %c0_6] : memref<16x512xf32, #tpu.memory_space<vmem>>, vector<16x512xf32>
    tpu.vector_store %arg4[%c0_5, %c0_6], %5 {strides = array<i32>} : memref<16x512xf32, #tpu.memory_space<vmem>>, vector<16x512xf32>,
    return
  }
  func.func @transform_0(%arg0: i32) -> (i32, i32) {
    %c0_i32 = arith.constant 0 : i32
    %c0_i32_0 = arith.constant 0 : i32
    return %arg0, %c0_i32 : i32, i32
  }
  func.func @transform_1(%arg0: i32) -> (i32, i32) {
    %c0_i32 = arith.constant 0 : i32
    %c0_i32_0 = arith.constant 0 : i32
    %c0_i32_1 = arith.constant 0 : i32
    return %c0_i32, %c0_i32_0 : i32, i32
  }
  func.func @transform_2(%arg0: i32) -> (i32, i32) {
    %c0_i32 = arith.constant 0 : i32
    %c0_i32_0 = arith.constant 0 : i32
    %c0_i32_1 = arith.constant 0 : i32
    return %c0_i32, %c0_i32_0 : i32, i32
  }
  func.func @transform_3(%arg0: i32) -> (i32, i32) {
    %c0_i32 = arith.constant 0 : i32
    %c0_i32_0 = arith.constant 0 : i32
    return %arg0, %c0_i32 : i32, i32
  }
}

module attributes {stable_mosaic.version = 11 : i64} {
  func.func @_inverse_model_kernel(%arg0: i32, %arg1: memref<8x512xf32, #tpu.memory_space<vmem>>, %arg2: memref<8x512xf32, #tpu.memory_space<vmem>>, %arg3: memref<512x512xbf16, #tpu.memory_space<vmem>>, %arg4: memref<512x512xbf16, #tpu.memory_space<vmem>>, %arg5: memref<1x512xf32, #tpu.memory_space<vmem>>, %arg6: memref<512x128xbf16, #tpu.memory_space<vmem>>, %arg7: memref<1x128xf32, #tpu.memory_space<vmem>>, %arg8: memref<8x128xf32, #tpu.memory_space<vmem>>) attributes {dimension_semantics = [#tpu.dimension_semantics<parallel>], iteration_bounds = array<i64: 1>, scalar_prefetch = 0 : i64, scratch_operands = 0 : i64, tpu.core_type = #tpu.core_type<tc>, window_params = [{transform_indices = @transform_0, window_bounds = array<i64: 8, 512>}, {transform_indices = @transform_1, window_bounds = array<i64: 8, 512>}, {pipeline_mode = #tpu.pipeline_mode<synchronous>, transform_indices = @transform_2, window_bounds = array<i64: 512, 512>}, {pipeline_mode = #tpu.pipeline_mode<synchronous>, transform_indices = @transform_3, window_bounds = array<i64: 512, 512>}, {pipeline_mode = #tpu.pipeline_mode<synchronous>, transform_indices = @transform_4, window_bounds = array<i64: 1, 512>}, {pipeline_mode = #tpu.pipeline_mode<synchronous>, transform_indices = @transform_5, window_bounds = array<i64: 512, 128>}, {pipeline_mode = #tpu.pipeline_mode<synchronous>, transform_indices = @transform_6, window_bounds = array<i64: 1, 128>}, {transform_indices = @transform_7, window_bounds = array<i64: 8, 128>}]} {
    %c0 = arith.constant 0 : index
    %c0_0 = arith.constant 0 : index
    %0 = vector.load %arg1[%c0, %c0_0] : memref<8x512xf32, #tpu.memory_space<vmem>>, vector<8x512xf32>
    %1 = arith.truncf %0 : vector<8x512xf32> to vector<8x512xbf16>
    %c0_1 = arith.constant 0 : index
    %c0_2 = arith.constant 0 : index
    %2 = vector.load %arg3[%c0_1, %c0_2] : memref<512x512xbf16, #tpu.memory_space<vmem>>, vector<512x512xbf16>
    %cst = arith.constant dense<0.000000e+00> : vector<8x512xf32>
    %3 = tpu.matmul %1, %2, %cst {dimension_numbers = #tpu.dot_dimension_numbers<[1], [0], [0], [1], [0, 0, 1, 1], [], []>} : vector<8x512xbf16>, vector<512x512xbf16>, vector<8x512xf32> -> vector<8x512xf32>
    %c0_3 = arith.constant 0 : index
    %c0_4 = arith.constant 0 : index
    %4 = vector.load %arg2[%c0_3, %c0_4] : memref<8x512xf32, #tpu.memory_space<vmem>>, vector<8x512xf32>
    %5 = arith.truncf %4 : vector<8x512xf32> to vector<8x512xbf16>
    %c0_5 = arith.constant 0 : index
    %c0_6 = arith.constant 0 : index
    %6 = vector.load %arg4[%c0_5, %c0_6] : memref<512x512xbf16, #tpu.memory_space<vmem>>, vector<512x512xbf16>
    %cst_7 = arith.constant dense<0.000000e+00> : vector<8x512xf32>
    %7 = tpu.matmul %5, %6, %cst_7 {dimension_numbers = #tpu.dot_dimension_numbers<[1], [0], [0], [1], [0, 0, 1, 1], [], []>} : vector<8x512xbf16>, vector<512x512xbf16>, vector<8x512xf32> -> vector<8x512xf32>
    %8 = arith.addf %3, %7 : vector<8x512xf32>
    %c0_8 = arith.constant 0 : index
    %c0_9 = arith.constant 0 : index
    %9 = vector.load %arg5[%c0_8, %c0_9] : memref<1x512xf32, #tpu.memory_space<vmem>>, vector<1x512xf32>
    %10 = vector.broadcast %9 : vector<1x512xf32> to vector<8x512xf32>
    %11 = arith.addf %8, %10 : vector<8x512xf32>
    %cst_10 = arith.constant 0.000000e+00 : f32
    %12 = vector.broadcast %cst_10 : f32 to vector<8x512xf32>
    %13 = arith.maximumf %11, %12 : vector<8x512xf32>
    %14 = arith.truncf %13 : vector<8x512xf32> to vector<8x512xbf16>
    %c0_11 = arith.constant 0 : index
    %c0_12 = arith.constant 0 : index
    %15 = vector.load %arg6[%c0_11, %c0_12] : memref<512x128xbf16, #tpu.memory_space<vmem>>, vector<512x128xbf16>
    %cst_13 = arith.constant dense<0.000000e+00> : vector<8x128xf32>
    %16 = tpu.matmul %14, %15, %cst_13 {dimension_numbers = #tpu.dot_dimension_numbers<[1], [0], [0], [1], [0, 0, 1, 1], [], []>} : vector<8x512xbf16>, vector<512x128xbf16>, vector<8x128xf32> -> vector<8x128xf32>
    %c0_14 = arith.constant 0 : index
    %c0_15 = arith.constant 0 : index
    %17 = vector.load %arg7[%c0_14, %c0_15] : memref<1x128xf32, #tpu.memory_space<vmem>>, vector<1x128xf32>
    %18 = vector.broadcast %17 : vector<1x128xf32> to vector<8x128xf32>
    %19 = arith.addf %16, %18 : vector<8x128xf32>
    %c0_16 = arith.constant 0 : index
    %c0_17 = arith.constant 0 : index
    %20 = vector.load %arg8[%c0_16, %c0_17] : memref<8x128xf32, #tpu.memory_space<vmem>>, vector<8x128xf32>
    tpu.vector_store %arg8[%c0_16, %c0_17], %19 {strides = array<i32>} : memref<8x128xf32, #tpu.memory_space<vmem>>, vector<8x128xf32>,
    return
  }
  func.func @transform_0(%arg0: i32) -> (i32, i32) {
    %c0_i32 = arith.constant 0 : i32
    %c0_i32_0 = arith.constant 0 : i32
    return %arg0, %c0_i32 : i32, i32
  }
  func.func @transform_1(%arg0: i32) -> (i32, i32) {
    %c0_i32 = arith.constant 0 : i32
    %c0_i32_0 = arith.constant 0 : i32
    return %arg0, %c0_i32 : i32, i32
  }
  func.func @transform_2(%arg0: i32) -> (i32, i32) {
    %c0_i32 = arith.constant 0 : i32
    %c0_i32_0 = arith.constant 0 : i32
    %c0_i32_1 = arith.constant 0 : i32
    return %c0_i32, %c0_i32_0 : i32, i32
  }
  func.func @transform_3(%arg0: i32) -> (i32, i32) {
    %c0_i32 = arith.constant 0 : i32
    %c0_i32_0 = arith.constant 0 : i32
    %c0_i32_1 = arith.constant 0 : i32
    return %c0_i32, %c0_i32_0 : i32, i32
  }
  func.func @transform_4(%arg0: i32) -> (i32, i32) {
    %c0_i32 = arith.constant 0 : i32
    %c0_i32_0 = arith.constant 0 : i32
    %c0_i32_1 = arith.constant 0 : i32
    return %c0_i32, %c0_i32_0 : i32, i32
  }
  func.func @transform_5(%arg0: i32) -> (i32, i32) {
    %c0_i32 = arith.constant 0 : i32
    %c0_i32_0 = arith.constant 0 : i32
    %c0_i32_1 = arith.constant 0 : i32
    return %c0_i32, %c0_i32_0 : i32, i32
  }
  func.func @transform_6(%arg0: i32) -> (i32, i32) {
    %c0_i32 = arith.constant 0 : i32
    %c0_i32_0 = arith.constant 0 : i32
    %c0_i32_1 = arith.constant 0 : i32
    return %c0_i32, %c0_i32_0 : i32, i32
  }
  func.func @transform_7(%arg0: i32) -> (i32, i32) {
    %c0_i32 = arith.constant 0 : i32
    %c0_i32_0 = arith.constant 0 : i32
    return %arg0, %c0_i32 : i32, i32
  }
}

</mosaic_0001>

<llo_original>
// kernel: episodic_curiosity_forward.5
$region0: #{episodic_curiosity_forward.5}
  #allocation0 [shape = 'u32[]', space=smem, size = 0x4, offset = 0x4, fixed_abs, tag = 'smem constant byte address 0x4 - core index']
  #allocation1 [shape = 'u32[144,128]{1,0:T(1,128)}', space=vmem, size = 0x12000, scoped, tag = 'internal scratch']
  %s0 = inlined_call_operand.vmem [shape: bf16[1024,256], index: 0, kind: input, shape index: {}]
  %s1 = inlined_call_operand.vmem [shape: bf16[256,32], index: 1, kind: input, shape index: {}]
  %s2 = inlined_call_operand.vmem [shape: f32[1,32], index: 2, kind: input, shape index: {}]
  %s3 = inlined_call_operand.vmem [shape: bf16[1024,32], index: 3, kind: output, shape index: {}]
  %s4 = sld [smem:[#allocation0]]
  $region45: #{episodic_curiosity_forward.5} parent=0
    _
  %s6 = ssub.s32 1, %s4
  %s7 = scalar_select 0, %s6, %s4
  loop: start=0, step=1, limit=4
  $region2: #{episodic_curiosity_forward.5} parent=0 // loop_pre_header
    _
  $region3: #{episodic_curiosity_forward.5} parent=0 // loop_header
    %s9 = sphi 0, %s13
    %p10 = scmp.ge.s32.totalorder %s9, 4
    %s19 = sphi 0, %s21
    %s22 = sphi 0, %s19
    %s23 = sphi 0, %s22
    %s39 = sphi 0, %s23
    %s43 = sphi 0, %s43
    %s45 = sphi 0, %s43
    %s46 = sphi 0, %s45
    %s60 = sphi 0, %s46
    %s64 = sphi 0, %s64
    %s66 = sphi 0, %s64
    %s67 = sphi 0, %s66
    %s81 = sphi 0, %s67
    %s87 = sphi 0, %s89
    %s90 = sphi 0, %s87
    %s91 = sphi 0, %s90
    %s107 = sphi 0, %s91
  $region4: #{episodic_curiosity_forward.5} parent=0 // loop_header_branch
    %12 = sbr.rel (%p10) target = $region8
  $region5: #{episodic_curiosity_forward.5} parent=0 // loop_body
    %s14 = ssub.s32 %s9, 1
    %s15 = ssub.s32 %s9, 2
    %s16 = sadd.s32 %s9, 1
    %s17 = ssub.s32 %s9, %s16
    %p18 = scmp.eq.s32.totalorder %s17, 0
    %s20 = sadd.s32 %s19, 1
    %s21 = scalar_select %p18, %s19, %s20
    %p24 = pneg %p18
    %p25 = scmp.eq.s32.totalorder %s9, 1
    %p26 = por %p24, %p25
    %p27 = scmp.ne.s32.totalorder %s19, %s22
    %p28 = scmp.eq.s32.totalorder %s9, 0
    %p29 = por %p27, %p28
    %p30 = scmp.ne.s32.totalorder %s19, %s22
    %p31 = scmp.eq.s32.totalorder %s14, 1
    %p32 = por %p30, %p31
    %p33 = scmp.ne.s32.totalorder %s22, %s23
    %p34 = scmp.eq.s32.totalorder %s14, 0
    %p35 = por %p33, %p34
    %p36 = scmp.ne.s32.totalorder %s22, %s23
    %p37 = scmp.eq.s32.totalorder %s15, 1
    %p38 = por %p36, %p37
    %p40 = scmp.ne.s32.totalorder %s23, %s39
    %p41 = scmp.eq.s32.totalorder %s15, 0
    %p42 = por %p40, %p41
    %s44 = sadd.s32 %s43, 1
    %p47 = scmp.eq.s32.totalorder %s9, 1
    %p48 = scmp.ne.s32.totalorder %s43, %s45
    %p49 = scmp.eq.s32.totalorder %s9, 0
    %p50 = por %p48, %p49
    %p51 = scmp.ne.s32.totalorder %s43, %s45
    %p52 = scmp.eq.s32.totalorder %s14, 1
    %p53 = por %p51, %p52
    %p54 = scmp.ne.s32.totalorder %s45, %s46
    %p55 = scmp.eq.s32.totalorder %s14, 0
    %p56 = por %p54, %p55
    %p57 = scmp.ne.s32.totalorder %s45, %s46
    %p58 = scmp.eq.s32.totalorder %s15, 1
    %p59 = por %p57, %p58
    %p61 = scmp.ne.s32.totalorder %s46, %s60
    %p62 = scmp.eq.s32.totalorder %s15, 0
    %p63 = por %p61, %p62
    %s65 = sadd.s32 %s64, 1
    %p68 = scmp.eq.s32.totalorder %s9, 1
    %p69 = scmp.ne.s32.totalorder %s64, %s66
    %p70 = scmp.eq.s32.totalorder %s9, 0
    %p71 = por %p69, %p70
    %p72 = scmp.ne.s32.totalorder %s64, %s66
    %p73 = scmp.eq.s32.totalorder %s14, 1
    %p74 = por %p72, %p73
    %p75 = scmp.ne.s32.totalorder %s66, %s67
    %p76 = scmp.eq.s32.totalorder %s14, 0
    %p77 = por %p75, %p76
    %p78 = scmp.ne.s32.totalorder %s66, %s67
    %p79 = scmp.eq.s32.totalorder %s15, 1
    %p80 = por %p78, %p79
    %p82 = scmp.ne.s32.totalorder %s67, %s81
    %p83 = scmp.eq.s32.totalorder %s15, 0
    %p84 = por %p82, %p83
    %s85 = ssub.s32 %s9, %s16
    %p86 = scmp.eq.s32.totalorder %s85, 0
    %s88 = sadd.s32 %s87, 1
    %s89 = scalar_select %p86, %s87, %s88
    %p92 = pneg %p86
    %p93 = scmp.eq.s32.totalorder %s9, 1
    %p94 = por %p92, %p93
    %p95 = scmp.ne.s32.totalorder %s87, %s90
    %p96 = scmp.eq.s32.totalorder %s9, 0
    %p97 = por %p95, %p96
    %p98 = scmp.ne.s32.totalorder %s87, %s90
    %p99 = scmp.eq.s32.totalorder %s14, 1
    %p100 = por %p98, %p99
    %p101 = scmp.ne.s32.totalorder %s90, %s91
    %p102 = scmp.eq.s32.totalorder %s14, 0
    %p103 = por %p101, %p102
    %p104 = scmp.ne.s32.totalorder %s90, %s91
    %p105 = scmp.eq.s32.totalorder %s15, 1
    %p106 = por %p104, %p105
    %p108 = scmp.ne.s32.totalorder %s91, %s107
    %p109 = scmp.eq.s32.totalorder %s15, 0
    %p110 = por %p108, %p109
    %p111 = scmp.le.s32.totalorder 1, %s9
    %p112 = scmp.lt.s32.totalorder %s9, 3
    %p113 = pnand %p111, %p112
    %p114 = pneg %p113
    // Predicated region
    $region9: #{episodic_curiosity_forward.5} parent=5 // pred_check
      _
    $region10: #{episodic_curiosity_forward.5} parent=5 // pred_check_branch
      %116 = sbr.rel (%p113) target = $region12
    $region11: #{episodic_curiosity_forward.5} parent=5 // pred_region
      %s117 = ssub.s32 %s9, 1
      // Predicated region
      $region13: #{episodic_curiosity_forward.5} parent=11 // pred_check
        %p118 = pneg %p56
      $region14: #{episodic_curiosity_forward.5} parent=11 // pred_check_branch
        %120 = sbr.rel (%p118) target = $region16
      $region15: #{episodic_curiosity_forward.5} parent=11 // pred_region
        _
      $region16: #{episodic_curiosity_forward.5} parent=11 // pred_fallthru
        _
      // Predicated region
      $region17: #{episodic_curiosity_forward.5} parent=11 // pred_check
        %p121 = pneg %p77
      $region18: #{episodic_curiosity_forward.5} parent=11 // pred_check_branch
        %123 = sbr.rel (%p121) target = $region20
      $region19: #{episodic_curiosity_forward.5} parent=11 // pred_region
        _
      $region20: #{episodic_curiosity_forward.5} parent=11 // pred_fallthru
        _
    $region12: #{episodic_curiosity_forward.5} parent=5 // pred_fallthru
      _
    %p124 = scmp.lt.s32.totalorder %s9, 2
    // Predicated region
    $region21: #{episodic_curiosity_forward.5} parent=5 // pred_check
      %p125 = pneg %p124
    $region22: #{episodic_curiosity_forward.5} parent=5 // pred_check_branch
      %127 = sbr.rel (%p125) target = $region24
    $region23: #{episodic_curiosity_forward.5} parent=5 // pred_region
      // Predicated region
      $region25: #{episodic_curiosity_forward.5} parent=23 // pred_check
        %p128 = pneg %p29
      $region26: #{episodic_curiosity_forward.5} parent=23 // pred_check_branch
        %130 = sbr.rel (%p128) target = $region28
      $region27: #{episodic_curiosity_forward.5} parent=23 // pred_region
        %s131 = smul.u32 64, %s9
        %p132 = scmp.lt.s32.totalorder %s131, 127
        %s133 = scalar_select %p132, %s131, 127
        %s134 = smul.addr %s133, 2
        %s135 = smul.addr %s134, 4
        %s136 = scalar_lea.vmem %s0, %s135
        %s137 = smul.u32 64, %s9
      $region28: #{episodic_curiosity_forward.5} parent=23 // pred_fallthru
        _
    $region24: #{episodic_curiosity_forward.5} parent=5 // pred_fallthru
      _
    %p138 = scmp.le.s32.totalorder 1, %s9
    %p139 = scmp.lt.s32.totalorder %s9, 3
    %p140 = pnand %p138, %p139
    %p141 = pneg %p140
    // Predicated region
    $region29: #{episodic_curiosity_forward.5} parent=5 // pred_check
      _
    $region30: #{episodic_curiosity_forward.5} parent=5 // pred_check_branch
      %143 = sbr.rel (%p140) target = $region32
    $region31: #{episodic_curiosity_forward.5} parent=5 // pred_region
      %s144 = ssub.s32 %s9, 1
      %s145 = smul.u32 64, %s14
      %p146 = scmp.lt.s32.totalorder %s145, 127
      %s147 = scalar_select %p146, %s145, 127
      %s148 = smul.addr %s147, 2
      %s149 = smul.addr %s148, 4
      %s150 = scalar_lea.vmem %s0, %s149
      %p151 = pneg %p35
      %p152 = pneg %p32
      %p153 = pneg %p56
      %p154 = pneg %p53
      %p155 = pneg %p77
      %p156 = pneg %p74
      %p157 = pneg %p103
      %p158 = pneg %p100
      %s159 = smul.u32 64, %s14
      %p160 = scmp.lt.s32.totalorder %s159, 127
      %s161 = scalar_select %p160, %s159, 127
      %s162 = smul.addr %s161, 4
      %s163 = scalar_lea.vmem %s3, %s162
      %s164 = smul.u32 64, %s14
      %p165 = scmp.lt.s32.totalorder %s164, 127
      %s166 = scalar_select %p165, %s164, 127
      %s167 = smul.addr %s166, 2
      %s168 = smul.addr %s167, 4
      %s169 = scalar_lea.vmem %s0, %s168
      %s170 = smul.u32 64, %s14
      %s171 = smul.u32 64, %s14
      %p172 = scmp.lt.s32.totalorder %s171, 127
      %s173 = scalar_select %p172, %s171, 127
      %s174 = smul.addr %s173, 4
      %s175 = scalar_lea.vmem %s3, %s174
      %s176 = smul.u32 64, %s14
      %v178 = vld [vmem:[%s169] sm:$0xff]
      %v179 = vld [vmem:[%s169 + $0x8] sm:$0xff]
      %v180 = vld [vmem:[%s169 + $0x10] sm:$0xff]
      %v181 = vld [vmem:[%s169 + $0x18] sm:$0xff]
      %v182 = vld [vmem:[%s169 + $0x20] sm:$0xff]
      %v183 = vld [vmem:[%s169 + $0x28] sm:$0xff]
      %v184 = vld [vmem:[%s169 + $0x30] sm:$0xff]
      %v185 = vld [vmem:[%s169 + $0x38] sm:$0xff]
      %v186 = vld [vmem:[%s169 + $0x40] sm:$0xff]
      %v187 = vld [vmem:[%s169 + $0x48] sm:$0xff]
      %v188 = vld [vmem:[%s169 + $0x50] sm:$0xff]
      %v189 = vld [vmem:[%s169 + $0x58] sm:$0xff]
      %v190 = vld [vmem:[%s169 + $0x60] sm:$0xff]
      %v191 = vld [vmem:[%s169 + $0x68] sm:$0xff]
      %v192 = vld [vmem:[%s169 + $0x70] sm:$0xff]
      %v193 = vld [vmem:[%s169 + $0x78] sm:$0xff]
      %v194 = vld [vmem:[%s169 + $0x80] sm:$0xff]
      %v195 = vld [vmem:[%s169 + $0x88] sm:$0xff]
      %v196 = vld [vmem:[%s169 + $0x90] sm:$0xff]
      %v197 = vld [vmem:[%s169 + $0x98] sm:$0xff]
      %v198 = vld [vmem:[%s169 + $0xa0] sm:$0xff]
      %v199 = vld [vmem:[%s169 + $0xa8] sm:$0xff]
      %v200 = vld [vmem:[%s169 + $0xb0] sm:$0xff]
      %v201 = vld [vmem:[%s169 + $0xb8] sm:$0xff]
      %v202 = vld [vmem:[%s169 + $0xc0] sm:$0xff]
      %v203 = vld [vmem:[%s169 + $0xc8] sm:$0xff]
      %v204 = vld [vmem:[%s169 + $0xd0] sm:$0xff]
      %v205 = vld [vmem:[%s169 + $0xd8] sm:$0xff]
      %v206 = vld [vmem:[%s169 + $0xe0] sm:$0xff]
      %v207 = vld [vmem:[%s169 + $0xe8] sm:$0xff]
      %v208 = vld [vmem:[%s169 + $0xf0] sm:$0xff]
      %v209 = vld [vmem:[%s169 + $0xf8] sm:$0xff]
      %v210 = vld [vmem:[%s169 + $0x100] sm:$0xff]
      %v211 = vld [vmem:[%s169 + $0x108] sm:$0xff]
      %v212 = vld [vmem:[%s169 + $0x110] sm:$0xff]
      %v213 = vld [vmem:[%s169 + $0x118] sm:$0xff]
      %v214 = vld [vmem:[%s169 + $0x120] sm:$0xff]
      %v215 = vld [vmem:[%s169 + $0x128] sm:$0xff]
      %v216 = vld [vmem:[%s169 + $0x130] sm:$0xff]
      %v217 = vld [vmem:[%s169 + $0x138] sm:$0xff]
      %v218 = vld [vmem:[%s169 + $0x140] sm:$0xff]
      %v219 = vld [vmem:[%s169 + $0x148] sm:$0xff]
      %v220 = vld [vmem:[%s169 + $0x150] sm:$0xff]
      %v221 = vld [vmem:[%s169 + $0x158] sm:$0xff]
      %v222 = vld [vmem:[%s169 + $0x160] sm:$0xff]
      %v223 = vld [vmem:[%s169 + $0x168] sm:$0xff]
      %v224 = vld [vmem:[%s169 + $0x170] sm:$0xff]
      %v225 = vld [vmem:[%s169 + $0x178] sm:$0xff]
      %v226 = vld [vmem:[%s169 + $0x180] sm:$0xff]
      %v227 = vld [vmem:[%s169 + $0x188] sm:$0xff]
      %v228 = vld [vmem:[%s169 + $0x190] sm:$0xff]
      %v229 = vld [vmem:[%s169 + $0x198] sm:$0xff]
      %v230 = vld [vmem:[%s169 + $0x1a0] sm:$0xff]
      %v231 = vld [vmem:[%s169 + $0x1a8] sm:$0xff]
      %v232 = vld [vmem:[%s169 + $0x1b0] sm:$0xff]
      %v233 = vld [vmem:[%s169 + $0x1b8] sm:$0xff]
      %v234 = vld [vmem:[%s169 + $0x1c0] sm:$0xff]
      %v235 = vld [vmem:[%s169 + $0x1c8] sm:$0xff]
      %v236 = vld [vmem:[%s169 + $0x1d0] sm:$0xff]
      %v237 = vld [vmem:[%s169 + $0x1d8] sm:$0xff]
      %v238 = vld [vmem:[%s169 + $0x1e0] sm:$0xff]
      %v239 = vld [vmem:[%s169 + $0x1e8] sm:$0xff]
      %v240 = vld [vmem:[%s169 + $0x1f0] sm:$0xff]
      %v241 = vld [vmem:[%s169 + $0x1f8] sm:$0xff]
      %v242 = vld [vmem:[%s1] sm:$0xf]
      %v243 = vld [vmem:[%s1 + $0x4] sm:$0xf]
      %v244 = vld [vmem:[%s1 + $0x8] sm:$0xf]
      %v245 = vld [vmem:[%s1 + $0xc] sm:$0xf]
      %v246 = vld [vmem:[%s1 + $0x10] sm:$0xf]
      %v247 = vld [vmem:[%s1 + $0x14] sm:$0xf]
      %v248 = vld [vmem:[%s1 + $0x18] sm:$0xf]
      %v249 = vld [vmem:[%s1 + $0x1c] sm:$0xf]
      %v250 = vld [vmem:[%s1 + $0x20] sm:$0xf]
      %v251 = vld [vmem:[%s1 + $0x24] sm:$0xf]
      %v252 = vld [vmem:[%s1 + $0x28] sm:$0xf]
      %v253 = vld [vmem:[%s1 + $0x2c] sm:$0xf]
      %v254 = vld [vmem:[%s1 + $0x30] sm:$0xf]
      %v255 = vld [vmem:[%s1 + $0x34] sm:$0xf]
      %v256 = vld [vmem:[%s1 + $0x38] sm:$0xf]
      %v257 = vld [vmem:[%s1 + $0x3c] sm:$0xf]
      %v258 = vld [vmem:[%s1 + $0x40] sm:$0xf]
      %v259 = vld [vmem:[%s1 + $0x44] sm:$0xf]
      %v260 = vld [vmem:[%s1 + $0x48] sm:$0xf]
      %v261 = vld [vmem:[%s1 + $0x4c] sm:$0xf]
      %v262 = vld [vmem:[%s1 + $0x50] sm:$0xf]
      %v263 = vld [vmem:[%s1 + $0x54] sm:$0xf]
      %v264 = vld [vmem:[%s1 + $0x58] sm:$0xf]
      %v265 = vld [vmem:[%s1 + $0x5c] sm:$0xf]
      %v266 = vld [vmem:[%s1 + $0x60] sm:$0xf]
      %v267 = vld [vmem:[%s1 + $0x64] sm:$0xf]
      %v268 = vld [vmem:[%s1 + $0x68] sm:$0xf]
      %v269 = vld [vmem:[%s1 + $0x6c] sm:$0xf]
      %v270 = vld [vmem:[%s1 + $0x70] sm:$0xf]
      %v271 = vld [vmem:[%s1 + $0x74] sm:$0xf]
      %v272 = vld [vmem:[%s1 + $0x78] sm:$0xf]
      %v273 = vld [vmem:[%s1 + $0x7c] sm:$0xf]
      %v274 = vld [vmem:[%s2] sm:$0x1]
      %v276 = vlaneseq
      %v277 = vshrl.u32 %v276, 7
      %v278 = vsub.s32 0, %v277
      %v279 = vrot.slane %v274, %v278
      %v345 = vunpack.c.l.b16 %v178
      %v346 = vunpack.c.h.b16 %v178
      %v347 = vunpack.c.l.b16 %v179
      %v348 = vunpack.c.h.b16 %v179
      %v349 = vunpack.c.l.b16 %v180
      %v350 = vunpack.c.h.b16 %v180
      %v351 = vunpack.c.l.b16 %v181
      %v352 = vunpack.c.h.b16 %v181
      %v353 = vunpack.c.l.b16 %v182
      %v354 = vunpack.c.h.b16 %v182
      %v355 = vunpack.c.l.b16 %v183
      %v356 = vunpack.c.h.b16 %v183
      %v357 = vunpack.c.l.b16 %v184
      %v358 = vunpack.c.h.b16 %v184
      %v359 = vunpack.c.l.b16 %v185
      %v360 = vunpack.c.h.b16 %v185
      %v361 = vunpack.c.l.b16 %v186
      %v362 = vunpack.c.h.b16 %v186
      %v363 = vunpack.c.l.b16 %v187
      %v364 = vunpack.c.h.b16 %v187
      %v365 = vunpack.c.l.b16 %v188
      %v366 = vunpack.c.h.b16 %v188
      %v367 = vunpack.c.l.b16 %v189
      %v368 = vunpack.c.h.b16 %v189
      %v369 = vunpack.c.l.b16 %v190
      %v370 = vunpack.c.h.b16 %v190
      %v371 = vunpack.c.l.b16 %v191
      %v372 = vunpack.c.h.b16 %v191
      %v373 = vunpack.c.l.b16 %v192
      %v374 = vunpack.c.h.b16 %v192
      %v375 = vunpack.c.l.b16 %v193
      %v376 = vunpack.c.h.b16 %v193
      %v377 = vunpack.c.l.b16 %v194
      %v378 = vunpack.c.h.b16 %v194
      %v379 = vunpack.c.l.b16 %v195
      %v380 = vunpack.c.h.b16 %v195
      %v381 = vunpack.c.l.b16 %v196
      %v382 = vunpack.c.h.b16 %v196
      %v383 = vunpack.c.l.b16 %v197
      %v384 = vunpack.c.h.b16 %v197
      %v385 = vunpack.c.l.b16 %v198
      %v386 = vunpack.c.h.b16 %v198
      %v387 = vunpack.c.l.b16 %v199
      %v388 = vunpack.c.h.b16 %v199
      %v389 = vunpack.c.l.b16 %v200
      %v390 = vunpack.c.h.b16 %v200
      %v391 = vunpack.c.l.b16 %v201
      %v392 = vunpack.c.h.b16 %v201
      %v393 = vunpack.c.l.b16 %v202
      %v394 = vunpack.c.h.b16 %v202
      %v395 = vunpack.c.l.b16 %v203
      %v396 = vunpack.c.h.b16 %v203
      %v397 = vunpack.c.l.b16 %v204
      %v398 = vunpack.c.h.b16 %v204
      %v399 = vunpack.c.l.b16 %v205
      %v400 = vunpack.c.h.b16 %v205
      %v401 = vunpack.c.l.b16 %v206
      %v402 = vunpack.c.h.b16 %v206
      %v403 = vunpack.c.l.b16 %v207
      %v404 = vunpack.c.h.b16 %v207
      %v405 = vunpack.c.l.b16 %v208
      %v406 = vunpack.c.h.b16 %v208
      %v407 = vunpack.c.l.b16 %v209
      %v408 = vunpack.c.h.b16 %v209
      %v409 = vunpack.c.l.b16 %v210
      %v410 = vunpack.c.h.b16 %v210
      %v411 = vunpack.c.l.b16 %v211
      %v412 = vunpack.c.h.b16 %v211
      %v413 = vunpack.c.l.b16 %v212
      %v414 = vunpack.c.h.b16 %v212
      %v415 = vunpack.c.l.b16 %v213
      %v416 = vunpack.c.h.b16 %v213
      %v417 = vunpack.c.l.b16 %v214
      %v418 = vunpack.c.h.b16 %v214
      %v419 = vunpack.c.l.b16 %v215
      %v420 = vunpack.c.h.b16 %v215
      %v421 = vunpack.c.l.b16 %v216
      %v422 = vunpack.c.h.b16 %v216
      %v423 = vunpack.c.l.b16 %v217
      %v424 = vunpack.c.h.b16 %v217
      %v425 = vunpack.c.l.b16 %v218
      %v426 = vunpack.c.h.b16 %v218
      %v427 = vunpack.c.l.b16 %v219
      %v428 = vunpack.c.h.b16 %v219
      %v429 = vunpack.c.l.b16 %v220
      %v430 = vunpack.c.h.b16 %v220
      %v431 = vunpack.c.l.b16 %v221
      %v432 = vunpack.c.h.b16 %v221
      %v433 = vunpack.c.l.b16 %v222
      %v434 = vunpack.c.h.b16 %v222
      %v435 = vunpack.c.l.b16 %v223
      %v436 = vunpack.c.h.b16 %v223
      %v437 = vunpack.c.l.b16 %v224
      %v438 = vunpack.c.h.b16 %v224
      %v439 = vunpack.c.l.b16 %v225
      %v440 = vunpack.c.h.b16 %v225
      %v441 = vunpack.c.l.b16 %v226
      %v442 = vunpack.c.h.b16 %v226
      %v443 = vunpack.c.l.b16 %v227
      %v444 = vunpack.c.h.b16 %v227
      %v445 = vunpack.c.l.b16 %v228
      %v446 = vunpack.c.h.b16 %v228
      %v447 = vunpack.c.l.b16 %v229
      %v448 = vunpack.c.h.b16 %v229
      %v449 = vunpack.c.l.b16 %v230
      %v450 = vunpack.c.h.b16 %v230
      %v451 = vunpack.c.l.b16 %v231
      %v452 = vunpack.c.h.b16 %v231
      %v453 = vunpack.c.l.b16 %v232
      %v454 = vunpack.c.h.b16 %v232
      %v455 = vunpack.c.l.b16 %v233
      %v456 = vunpack.c.h.b16 %v233
      %v457 = vunpack.c.l.b16 %v234
      %v458 = vunpack.c.h.b16 %v234
      %v459 = vunpack.c.l.b16 %v235
      %v460 = vunpack.c.h.b16 %v235
      %v461 = vunpack.c.l.b16 %v236
      %v462 = vunpack.c.h.b16 %v236
      %v463 = vunpack.c.l.b16 %v237
      %v464 = vunpack.c.h.b16 %v237
      %v465 = vunpack.c.l.b16 %v238
      %v466 = vunpack.c.h.b16 %v238
      %v467 = vunpack.c.l.b16 %v239
      %v468 = vunpack.c.h.b16 %v239
      %v469 = vunpack.c.l.b16 %v240
      %v470 = vunpack.c.h.b16 %v240
      %v471 = vunpack.c.l.b16 %v241
      %v472 = vunpack.c.h.b16 %v241
      %v473 = vpack.c.b16 %v347, %v345
      %v474 = vpack.c.b16 %v348, %v346
      %v475 = vpack.c.b16 %v351, %v349
      %v476 = vpack.c.b16 %v352, %v350
      %v477 = vpack.c.b16 %v355, %v353
      %v478 = vpack.c.b16 %v356, %v354
      %v479 = vpack.c.b16 %v359, %v357
      %v480 = vpack.c.b16 %v360, %v358
      %v481 = vpack.c.b16 %v363, %v361
      %v482 = vpack.c.b16 %v364, %v362
      %v483 = vpack.c.b16 %v367, %v365
      %v484 = vpack.c.b16 %v368, %v366
      %v485 = vpack.c.b16 %v371, %v369
      %v486 = vpack.c.b16 %v372, %v370
      %v487 = vpack.c.b16 %v375, %v373
      %v488 = vpack.c.b16 %v376, %v374
      %v489 = vpack.c.b16 %v379, %v377
      %v490 = vpack.c.b16 %v380, %v378
      %v491 = vpack.c.b16 %v383, %v381
      %v492 = vpack.c.b16 %v384, %v382
      %v493 = vpack.c.b16 %v387, %v385
      %v494 = vpack.c.b16 %v388, %v386
      %v495 = vpack.c.b16 %v391, %v389
      %v496 = vpack.c.b16 %v392, %v390
      %v497 = vpack.c.b16 %v395, %v393
      %v498 = vpack.c.b16 %v396, %v394
      %v499 = vpack.c.b16 %v399, %v397
      %v500 = vpack.c.b16 %v400, %v398
      %v501 = vpack.c.b16 %v403, %v401
      %v502 = vpack.c.b16 %v404, %v402
      %v503 = vpack.c.b16 %v407, %v405
      %v504 = vpack.c.b16 %v408, %v406
      %v505 = vpack.c.b16 %v411, %v409
      %v506 = vpack.c.b16 %v412, %v410
      %v507 = vpack.c.b16 %v415, %v413
      %v508 = vpack.c.b16 %v416, %v414
      %v509 = vpack.c.b16 %v419, %v417
      %v510 = vpack.c.b16 %v420, %v418
      %v511 = vpack.c.b16 %v423, %v421
      %v512 = vpack.c.b16 %v424, %v422
      %v513 = vpack.c.b16 %v427, %v425
      %v514 = vpack.c.b16 %v428, %v426
      %v515 = vpack.c.b16 %v431, %v429
      %v516 = vpack.c.b16 %v432, %v430
      %v517 = vpack.c.b16 %v435, %v433
      %v518 = vpack.c.b16 %v436, %v434
      %v519 = vpack.c.b16 %v439, %v437
      %v520 = vpack.c.b16 %v440, %v438
      %v521 = vpack.c.b16 %v443, %v441
      %v522 = vpack.c.b16 %v444, %v442
      %v523 = vpack.c.b16 %v447, %v445
      %v524 = vpack.c.b16 %v448, %v446
      %v525 = vpack.c.b16 %v451, %v449
      %v526 = vpack.c.b16 %v452, %v450
      %v527 = vpack.c.b16 %v455, %v453
      %v528 = vpack.c.b16 %v456, %v454
      %v529 = vpack.c.b16 %v459, %v457
      %v530 = vpack.c.b16 %v460, %v458
      %v531 = vpack.c.b16 %v463, %v461
      %v532 = vpack.c.b16 %v464, %v462
      %v533 = vpack.c.b16 %v467, %v465
      %v534 = vpack.c.b16 %v468, %v466
      %v535 = vpack.c.b16 %v471, %v469
      %v536 = vpack.c.b16 %v472, %v470
      %v633 = vunpack.c.l.b16 %v242
      %v634 = vunpack.c.l.b16 %v243
      %v635 = vunpack.c.l.b16 %v244
      %v636 = vunpack.c.l.b16 %v245
      %v637 = vunpack.c.l.b16 %v246
      %v638 = vunpack.c.l.b16 %v247
      %v639 = vunpack.c.l.b16 %v248
      %v640 = vunpack.c.l.b16 %v249
      %v641 = vunpack.c.l.b16 %v250
      %v642 = vunpack.c.l.b16 %v251
      %v643 = vunpack.c.l.b16 %v252
      %v644 = vunpack.c.l.b16 %v253
      %v645 = vunpack.c.l.b16 %v254
      %v646 = vunpack.c.l.b16 %v255
      %v647 = vunpack.c.l.b16 %v256
      %v648 = vunpack.c.l.b16 %v257
      %v649 = vunpack.c.l.b16 %v258
      %v650 = vunpack.c.l.b16 %v259
      %v651 = vunpack.c.l.b16 %v260
      %v652 = vunpack.c.l.b16 %v261
      %v653 = vunpack.c.l.b16 %v262
      %v654 = vunpack.c.l.b16 %v263
      %v655 = vunpack.c.l.b16 %v264
      %v656 = vunpack.c.l.b16 %v265
      %v657 = vunpack.c.l.b16 %v266
      %v658 = vunpack.c.l.b16 %v267
      %v659 = vunpack.c.l.b16 %v268
      %v660 = vunpack.c.l.b16 %v269
      %v661 = vunpack.c.l.b16 %v270
      %v662 = vunpack.c.l.b16 %v271
      %v663 = vunpack.c.l.b16 %v272
      %v664 = vunpack.c.l.b16 %v273
      %v665 = vpack.c.b16 %v634, %v633
      %v666 = vpack.c.b16 %v636, %v635
      %v667 = vpack.c.b16 %v638, %v637
      %v668 = vpack.c.b16 %v640, %v639
      %v669 = vpack.c.b16 %v642, %v641
      %v670 = vpack.c.b16 %v644, %v643
      %v671 = vpack.c.b16 %v646, %v645
      %v672 = vpack.c.b16 %v648, %v647
      %v673 = vpack.c.b16 %v650, %v649
      %v674 = vpack.c.b16 %v652, %v651
      %v675 = vpack.c.b16 %v654, %v653
      %v676 = vpack.c.b16 %v656, %v655
      %v677 = vpack.c.b16 %v658, %v657
      %v678 = vpack.c.b16 %v660, %v659
      %v679 = vpack.c.b16 %v662, %v661
      %v680 = vpack.c.b16 %v664, %v663
      %697 = vmatprep.subr.bf16.mxu0 0
      %698 = vmatpush1.bf16.msra.mxu0 %v672
      %699 = vmatprep.subr.bf16.mxu0 0
      %700 = vmatpush1.bf16.msra.mxu0 %v671
      %701 = vmatprep.subr.bf16.mxu0 0
      %702 = vmatpush1.bf16.msra.mxu0 %v670
      %703 = vmatprep.subr.bf16.mxu0 0
      %704 = vmatpush1.bf16.msra.mxu0 %v669
      %705 = vmatprep.subr.bf16.mxu0 0
      %706 = vmatpush1.bf16.msra.mxu0 %v668
      %707 = vmatprep.subr.bf16.mxu0 0
      %708 = vmatpush1.bf16.msra.mxu0 %v667
      %709 = vmatprep.subr.bf16.mxu0 0
      %710 = vmatpush1.bf16.msra.mxu0 %v666
      %711 = vmatprep.subr.bf16.mxu0 0
      %712 = vmatpush1.bf16.msra.mxu0 %v665
      %713 = vmatprep.subr.bf16.mxu0 0
      %714 = vmatpush2.bf16.msra.mxu0 %v680
      %715 = vmatprep.subr.bf16.mxu0 0
      %716 = vmatpush2.bf16.msra.mxu0 %v679
      %717 = vmatprep.subr.bf16.mxu0 0
      %718 = vmatpush2.bf16.msra.mxu0 %v678
      %719 = vmatprep.subr.bf16.mxu0 0
      %720 = vmatpush2.bf16.msra.mxu0 %v677
      %721 = vmatprep.subr.bf16.mxu0 0
      %722 = vmatpush2.bf16.msra.mxu0 %v676
      %723 = vmatprep.subr.bf16.mxu0 0
      %724 = vmatpush2.bf16.msra.mxu0 %v675
      %725 = vmatprep.subr.bf16.mxu0 0
      %726 = vmatpush2.bf16.msra.mxu0 %v674
      %727 = vmatprep.subr.bf16.mxu0 0
      %728 = vmatpush2.bf16.msra.mxu0 %v673
      %729 = vmatprep.mubr.bf16.mxu0 %v474
      %730 = vmatmul.mubr.bf16.gmra.mxu0 %v473
      %v731 = vpop.f32.mrf.mxu0
      %v732 = vadd.f32 %v279, %v731
      %v733 = vpop.f32.mrf.mxu0
      %v734 = vpop.f32.mrf.mxu0
      %v735 = vadd.f32 %v279, %v734
      %v736 = vpop.f32.mrf.mxu0
      %737 = vmatprep.mubr.bf16.mxu0 %v476
      %738 = vmatmul.mubr.bf16.gmra.mxu0 %v475
      %v739 = vpop.f32.mrf.mxu0
      %v740 = vadd.f32 %v279, %v739
      %v741 = vpop.f32.mrf.mxu0
      %v742 = vpop.f32.mrf.mxu0
      %v743 = vadd.f32 %v279, %v742
      %v744 = vpop.f32.mrf.mxu0
      %745 = vmatprep.mubr.bf16.mxu0 %v478
      %746 = vmatmul.mubr.bf16.gmra.mxu0 %v477
      %v747 = vpop.f32.mrf.mxu0
      %v748 = vadd.f32 %v279, %v747
      %v749 = vpop.f32.mrf.mxu0
      %v750 = vpop.f32.mrf.mxu0
      %v751 = vadd.f32 %v279, %v750
      %v752 = vpop.f32.mrf.mxu0
      %753 = vmatprep.mubr.bf16.mxu0 %v480
      %754 = vmatmul.mubr.bf16.gmra.mxu0 %v479
      %v755 = vpop.f32.mrf.mxu0
      %v756 = vadd.f32 %v279, %v755
      %v757 = vpop.f32.mrf.mxu0
      %v758 = vpop.f32.mrf.mxu0
      %v759 = vadd.f32 %v279, %v758
      %v760 = vpop.f32.mrf.mxu0
      %761 = vmatprep.mubr.bf16.mxu0 %v482
      %762 = vmatmul.mubr.bf16.gmra.mxu0 %v481
      %v763 = vpop.f32.mrf.mxu0
      %v764 = vadd.f32 %v279, %v763
      %v765 = vpop.f32.mrf.mxu0
      %v766 = vpop.f32.mrf.mxu0
      %v767 = vadd.f32 %v279, %v766
      %v768 = vpop.f32.mrf.mxu0
      %769 = vmatprep.mubr.bf16.mxu0 %v484
      %770 = vmatmul.mubr.bf16.gmra.mxu0 %v483
      %v771 = vpop.f32.mrf.mxu0
      %v772 = vadd.f32 %v279, %v771
      %v773 = vpop.f32.mrf.mxu0
      %v774 = vpop.f32.mrf.mxu0
      %v775 = vadd.f32 %v279, %v774
      %v776 = vpop.f32.mrf.mxu0
      %777 = vmatprep.mubr.bf16.mxu0 %v486
      %778 = vmatmul.mubr.bf16.gmra.mxu0 %v485
      %v779 = vpop.f32.mrf.mxu0
      %v780 = vadd.f32 %v279, %v779
      %v781 = vpop.f32.mrf.mxu0
      %v782 = vpop.f32.mrf.mxu0
      %v783 = vadd.f32 %v279, %v782
      %v784 = vpop.f32.mrf.mxu0
      %785 = vmatprep.mubr.bf16.mxu0 %v488
      %786 = vmatmul.mubr.bf16.gmra.mxu0 %v487
      %v787 = vpop.f32.mrf.mxu0
      %v788 = vadd.f32 %v279, %v787
      %v789 = vpop.f32.mrf.mxu0
      %v790 = vpop.f32.mrf.mxu0
      %v791 = vadd.f32 %v279, %v790
      %v792 = vpop.f32.mrf.mxu0
      %793 = vmatprep.mubr.bf16.mxu0 %v490
      %794 = vmatmul.mubr.bf16.gmra.mxu0 %v489
      %v795 = vpop.f32.mrf.mxu0
      %v796 = vadd.f32 %v279, %v795
      %v797 = vpop.f32.mrf.mxu0
      %v798 = vpop.f32.mrf.mxu0
      %v799 = vadd.f32 %v279, %v798
      %v800 = vpop.f32.mrf.mxu0
      %801 = vmatprep.mubr.bf16.mxu0 %v492
      %802 = vmatmul.mubr.bf16.gmra.mxu0 %v491
      %v803 = vpop.f32.mrf.mxu0
      %v804 = vadd.f32 %v279, %v803
      %v805 = vpop.f32.mrf.mxu0
      %v806 = vpop.f32.mrf.mxu0
      %v807 = vadd.f32 %v279, %v806
      %v808 = vpop.f32.mrf.mxu0
      %809 = vmatprep.mubr.bf16.mxu0 %v494
      %810 = vmatmul.mubr.bf16.gmra.mxu0 %v493
      %v811 = vpop.f32.mrf.mxu0
      %v812 = vadd.f32 %v279, %v811
      %v813 = vpop.f32.mrf.mxu0
      %v814 = vpop.f32.mrf.mxu0
      %v815 = vadd.f32 %v279, %v814
      %v816 = vpop.f32.mrf.mxu0
      %817 = vmatprep.mubr.bf16.mxu0 %v496
      %818 = vmatmul.mubr.bf16.gmra.mxu0 %v495
      %v819 = vpop.f32.mrf.mxu0
      %v820 = vadd.f32 %v279, %v819
      %v821 = vpop.f32.mrf.mxu0
      %v822 = vpop.f32.mrf.mxu0
      %v823 = vadd.f32 %v279, %v822
      %v824 = vpop.f32.mrf.mxu0
      %825 = vmatprep.mubr.bf16.mxu0 %v498
      %826 = vmatmul.mubr.bf16.gmra.mxu0 %v497
      %v827 = vpop.f32.mrf.mxu0
      %v828 = vadd.f32 %v279, %v827
      %v829 = vpop.f32.mrf.mxu0
      %v830 = vpop.f32.mrf.mxu0
      %v831 = vadd.f32 %v279, %v830
      %v832 = vpop.f32.mrf.mxu0
      %833 = vmatprep.mubr.bf16.mxu0 %v500
      %834 = vmatmul.mubr.bf16.gmra.mxu0 %v499
      %v835 = vpop.f32.mrf.mxu0
      %v836 = vadd.f32 %v279, %v835
      %v837 = vpop.f32.mrf.mxu0
      %v838 = vpop.f32.mrf.mxu0
      %v839 = vadd.f32 %v279, %v838
      %v840 = vpop.f32.mrf.mxu0
      %841 = vmatprep.mubr.bf16.mxu0 %v502
      %842 = vmatmul.mubr.bf16.gmra.mxu0 %v501
      %v843 = vpop.f32.mrf.mxu0
      %v844 = vadd.f32 %v279, %v843
      %v845 = vpop.f32.mrf.mxu0
      %v846 = vpop.f32.mrf.mxu0
      %v847 = vadd.f32 %v279, %v846
      %v848 = vpop.f32.mrf.mxu0
      %849 = vmatprep.mubr.bf16.mxu0 %v504
      %850 = vmatmul.mubr.bf16.gmra.mxu0 %v503
      %v851 = vpop.f32.mrf.mxu0
      %v852 = vadd.f32 %v279, %v851
      %v853 = vpop.f32.mrf.mxu0
      %v854 = vpop.f32.mrf.mxu0
      %v855 = vadd.f32 %v279, %v854
      %v856 = vpop.f32.mrf.mxu0
      %857 = vmatprep.mubr.bf16.mxu0 %v506
      %858 = vmatmul.mubr.bf16.gmra.mxu0 %v505
      %v859 = vpop.f32.mrf.mxu0
      %v860 = vadd.f32 %v279, %v859
      %v861 = vpop.f32.mrf.mxu0
      %v862 = vpop.f32.mrf.mxu0
      %v863 = vadd.f32 %v279, %v862
      %v864 = vpop.f32.mrf.mxu0
      %865 = vmatprep.mubr.bf16.mxu0 %v508
      %866 = vmatmul.mubr.bf16.gmra.mxu0 %v507
      %v867 = vpop.f32.mrf.mxu0
      %v868 = vadd.f32 %v279, %v867
      %v869 = vpop.f32.mrf.mxu0
      %v870 = vpop.f32.mrf.mxu0
      %v871 = vadd.f32 %v279, %v870
      %v872 = vpop.f32.mrf.mxu0
      %873 = vmatprep.mubr.bf16.mxu0 %v510
      %874 = vmatmul.mubr.bf16.gmra.mxu0 %v509
      %v875 = vpop.f32.mrf.mxu0
      %v876 = vadd.f32 %v279, %v875
      %v877 = vpop.f32.mrf.mxu0
      %v878 = vpop.f32.mrf.mxu0
      %v879 = vadd.f32 %v279, %v878
      %v880 = vpop.f32.mrf.mxu0
      %881 = vmatprep.mubr.bf16.mxu0 %v512
      %882 = vmatmul.mubr.bf16.gmra.mxu0 %v511
      %v883 = vpop.f32.mrf.mxu0
      %v884 = vadd.f32 %v279, %v883
      %v885 = vpop.f32.mrf.mxu0
      %v886 = vpop.f32.mrf.mxu0
      %v887 = vadd.f32 %v279, %v886
      %v888 = vpop.f32.mrf.mxu0
      %889 = vmatprep.mubr.bf16.mxu0 %v514
      %890 = vmatmul.mubr.bf16.gmra.mxu0 %v513
      %v891 = vpop.f32.mrf.mxu0
      %v892 = vadd.f32 %v279, %v891
      %v893 = vpop.f32.mrf.mxu0
      %v894 = vpop.f32.mrf.mxu0
      %v895 = vadd.f32 %v279, %v894
      %v896 = vpop.f32.mrf.mxu0
      %897 = vmatprep.mubr.bf16.mxu0 %v516
      %898 = vmatmul.mubr.bf16.gmra.mxu0 %v515
      %v899 = vpop.f32.mrf.mxu0
      %v900 = vadd.f32 %v279, %v899
      %v901 = vpop.f32.mrf.mxu0
      %v902 = vpop.f32.mrf.mxu0
      %v903 = vadd.f32 %v279, %v902
      %v904 = vpop.f32.mrf.mxu0
      %905 = vmatprep.mubr.bf16.mxu0 %v518
      %906 = vmatmul.mubr.bf16.gmra.mxu0 %v517
      %v907 = vpop.f32.mrf.mxu0
      %v908 = vadd.f32 %v279, %v907
      %v909 = vpop.f32.mrf.mxu0
      %v910 = vpop.f32.mrf.mxu0
      %v911 = vadd.f32 %v279, %v910
      %v912 = vpop.f32.mrf.mxu0
      %913 = vmatprep.mubr.bf16.mxu0 %v520
      %914 = vmatmul.mubr.bf16.gmra.mxu0 %v519
      %v915 = vpop.f32.mrf.mxu0
      %v916 = vadd.f32 %v279, %v915
      %v917 = vpop.f32.mrf.mxu0
      %v918 = vpop.f32.mrf.mxu0
      %v919 = vadd.f32 %v279, %v918
      %v920 = vpop.f32.mrf.mxu0
      %921 = vmatprep.mubr.bf16.mxu0 %v522
      %922 = vmatmul.mubr.bf16.gmra.mxu0 %v521
      %v923 = vpop.f32.mrf.mxu0
      %v924 = vadd.f32 %v279, %v923
      %v925 = vpop.f32.mrf.mxu0
      %v926 = vpop.f32.mrf.mxu0
      %v927 = vadd.f32 %v279, %v926
      %v928 = vpop.f32.mrf.mxu0
      %929 = vmatprep.mubr.bf16.mxu0 %v524
      %930 = vmatmul.mubr.bf16.gmra.mxu0 %v523
      %v931 = vpop.f32.mrf.mxu0
      %v932 = vadd.f32 %v279, %v931
      %v933 = vpop.f32.mrf.mxu0
      %v934 = vpop.f32.mrf.mxu0
      %v935 = vadd.f32 %v279, %v934
      %v936 = vpop.f32.mrf.mxu0
      %937 = vmatprep.mubr.bf16.mxu0 %v526
      %938 = vmatmul.mubr.bf16.gmra.mxu0 %v525
      %v939 = vpop.f32.mrf.mxu0
      %v940 = vadd.f32 %v279, %v939
      %v941 = vpop.f32.mrf.mxu0
      %v942 = vpop.f32.mrf.mxu0
      %v943 = vadd.f32 %v279, %v942
      %v944 = vpop.f32.mrf.mxu0
      %945 = vmatprep.mubr.bf16.mxu0 %v528
      %946 = vmatmul.mubr.bf16.gmra.mxu0 %v527
      %v947 = vpop.f32.mrf.mxu0
      %v948 = vadd.f32 %v279, %v947
      %v949 = vpop.f32.mrf.mxu0
      %v950 = vpop.f32.mrf.mxu0
      %v951 = vadd.f32 %v279, %v950
      %v952 = vpop.f32.mrf.mxu0
      %953 = vmatprep.mubr.bf16.mxu0 %v530
      %954 = vmatmul.mubr.bf16.gmra.mxu0 %v529
      %v955 = vpop.f32.mrf.mxu0
      %v956 = vadd.f32 %v279, %v955
      %v957 = vpop.f32.mrf.mxu0
      %v958 = vpop.f32.mrf.mxu0
      %v959 = vadd.f32 %v279, %v958
      %v960 = vpop.f32.mrf.mxu0
      %961 = vmatprep.mubr.bf16.mxu0 %v532
      %962 = vmatmul.mubr.bf16.gmra.mxu0 %v531
      %v963 = vpop.f32.mrf.mxu0
      %v964 = vadd.f32 %v279, %v963
      %v965 = vpop.f32.mrf.mxu0
      %v966 = vpop.f32.mrf.mxu0
      %v967 = vadd.f32 %v279, %v966
      %v968 = vpop.f32.mrf.mxu0
      %969 = vmatprep.mubr.bf16.mxu0 %v534
      %970 = vmatmul.mubr.bf16.gmra.mxu0 %v533
      %v971 = vpop.f32.mrf.mxu0
      %v972 = vadd.f32 %v279, %v971
      %v973 = vpop.f32.mrf.mxu0
      %v974 = vpop.f32.mrf.mxu0
      %v975 = vadd.f32 %v279, %v974
      %v976 = vpop.f32.mrf.mxu0
      %977 = vmatprep.mubr.bf16.mxu0 %v536
      %978 = vmatmul.mubr.bf16.gmra.mxu0 %v535
      %v979 = vpop.f32.mrf.mxu0
      %v980 = vadd.f32 %v279, %v979
      %v981 = vpop.f32.mrf.mxu0
      %v982 = vpop.f32.mrf.mxu0
      %v983 = vadd.f32 %v279, %v982
      %v984 = vpop.f32.mrf.mxu0
      %985 = vdwg.mxu0
      %vm986 = vcmp.ge.f32.partialorder %v732, 0.0
      %vm987 = vcmp.ge.f32.partialorder %v735, 0.0
      %vm988 = vcmp.ge.f32.partialorder %v740, 0.0
      %vm989 = vcmp.ge.f32.partialorder %v743, 0.0
      %vm990 = vcmp.ge.f32.partialorder %v748, 0.0
      %vm991 = vcmp.ge.f32.partialorder %v751, 0.0
      %vm992 = vcmp.ge.f32.partialorder %v756, 0.0
      %vm993 = vcmp.ge.f32.partialorder %v759, 0.0
      %vm994 = vcmp.ge.f32.partialorder %v764, 0.0
      %vm995 = vcmp.ge.f32.partialorder %v767, 0.0
      %vm996 = vcmp.ge.f32.partialorder %v772, 0.0
      %vm997 = vcmp.ge.f32.partialorder %v775, 0.0
      %vm998 = vcmp.ge.f32.partialorder %v780, 0.0
      %vm999 = vcmp.ge.f32.partialorder %v783, 0.0
      %vm1000 = vcmp.ge.f32.partialorder %v788, 0.0
      %vm1001 = vcmp.ge.f32.partialorder %v791, 0.0
      %vm1002 = vcmp.ge.f32.partialorder %v796, 0.0
      %vm1003 = vcmp.ge.f32.partialorder %v799, 0.0
      %vm1004 = vcmp.ge.f32.partialorder %v804, 0.0
      %vm1005 = vcmp.ge.f32.partialorder %v807, 0.0
      %vm1006 = vcmp.ge.f32.partialorder %v812, 0.0
      %vm1007 = vcmp.ge.f32.partialorder %v815, 0.0
      %vm1008 = vcmp.ge.f32.partialorder %v820, 0.0
      %vm1009 = vcmp.ge.f32.partialorder %v823, 0.0
      %vm1010 = vcmp.ge.f32.partialorder %v828, 0.0
      %vm1011 = vcmp.ge.f32.partialorder %v831, 0.0
      %vm1012 = vcmp.ge.f32.partialorder %v836, 0.0
      %vm1013 = vcmp.ge.f32.partialorder %v839, 0.0
      %vm1014 = vcmp.ge.f32.partialorder %v844, 0.0
      %vm1015 = vcmp.ge.f32.partialorder %v847, 0.0
      %vm1016 = vcmp.ge.f32.partialorder %v852, 0.0
      %vm1017 = vcmp.ge.f32.partialorder %v855, 0.0
      %vm1018 = vcmp.ge.f32.partialorder %v860, 0.0
      %vm1019 = vcmp.ge.f32.partialorder %v863, 0.0
      %vm1020 = vcmp.ge.f32.partialorder %v868, 0.0
      %vm1021 = vcmp.ge.f32.partialorder %v871, 0.0
      %vm1022 = vcmp.ge.f32.partialorder %v876, 0.0
      %vm1023 = vcmp.ge.f32.partialorder %v879, 0.0
      %vm1024 = vcmp.ge.f32.partialorder %v884, 0.0
      %vm1025 = vcmp.ge.f32.partialorder %v887, 0.0
      %vm1026 = vcmp.ge.f32.partialorder %v892, 0.0
      %vm1027 = vcmp.ge.f32.partialorder %v895, 0.0
      %vm1028 = vcmp.ge.f32.partialorder %v900, 0.0
      %vm1029 = vcmp.ge.f32.partialorder %v903, 0.0
      %vm1030 = vcmp.ge.f32.partialorder %v908, 0.0
      %vm1031 = vcmp.ge.f32.partialorder %v911, 0.0
      %vm1032 = vcmp.ge.f32.partialorder %v916, 0.0
      %vm1033 = vcmp.ge.f32.partialorder %v919, 0.0
      %vm1034 = vcmp.ge.f32.partialorder %v924, 0.0
      %vm1035 = vcmp.ge.f32.partialorder %v927, 0.0
      %vm1036 = vcmp.ge.f32.partialorder %v932, 0.0
      %vm1037 = vcmp.ge.f32.partialorder %v935, 0.0
      %vm1038 = vcmp.ge.f32.partialorder %v940, 0.0
      %vm1039 = vcmp.ge.f32.partialorder %v943, 0.0
      %vm1040 = vcmp.ge.f32.partialorder %v948, 0.0
      %vm1041 = vcmp.ge.f32.partialorder %v951, 0.0
      %vm1042 = vcmp.ge.f32.partialorder %v956, 0.0
      %vm1043 = vcmp.ge.f32.partialorder %v959, 0.0
      %vm1044 = vcmp.ge.f32.partialorder %v964, 0.0
      %vm1045 = vcmp.ge.f32.partialorder %v967, 0.0
      %vm1046 = vcmp.ge.f32.partialorder %v972, 0.0
      %vm1047 = vcmp.ge.f32.partialorder %v975, 0.0
      %vm1048 = vcmp.ge.f32.partialorder %v980, 0.0
      %vm1049 = vcmp.ge.f32.partialorder %v983, 0.0
      %v1050 = vmul.f32 %v732, 0.01
      %v1051 = vmul.f32 %v735, 0.01
      %v1052 = vmul.f32 %v740, 0.01
      %v1053 = vmul.f32 %v743, 0.01
      %v1054 = vmul.f32 %v748, 0.01
      %v1055 = vmul.f32 %v751, 0.01
      %v1056 = vmul.f32 %v756, 0.01
      %v1057 = vmul.f32 %v759, 0.01
      %v1058 = vmul.f32 %v764, 0.01
      %v1059 = vmul.f32 %v767, 0.01
      %v1060 = vmul.f32 %v772, 0.01
      %v1061 = vmul.f32 %v775, 0.01
      %v1062 = vmul.f32 %v780, 0.01
      %v1063 = vmul.f32 %v783, 0.01
      %v1064 = vmul.f32 %v788, 0.01
      %v1065 = vmul.f32 %v791, 0.01
      %v1066 = vmul.f32 %v796, 0.01
      %v1067 = vmul.f32 %v799, 0.01
      %v1068 = vmul.f32 %v804, 0.01
      %v1069 = vmul.f32 %v807, 0.01
      %v1070 = vmul.f32 %v812, 0.01
      %v1071 = vmul.f32 %v815, 0.01
      %v1072 = vmul.f32 %v820, 0.01
      %v1073 = vmul.f32 %v823, 0.01
      %v1074 = vmul.f32 %v828, 0.01
      %v1075 = vmul.f32 %v831, 0.01
      %v1076 = vmul.f32 %v836, 0.01
      %v1077 = vmul.f32 %v839, 0.01
      %v1078 = vmul.f32 %v844, 0.01
      %v1079 = vmul.f32 %v847, 0.01
      %v1080 = vmul.f32 %v852, 0.01
      %v1081 = vmul.f32 %v855, 0.01
      %v1082 = vmul.f32 %v860, 0.01
      %v1083 = vmul.f32 %v863, 0.01
      %v1084 = vmul.f32 %v868, 0.01
      %v1085 = vmul.f32 %v871, 0.01
      %v1086 = vmul.f32 %v876, 0.01
      %v1087 = vmul.f32 %v879, 0.01
      %v1088 = vmul.f32 %v884, 0.01
      %v1089 = vmul.f32 %v887, 0.01
      %v1090 = vmul.f32 %v892, 0.01
      %v1091 = vmul.f32 %v895, 0.01
      %v1092 = vmul.f32 %v900, 0.01
      %v1093 = vmul.f32 %v903, 0.01
      %v1094 = vmul.f32 %v908, 0.01
      %v1095 = vmul.f32 %v911, 0.01
      %v1096 = vmul.f32 %v916, 0.01
      %v1097 = vmul.f32 %v919, 0.01
      %v1098 = vmul.f32 %v924, 0.01
      %v1099 = vmul.f32 %v927, 0.01
      %v1100 = vmul.f32 %v932, 0.01
      %v1101 = vmul.f32 %v935, 0.01
      %v1102 = vmul.f32 %v940, 0.01
      %v1103 = vmul.f32 %v943, 0.01
      %v1104 = vmul.f32 %v948, 0.01
      %v1105 = vmul.f32 %v951, 0.01
      %v1106 = vmul.f32 %v956, 0.01
      %v1107 = vmul.f32 %v959, 0.01
      %v1108 = vmul.f32 %v964, 0.01
      %v1109 = vmul.f32 %v967, 0.01
      %v1110 = vmul.f32 %v972, 0.01
      %v1111 = vmul.f32 %v975, 0.01
      %v1112 = vmul.f32 %v980, 0.01
      %v1113 = vmul.f32 %v983, 0.01
      %v1114 = vsel %vm986, %v732, %v1050
      %v1115 = vsel %vm987, %v735, %v1051
      %v1116 = vsel %vm988, %v740, %v1052
      %v1117 = vsel %vm989, %v743, %v1053
      %v1118 = vsel %vm990, %v748, %v1054
      %v1119 = vsel %vm991, %v751, %v1055
      %v1120 = vsel %vm992, %v756, %v1056
      %v1121 = vsel %vm993, %v759, %v1057
      %v1122 = vsel %vm994, %v764, %v1058
      %v1123 = vsel %vm995, %v767, %v1059
      %v1124 = vsel %vm996, %v772, %v1060
      %v1125 = vsel %vm997, %v775, %v1061
      %v1126 = vsel %vm998, %v780, %v1062
      %v1127 = vsel %vm999, %v783, %v1063
      %v1128 = vsel %vm1000, %v788, %v1064
      %v1129 = vsel %vm1001, %v791, %v1065
      %v1130 = vsel %vm1002, %v796, %v1066
      %v1131 = vsel %vm1003, %v799, %v1067
      %v1132 = vsel %vm1004, %v804, %v1068
      %v1133 = vsel %vm1005, %v807, %v1069
      %v1134 = vsel %vm1006, %v812, %v1070
      %v1135 = vsel %vm1007, %v815, %v1071
      %v1136 = vsel %vm1008, %v820, %v1072
      %v1137 = vsel %vm1009, %v823, %v1073
      %v1138 = vsel %vm1010, %v828, %v1074
      %v1139 = vsel %vm1011, %v831, %v1075
      %v1140 = vsel %vm1012, %v836, %v1076
      %v1141 = vsel %vm1013, %v839, %v1077
      %v1142 = vsel %vm1014, %v844, %v1078
      %v1143 = vsel %vm1015, %v847, %v1079
      %v1144 = vsel %vm1016, %v852, %v1080
      %v1145 = vsel %vm1017, %v855, %v1081
      %v1146 = vsel %vm1018, %v860, %v1082
      %v1147 = vsel %vm1019, %v863, %v1083
      %v1148 = vsel %vm1020, %v868, %v1084
      %v1149 = vsel %vm1021, %v871, %v1085
      %v1150 = vsel %vm1022, %v876, %v1086
      %v1151 = vsel %vm1023, %v879, %v1087
      %v1152 = vsel %vm1024, %v884, %v1088
      %v1153 = vsel %vm1025, %v887, %v1089
      %v1154 = vsel %vm1026, %v892, %v1090
      %v1155 = vsel %vm1027, %v895, %v1091
      %v1156 = vsel %vm1028, %v900, %v1092
      %v1157 = vsel %vm1029, %v903, %v1093
      %v1158 = vsel %vm1030, %v908, %v1094
      %v1159 = vsel %vm1031, %v911, %v1095
      %v1160 = vsel %vm1032, %v916, %v1096
      %v1161 = vsel %vm1033, %v919, %v1097
      %v1162 = vsel %vm1034, %v924, %v1098
      %v1163 = vsel %vm1035, %v927, %v1099
      %v1164 = vsel %vm1036, %v932, %v1100
      %v1165 = vsel %vm1037, %v935, %v1101
      %v1166 = vsel %vm1038, %v940, %v1102
      %v1167 = vsel %vm1039, %v943, %v1103
      %v1168 = vsel %vm1040, %v948, %v1104
      %v1169 = vsel %vm1041, %v951, %v1105
      %v1170 = vsel %vm1042, %v956, %v1106
      %v1171 = vsel %vm1043, %v959, %v1107
      %v1172 = vsel %vm1044, %v964, %v1108
      %v1173 = vsel %vm1045, %v967, %v1109
      %v1174 = vsel %vm1046, %v972, %v1110
      %v1175 = vsel %vm1047, %v975, %v1111
      %v1176 = vsel %vm1048, %v980, %v1112
      %v1177 = vsel %vm1049, %v983, %v1113
      %v1178 = vpack.c.bf16 %v1115, %v1114
      %v1179 = vpack.c.bf16 %v1117, %v1116
      %v1180 = vpack.c.bf16 %v1119, %v1118
      %v1181 = vpack.c.bf16 %v1121, %v1120
      %v1182 = vpack.c.bf16 %v1123, %v1122
      %v1183 = vpack.c.bf16 %v1125, %v1124
      %v1184 = vpack.c.bf16 %v1127, %v1126
      %v1185 = vpack.c.bf16 %v1129, %v1128
      %v1186 = vpack.c.bf16 %v1131, %v1130
      %v1187 = vpack.c.bf16 %v1133, %v1132
      %v1188 = vpack.c.bf16 %v1135, %v1134
      %v1189 = vpack.c.bf16 %v1137, %v1136
      %v1190 = vpack.c.bf16 %v1139, %v1138
      %v1191 = vpack.c.bf16 %v1141, %v1140
      %v1192 = vpack.c.bf16 %v1143, %v1142
      %v1193 = vpack.c.bf16 %v1145, %v1144
      %v1194 = vpack.c.bf16 %v1147, %v1146
      %v1195 = vpack.c.bf16 %v1149, %v1148
      %v1196 = vpack.c.bf16 %v1151, %v1150
      %v1197 = vpack.c.bf16 %v1153, %v1152
      %v1198 = vpack.c.bf16 %v1155, %v1154
      %v1199 = vpack.c.bf16 %v1157, %v1156
      %v1200 = vpack.c.bf16 %v1159, %v1158
      %v1201 = vpack.c.bf16 %v1161, %v1160
      %v1202 = vpack.c.bf16 %v1163, %v1162
      %v1203 = vpack.c.bf16 %v1165, %v1164
      %v1204 = vpack.c.bf16 %v1167, %v1166
      %v1205 = vpack.c.bf16 %v1169, %v1168
      %v1206 = vpack.c.bf16 %v1171, %v1170
      %v1207 = vpack.c.bf16 %v1173, %v1172
      %v1208 = vpack.c.bf16 %v1175, %v1174
      %v1209 = vpack.c.bf16 %v1177, %v1176
      %v1242 = vunpack.c.l.b16 %v1178
      %v1243 = vunpack.c.h.b16 %v1178
      %v1244 = vunpack.c.l.b16 %v1179
      %v1245 = vunpack.c.h.b16 %v1179
      %v1246 = vunpack.c.l.b16 %v1180
      %v1247 = vunpack.c.h.b16 %v1180
      %v1248 = vunpack.c.l.b16 %v1181
      %v1249 = vunpack.c.h.b16 %v1181
      %v1250 = vunpack.c.l.b16 %v1182
      %v1251 = vunpack.c.h.b16 %v1182
      %v1252 = vunpack.c.l.b16 %v1183
      %v1253 = vunpack.c.h.b16 %v1183
      %v1254 = vunpack.c.l.b16 %v1184
      %v1255 = vunpack.c.h.b16 %v1184
      %v1256 = vunpack.c.l.b16 %v1185
      %v1257 = vunpack.c.h.b16 %v1185
      %v1258 = vunpack.c.l.b16 %v1186
      %v1259 = vunpack.c.h.b16 %v1186
      %v1260 = vunpack.c.l.b16 %v1187
      %v1261 = vunpack.c.h.b16 %v1187
      %v1262 = vunpack.c.l.b16 %v1188
      %v1263 = vunpack.c.h.b16 %v1188
      %v1264 = vunpack.c.l.b16 %v1189
      %v1265 = vunpack.c.h.b16 %v1189
      %v1266 = vunpack.c.l.b16 %v1190
      %v1267 = vunpack.c.h.b16 %v1190
      %v1268 = vunpack.c.l.b16 %v1191
      %v1269 = vunpack.c.h.b16 %v1191
      %v1270 = vunpack.c.l.b16 %v1192
      %v1271 = vunpack.c.h.b16 %v1192
      %v1272 = vunpack.c.l.b16 %v1193
      %v1273 = vunpack.c.h.b16 %v1193
      %v1274 = vunpack.c.l.b16 %v1194
      %v1275 = vunpack.c.h.b16 %v1194
      %v1276 = vunpack.c.l.b16 %v1195
      %v1277 = vunpack.c.h.b16 %v1195
      %v1278 = vunpack.c.l.b16 %v1196
      %v1279 = vunpack.c.h.b16 %v1196
      %v1280 = vunpack.c.l.b16 %v1197
      %v1281 = vunpack.c.h.b16 %v1197
      %v1282 = vunpack.c.l.b16 %v1198
      %v1283 = vunpack.c.h.b16 %v1198
      %v1284 = vunpack.c.l.b16 %v1199
      %v1285 = vunpack.c.h.b16 %v1199
      %v1286 = vunpack.c.l.b16 %v1200
      %v1287 = vunpack.c.h.b16 %v1200
      %v1288 = vunpack.c.l.b16 %v1201
      %v1289 = vunpack.c.h.b16 %v1201
      %v1290 = vunpack.c.l.b16 %v1202
      %v1291 = vunpack.c.h.b16 %v1202
      %v1292 = vunpack.c.l.b16 %v1203
      %v1293 = vunpack.c.h.b16 %v1203
      %v1294 = vunpack.c.l.b16 %v1204
      %v1295 = vunpack.c.h.b16 %v1204
      %v1296 = vunpack.c.l.b16 %v1205
      %v1297 = vunpack.c.h.b16 %v1205
      %v1298 = vunpack.c.l.b16 %v1206
      %v1299 = vunpack.c.h.b16 %v1206
      %v1300 = vunpack.c.l.b16 %v1207
      %v1301 = vunpack.c.h.b16 %v1207
      %v1302 = vunpack.c.l.b16 %v1208
      %v1303 = vunpack.c.h.b16 %v1208
      %v1304 = vunpack.c.l.b16 %v1209
      %v1305 = vunpack.c.h.b16 %v1209
      %v1306 = vpack.c.b16 %v1242, %v1242
      %v1307 = vpack.c.b16 %v1243, %v1243
      %v1308 = vpack.c.b16 %v1244, %v1244
      %v1309 = vpack.c.b16 %v1245, %v1245
      %v1310 = vpack.c.b16 %v1246, %v1246
      %v1311 = vpack.c.b16 %v1247, %v1247
      %v1312 = vpack.c.b16 %v1248, %v1248
      %v1313 = vpack.c.b16 %v1249, %v1249
      %v1314 = vpack.c.b16 %v1250, %v1250
      %v1315 = vpack.c.b16 %v1251, %v1251
      %v1316 = vpack.c.b16 %v1252, %v1252
      %v1317 = vpack.c.b16 %v1253, %v1253
      %v1318 = vpack.c.b16 %v1254, %v1254
      %v1319 = vpack.c.b16 %v1255, %v1255
      %v1320 = vpack.c.b16 %v1256, %v1256
      %v1321 = vpack.c.b16 %v1257, %v1257
      %v1322 = vpack.c.b16 %v1258, %v1258
      %v1323 = vpack.c.b16 %v1259, %v1259
      %v1324 = vpack.c.b16 %v1260, %v1260
      %v1325 = vpack.c.b16 %v1261, %v1261
      %v1326 = vpack.c.b16 %v1262, %v1262
      %v1327 = vpack.c.b16 %v1263, %v1263
      %v1328 = vpack.c.b16 %v1264, %v1264
      %v1329 = vpack.c.b16 %v1265, %v1265
      %v1330 = vpack.c.b16 %v1266, %v1266
      %v1331 = vpack.c.b16 %v1267, %v1267
      %v1332 = vpack.c.b16 %v1268, %v1268
      %v1333 = vpack.c.b16 %v1269, %v1269
      %v1334 = vpack.c.b16 %v1270, %v1270
      %v1335 = vpack.c.b16 %v1271, %v1271
      %v1336 = vpack.c.b16 %v1272, %v1272
      %v1337 = vpack.c.b16 %v1273, %v1273
      %v1338 = vpack.c.b16 %v1274, %v1274
      %v1339 = vpack.c.b16 %v1275, %v1275
      %v1340 = vpack.c.b16 %v1276, %v1276
      %v1341 = vpack.c.b16 %v1277, %v1277
      %v1342 = vpack.c.b16 %v1278, %v1278
      %v1343 = vpack.c.b16 %v1279, %v1279
      %v1344 = vpack.c.b16 %v1280, %v1280
      %v1345 = vpack.c.b16 %v1281, %v1281
      %v1346 = vpack.c.b16 %v1282, %v1282
      %v1347 = vpack.c.b16 %v1283, %v1283
      %v1348 = vpack.c.b16 %v1284, %v1284
      %v1349 = vpack.c.b16 %v1285, %v1285
      %v1350 = vpack.c.b16 %v1286, %v1286
      %v1351 = vpack.c.b16 %v1287, %v1287
      %v1352 = vpack.c.b16 %v1288, %v1288
      %v1353 = vpack.c.b16 %v1289, %v1289
      %v1354 = vpack.c.b16 %v1290, %v1290
      %v1355 = vpack.c.b16 %v1291, %v1291
      %v1356 = vpack.c.b16 %v1292, %v1292
      %v1357 = vpack.c.b16 %v1293, %v1293
      %v1358 = vpack.c.b16 %v1294, %v1294
      %v1359 = vpack.c.b16 %v1295, %v1295
      %v1360 = vpack.c.b16 %v1296, %v1296
      %v1361 = vpack.c.b16 %v1297, %v1297
      %v1362 = vpack.c.b16 %v1298, %v1298
      %v1363 = vpack.c.b16 %v1299, %v1299
      %v1364 = vpack.c.b16 %v1300, %v1300
      %v1365 = vpack.c.b16 %v1301, %v1301
      %v1366 = vpack.c.b16 %v1302, %v1302
      %v1367 = vpack.c.b16 %v1303, %v1303
      %v1368 = vpack.c.b16 %v1304, %v1304
      %v1369 = vpack.c.b16 %v1305, %v1305
      %vm1434 = vcmask 257024
      %1435 = vst.msk [vmem:[%s175] sm:$0xf] %vm1434, %v1306
      %1436 = vst.msk [vmem:[%s175 + $0x4] sm:$0xf] %vm1434, %v1307
      %1437 = vst.msk [vmem:[%s175 + $0x8] sm:$0xf] %vm1434, %v1308
      %1438 = vst.msk [vmem:[%s175 + $0xc] sm:$0xf] %vm1434, %v1309
      %1439 = vst.msk [vmem:[%s175 + $0x10] sm:$0xf] %vm1434, %v1310
      %1440 = vst.msk [vmem:[%s175 + $0x14] sm:$0xf] %vm1434, %v1311
      %1441 = vst.msk [vmem:[%s175 + $0x18] sm:$0xf] %vm1434, %v1312
      %1442 = vst.msk [vmem:[%s175 + $0x1c] sm:$0xf] %vm1434, %v1313
      %1443 = vst.msk [vmem:[%s175 + $0x20] sm:$0xf] %vm1434, %v1314
      %1444 = vst.msk [vmem:[%s175 + $0x24] sm:$0xf] %vm1434, %v1315
      %1445 = vst.msk [vmem:[%s175 + $0x28] sm:$0xf] %vm1434, %v1316
      %1446 = vst.msk [vmem:[%s175 + $0x2c] sm:$0xf] %vm1434, %v1317
      %1447 = vst.msk [vmem:[%s175 + $0x30] sm:$0xf] %vm1434, %v1318
      %1448 = vst.msk [vmem:[%s175 + $0x34] sm:$0xf] %vm1434, %v1319
      %1449 = vst.msk [vmem:[%s175 + $0x38] sm:$0xf] %vm1434, %v1320
      %1450 = vst.msk [vmem:[%s175 + $0x3c] sm:$0xf] %vm1434, %v1321
      %1451 = vst.msk [vmem:[%s175 + $0x40] sm:$0xf] %vm1434, %v1322
      %1452 = vst.msk [vmem:[%s175 + $0x44] sm:$0xf] %vm1434, %v1323
      %1453 = vst.msk [vmem:[%s175 + $0x48] sm:$0xf] %vm1434, %v1324
      %1454 = vst.msk [vmem:[%s175 + $0x4c] sm:$0xf] %vm1434, %v1325
      %1455 = vst.msk [vmem:[%s175 + $0x50] sm:$0xf] %vm1434, %v1326
      %1456 = vst.msk [vmem:[%s175 + $0x54] sm:$0xf] %vm1434, %v1327
      %1457 = vst.msk [vmem:[%s175 + $0x58] sm:$0xf] %vm1434, %v1328
      %1458 = vst.msk [vmem:[%s175 + $0x5c] sm:$0xf] %vm1434, %v1329
      %1459 = vst.msk [vmem:[%s175 + $0x60] sm:$0xf] %vm1434, %v1330
      %1460 = vst.msk [vmem:[%s175 + $0x64] sm:$0xf] %vm1434, %v1331
      %1461 = vst.msk [vmem:[%s175 + $0x68] sm:$0xf] %vm1434, %v1332
      %1462 = vst.msk [vmem:[%s175 + $0x6c] sm:$0xf] %vm1434, %v1333
      %1463 = vst.msk [vmem:[%s175 + $0x70] sm:$0xf] %vm1434, %v1334
      %1464 = vst.msk [vmem:[%s175 + $0x74] sm:$0xf] %vm1434, %v1335
      %1465 = vst.msk [vmem:[%s175 + $0x78] sm:$0xf] %vm1434, %v1336
      %1466 = vst.msk [vmem:[%s175 + $0x7c] sm:$0xf] %vm1434, %v1337
      %1467 = vst.msk [vmem:[%s175 + $0x80] sm:$0xf] %vm1434, %v1338
      %1468 = vst.msk [vmem:[%s175 + $0x84] sm:$0xf] %vm1434, %v1339
      %1469 = vst.msk [vmem:[%s175 + $0x88] sm:$0xf] %vm1434, %v1340
      %1470 = vst.msk [vmem:[%s175 + $0x8c] sm:$0xf] %vm1434, %v1341
      %1471 = vst.msk [vmem:[%s175 + $0x90] sm:$0xf] %vm1434, %v1342
      %1472 = vst.msk [vmem:[%s175 + $0x94] sm:$0xf] %vm1434, %v1343
      %1473 = vst.msk [vmem:[%s175 + $0x98] sm:$0xf] %vm1434, %v1344
      %1474 = vst.msk [vmem:[%s175 + $0x9c] sm:$0xf] %vm1434, %v1345
      %1475 = vst.msk [vmem:[%s175 + $0xa0] sm:$0xf] %vm1434, %v1346
      %1476 = vst.msk [vmem:[%s175 + $0xa4] sm:$0xf] %vm1434, %v1347
      %1477 = vst.msk [vmem:[%s175 + $0xa8] sm:$0xf] %vm1434, %v1348
      %1478 = vst.msk [vmem:[%s175 + $0xac] sm:$0xf] %vm1434, %v1349
      %1479 = vst.msk [vmem:[%s175 + $0xb0] sm:$0xf] %vm1434, %v1350
      %1480 = vst.msk [vmem:[%s175 + $0xb4] sm:$0xf] %vm1434, %v1351
      %1481 = vst.msk [vmem:[%s175 + $0xb8] sm:$0xf] %vm1434, %v1352
      %1482 = vst.msk [vmem:[%s175 + $0xbc] sm:$0xf] %vm1434, %v1353
      %1483 = vst.msk [vmem:[%s175 + $0xc0] sm:$0xf] %vm1434, %v1354
      %1484 = vst.msk [vmem:[%s175 + $0xc4] sm:$0xf] %vm1434, %v1355
      %1485 = vst.msk [vmem:[%s175 + $0xc8] sm:$0xf] %vm1434, %v1356
      %1486 = vst.msk [vmem:[%s175 + $0xcc] sm:$0xf] %vm1434, %v1357
      %1487 = vst.msk [vmem:[%s175 + $0xd0] sm:$0xf] %vm1434, %v1358
      %1488 = vst.msk [vmem:[%s175 + $0xd4] sm:$0xf] %vm1434, %v1359
      %1489 = vst.msk [vmem:[%s175 + $0xd8] sm:$0xf] %vm1434, %v1360
      %1490 = vst.msk [vmem:[%s175 + $0xdc] sm:$0xf] %vm1434, %v1361
      %1491 = vst.msk [vmem:[%s175 + $0xe0] sm:$0xf] %vm1434, %v1362
      %1492 = vst.msk [vmem:[%s175 + $0xe4] sm:$0xf] %vm1434, %v1363
      %1493 = vst.msk [vmem:[%s175 + $0xe8] sm:$0xf] %vm1434, %v1364
      %1494 = vst.msk [vmem:[%s175 + $0xec] sm:$0xf] %vm1434, %v1365
      %1495 = vst.msk [vmem:[%s175 + $0xf0] sm:$0xf] %vm1434, %v1366
      %1496 = vst.msk [vmem:[%s175 + $0xf4] sm:$0xf] %vm1434, %v1367
      %1497 = vst.msk [vmem:[%s175 + $0xf8] sm:$0xf] %vm1434, %v1368
      %1498 = vst.msk [vmem:[%s175 + $0xfc] sm:$0xf] %vm1434, %v1369
      %s1499 = smul.u32 64, %s14
      %p1500 = scmp.lt.s32.totalorder %s1499, 127
      %s1501 = scalar_select %p1500, %s1499, 127
      %s1502 = smul.addr %s1501, 4
      %s1503 = scalar_lea.vmem %s3, %s1502
      // Predicated region
      $region33: #{episodic_curiosity_forward.5} parent=31 // pred_check
        %p1504 = pneg %p100
      $region34: #{episodic_curiosity_forward.5} parent=31 // pred_check_branch
        %1506 = sbr.rel (%p1504) target = $region36
      $region35: #{episodic_curiosity_forward.5} parent=31 // pred_region
        %s1507 = smul.u32 64, %s14
      $region36: #{episodic_curiosity_forward.5} parent=31 // pred_fallthru
        _
    $region32: #{episodic_curiosity_forward.5} parent=5 // pred_fallthru
      _
    %p1508 = scmp.le.s32.totalorder 2, %s9
    // Predicated region
    $region37: #{episodic_curiosity_forward.5} parent=5 // pred_check
      %p1509 = pneg %p1508
    $region38: #{episodic_curiosity_forward.5} parent=5 // pred_check_branch
      %1511 = sbr.rel (%p1509) target = $region40
    $region39: #{episodic_curiosity_forward.5} parent=5 // pred_region
      %s1512 = ssub.s32 %s9, 2
      // Predicated region
      $region41: #{episodic_curiosity_forward.5} parent=39 // pred_check
        %p1513 = pneg %p106
      $region42: #{episodic_curiosity_forward.5} parent=39 // pred_check_branch
        %1515 = sbr.rel (%p1513) target = $region44
      $region43: #{episodic_curiosity_forward.5} parent=39 // pred_region
        %s1516 = smul.u32 64, %s15
        %p1517 = scmp.lt.s32.totalorder %s1516, 127
        %s1518 = scalar_select %p1517, %s1516, 127
        %s1519 = smul.addr %s1518, 4
        %s1520 = scalar_lea.vmem %s3, %s1519
      $region44: #{episodic_curiosity_forward.5} parent=39 // pred_fallthru
        _
    $region40: #{episodic_curiosity_forward.5} parent=5 // pred_fallthru
      _
  $region6: #{episodic_curiosity_forward.5} parent=0 // loop_footer
    %s13 = sadd.s32 1, %s9
  $region7: #{episodic_curiosity_forward.5} parent=0 // loop_footer_branch
    %8 = sbr.rel target = $region3
  $region8: #{episodic_curiosity_forward.5} parent=0 // loop_exit
    _

// kernel: episodic_curiosity_forward.6
$region0: #{episodic_curiosity_forward.6}
  #allocation0 [shape = 'u32[]', space=smem, size = 0x4, offset = 0x4, fixed_abs, tag = 'smem constant byte address 0x4 - core index']
  #allocation1 [shape = 'u32[144,128]{1,0:T(1,128)}', space=vmem, size = 0x12000, scoped, tag = 'internal scratch']
  %s0 = inlined_call_operand.vmem [shape: bf16[144,512], index: 0, kind: input, shape index: {}]
  %s1 = inlined_call_operand.vmem [shape: bf16[512,64], index: 1, kind: input, shape index: {}]
  %s2 = inlined_call_operand.vmem [shape: f32[1,64], index: 2, kind: input, shape index: {}]
  %s3 = inlined_call_operand.vmem [shape: bf16[144,64], index: 3, kind: output, shape index: {}]
  %s4 = sld [smem:[#allocation0]]
  $region22: #{episodic_curiosity_forward.6} parent=0
    _
  %s6 = ssub.s32 1, %s4
  %s7 = scalar_select 0, %s6, %s4
  // Predicated region
  $region2: #{episodic_curiosity_forward.6} parent=0 // pred_check
    _
  $region3: #{episodic_curiosity_forward.6} parent=0 // pred_check_branch
    %9 = sbr.rel (0) target = $region5
  $region4: #{episodic_curiosity_forward.6} parent=0 // pred_region
    _
  $region5: #{episodic_curiosity_forward.6} parent=0 // pred_fallthru
    _
  // Predicated region
  $region6: #{episodic_curiosity_forward.6} parent=0 // pred_check
    _
  $region7: #{episodic_curiosity_forward.6} parent=0 // pred_check_branch
    %11 = sbr.rel (0) target = $region9
  $region8: #{episodic_curiosity_forward.6} parent=0 // pred_region
    _
  $region9: #{episodic_curiosity_forward.6} parent=0 // pred_fallthru
    _
  // Predicated region
  $region10: #{episodic_curiosity_forward.6} parent=0 // pred_check
    _
  $region11: #{episodic_curiosity_forward.6} parent=0 // pred_check_branch
    %13 = sbr.rel (0) target = $region13
  $region12: #{episodic_curiosity_forward.6} parent=0 // pred_region
    _
  $region13: #{episodic_curiosity_forward.6} parent=0 // pred_fallthru
    _
  %v15 = vld [vmem:[%s0] sm:$0xff]
  %v16 = vld [vmem:[%s0 + $0x8] sm:$0xff]
  %v17 = vld [vmem:[%s0 + $0x10] sm:$0xff]
  %v18 = vld [vmem:[%s0 + $0x18] sm:$0xff]
  %v19 = vld [vmem:[%s0 + $0x20] sm:$0xff]
  %v20 = vld [vmem:[%s0 + $0x28] sm:$0xff]
  %v21 = vld [vmem:[%s0 + $0x30] sm:$0xff]
  %v22 = vld [vmem:[%s0 + $0x38] sm:$0xff]
  %v23 = vld [vmem:[%s0 + $0x40] sm:$0xff]
  %v24 = vld [vmem:[%s0 + $0x48] sm:$0xff]
  %v25 = vld [vmem:[%s0 + $0x50] sm:$0xff]
  %v26 = vld [vmem:[%s0 + $0x58] sm:$0xff]
  %v27 = vld [vmem:[%s0 + $0x60] sm:$0xff]
  %v28 = vld [vmem:[%s0 + $0x68] sm:$0xff]
  %v29 = vld [vmem:[%s0 + $0x70] sm:$0xff]
  %v30 = vld [vmem:[%s0 + $0x78] sm:$0xff]
  %v31 = vld [vmem:[%s0 + $0x80] sm:$0xff]
  %v32 = vld [vmem:[%s0 + $0x88] sm:$0xff]
  %v33 = vld [vmem:[%s0 + $0x90] sm:$0xff]
  %v34 = vld [vmem:[%s0 + $0x98] sm:$0xff]
  %v35 = vld [vmem:[%s0 + $0xa0] sm:$0xff]
  %v36 = vld [vmem:[%s0 + $0xa8] sm:$0xff]
  %v37 = vld [vmem:[%s0 + $0xb0] sm:$0xff]
  %v38 = vld [vmem:[%s0 + $0xb8] sm:$0xff]
  %v39 = vld [vmem:[%s0 + $0xc0] sm:$0xff]
  %v40 = vld [vmem:[%s0 + $0xc8] sm:$0xff]
  %v41 = vld [vmem:[%s0 + $0xd0] sm:$0xff]
  %v42 = vld [vmem:[%s0 + $0xd8] sm:$0xff]
  %v43 = vld [vmem:[%s0 + $0xe0] sm:$0xff]
  %v44 = vld [vmem:[%s0 + $0xe8] sm:$0xff]
  %v45 = vld [vmem:[%s0 + $0xf0] sm:$0xff]
  %v46 = vld [vmem:[%s0 + $0xf8] sm:$0xff]
  %v47 = vld [vmem:[%s0 + $0x100] sm:$0xff]
  %v48 = vld [vmem:[%s0 + $0x108] sm:$0xff]
  %v49 = vld [vmem:[%s0 + $0x110] sm:$0xff]
  %v50 = vld [vmem:[%s0 + $0x118] sm:$0xff]
  %v51 = vld [vmem:[%s1] sm:$0xf]
  %v52 = vld [vmem:[%s1 + $0x4] sm:$0xf]
  %v53 = vld [vmem:[%s1 + $0x8] sm:$0xf]
  %v54 = vld [vmem:[%s1 + $0xc] sm:$0xf]
  %v55 = vld [vmem:[%s1 + $0x10] sm:$0xf]
  %v56 = vld [vmem:[%s1 + $0x14] sm:$0xf]
  %v57 = vld [vmem:[%s1 + $0x18] sm:$0xf]
  %v58 = vld [vmem:[%s1 + $0x1c] sm:$0xf]
  %v59 = vld [vmem:[%s1 + $0x20] sm:$0xf]
  %v60 = vld [vmem:[%s1 + $0x24] sm:$0xf]
  %v61 = vld [vmem:[%s1 + $0x28] sm:$0xf]
  %v62 = vld [vmem:[%s1 + $0x2c] sm:$0xf]
  %v63 = vld [vmem:[%s1 + $0x30] sm:$0xf]
  %v64 = vld [vmem:[%s1 + $0x34] sm:$0xf]
  %v65 = vld [vmem:[%s1 + $0x38] sm:$0xf]
  %v66 = vld [vmem:[%s1 + $0x3c] sm:$0xf]
  %v67 = vld [vmem:[%s1 + $0x40] sm:$0xf]
  %v68 = vld [vmem:[%s1 + $0x44] sm:$0xf]
  %v69 = vld [vmem:[%s1 + $0x48] sm:$0xf]
  %v70 = vld [vmem:[%s1 + $0x4c] sm:$0xf]
  %v71 = vld [vmem:[%s1 + $0x50] sm:$0xf]
  %v72 = vld [vmem:[%s1 + $0x54] sm:$0xf]
  %v73 = vld [vmem:[%s1 + $0x58] sm:$0xf]
  %v74 = vld [vmem:[%s1 + $0x5c] sm:$0xf]
  %v75 = vld [vmem:[%s1 + $0x60] sm:$0xf]
  %v76 = vld [vmem:[%s1 + $0x64] sm:$0xf]
  %v77 = vld [vmem:[%s1 + $0x68] sm:$0xf]
  %v78 = vld [vmem:[%s1 + $0x6c] sm:$0xf]
  %v79 = vld [vmem:[%s1 + $0x70] sm:$0xf]
  %v80 = vld [vmem:[%s1 + $0x74] sm:$0xf]
  %v81 = vld [vmem:[%s1 + $0x78] sm:$0xf]
  %v82 = vld [vmem:[%s1 + $0x7c] sm:$0xf]
  %v83 = vld [vmem:[%s1 + $0x80] sm:$0xf]
  %v84 = vld [vmem:[%s1 + $0x84] sm:$0xf]
  %v85 = vld [vmem:[%s1 + $0x88] sm:$0xf]
  %v86 = vld [vmem:[%s1 + $0x8c] sm:$0xf]
  %v87 = vld [vmem:[%s1 + $0x90] sm:$0xf]
  %v88 = vld [vmem:[%s1 + $0x94] sm:$0xf]
  %v89 = vld [vmem:[%s1 + $0x98] sm:$0xf]
  %v90 = vld [vmem:[%s1 + $0x9c] sm:$0xf]
  %v91 = vld [vmem:[%s1 + $0xa0] sm:$0xf]
  %v92 = vld [vmem:[%s1 + $0xa4] sm:$0xf]
  %v93 = vld [vmem:[%s1 + $0xa8] sm:$0xf]
  %v94 = vld [vmem:[%s1 + $0xac] sm:$0xf]
  %v95 = vld [vmem:[%s1 + $0xb0] sm:$0xf]
  %v96 = vld [vmem:[%s1 + $0xb4] sm:$0xf]
  %v97 = vld [vmem:[%s1 + $0xb8] sm:$0xf]
  %v98 = vld [vmem:[%s1 + $0xbc] sm:$0xf]
  %v99 = vld [vmem:[%s1 + $0xc0] sm:$0xf]
  %v100 = vld [vmem:[%s1 + $0xc4] sm:$0xf]
  %v101 = vld [vmem:[%s1 + $0xc8] sm:$0xf]
  %v102 = vld [vmem:[%s1 + $0xcc] sm:$0xf]
  %v103 = vld [vmem:[%s1 + $0xd0] sm:$0xf]
  %v104 = vld [vmem:[%s1 + $0xd4] sm:$0xf]
  %v105 = vld [vmem:[%s1 + $0xd8] sm:$0xf]
  %v106 = vld [vmem:[%s1 + $0xdc] sm:$0xf]
  %v107 = vld [vmem:[%s1 + $0xe0] sm:$0xf]
  %v108 = vld [vmem:[%s1 + $0xe4] sm:$0xf]
  %v109 = vld [vmem:[%s1 + $0xe8] sm:$0xf]
  %v110 = vld [vmem:[%s1 + $0xec] sm:$0xf]
  %v111 = vld [vmem:[%s1 + $0xf0] sm:$0xf]
  %v112 = vld [vmem:[%s1 + $0xf4] sm:$0xf]
  %v113 = vld [vmem:[%s1 + $0xf8] sm:$0xf]
  %v114 = vld [vmem:[%s1 + $0xfc] sm:$0xf]
  %v115 = vld [vmem:[%s2] sm:$0x1]
  %v117 = vlaneseq
  %v118 = vshrl.u32 %v117, 7
  %v119 = vsub.s32 0, %v118
  %v120 = vrot.slane %v115, %v119
  %v158 = vunpack.c.l.b16 %v15
  %v159 = vunpack.c.h.b16 %v15
  %v160 = vunpack.c.l.b16 %v16
  %v161 = vunpack.c.h.b16 %v16
  %v162 = vunpack.c.l.b16 %v17
  %v163 = vunpack.c.h.b16 %v17
  %v164 = vunpack.c.l.b16 %v18
  %v165 = vunpack.c.h.b16 %v18
  %v166 = vunpack.c.l.b16 %v19
  %v167 = vunpack.c.h.b16 %v19
  %v168 = vunpack.c.l.b16 %v20
  %v169 = vunpack.c.h.b16 %v20
  %v170 = vunpack.c.l.b16 %v21
  %v171 = vunpack.c.h.b16 %v21
  %v172 = vunpack.c.l.b16 %v22
  %v173 = vunpack.c.h.b16 %v22
  %v174 = vunpack.c.l.b16 %v23
  %v175 = vunpack.c.h.b16 %v23
  %v176 = vunpack.c.l.b16 %v24
  %v177 = vunpack.c.h.b16 %v24
  %v178 = vunpack.c.l.b16 %v25
  %v179 = vunpack.c.h.b16 %v25
  %v180 = vunpack.c.l.b16 %v26
  %v181 = vunpack.c.h.b16 %v26
  %v182 = vunpack.c.l.b16 %v27
  %v183 = vunpack.c.h.b16 %v27
  %v184 = vunpack.c.l.b16 %v28
  %v185 = vunpack.c.h.b16 %v28
  %v186 = vunpack.c.l.b16 %v29
  %v187 = vunpack.c.h.b16 %v29
  %v188 = vunpack.c.l.b16 %v30
  %v189 = vunpack.c.h.b16 %v30
  %v190 = vunpack.c.l.b16 %v31
  %v191 = vunpack.c.h.b16 %v31
  %v192 = vunpack.c.l.b16 %v32
  %v193 = vunpack.c.h.b16 %v32
  %v194 = vunpack.c.l.b16 %v33
  %v195 = vunpack.c.h.b16 %v33
  %v196 = vunpack.c.l.b16 %v34
  %v197 = vunpack.c.h.b16 %v34
  %v198 = vunpack.c.l.b16 %v35
  %v199 = vunpack.c.h.b16 %v35
  %v200 = vunpack.c.l.b16 %v36
  %v201 = vunpack.c.h.b16 %v36
  %v202 = vunpack.c.l.b16 %v37
  %v203 = vunpack.c.h.b16 %v37
  %v204 = vunpack.c.l.b16 %v38
  %v205 = vunpack.c.h.b16 %v38
  %v206 = vunpack.c.l.b16 %v39
  %v207 = vunpack.c.h.b16 %v39
  %v208 = vunpack.c.l.b16 %v40
  %v209 = vunpack.c.h.b16 %v40
  %v210 = vunpack.c.l.b16 %v41
  %v211 = vunpack.c.h.b16 %v41
  %v212 = vunpack.c.l.b16 %v42
  %v213 = vunpack.c.h.b16 %v42
  %v214 = vunpack.c.l.b16 %v43
  %v215 = vunpack.c.h.b16 %v43
  %v216 = vunpack.c.l.b16 %v44
  %v217 = vunpack.c.h.b16 %v44
  %v218 = vunpack.c.l.b16 %v45
  %v219 = vunpack.c.h.b16 %v45
  %v220 = vunpack.c.l.b16 %v46
  %v221 = vunpack.c.h.b16 %v46
  %v222 = vunpack.c.l.b16 %v47
  %v223 = vunpack.c.h.b16 %v47
  %v224 = vunpack.c.l.b16 %v48
  %v225 = vunpack.c.h.b16 %v48
  %v226 = vunpack.c.l.b16 %v49
  %v227 = vunpack.c.h.b16 %v49
  %v228 = vunpack.c.l.b16 %v50
  %v229 = vunpack.c.h.b16 %v50
  %v230 = vpack.c.b16 %v162, %v158
  %v231 = vpack.c.b16 %v163, %v159
  %v232 = vpack.c.b16 %v164, %v160
  %v233 = vpack.c.b16 %v165, %v161
  %v234 = vpack.c.b16 %v170, %v166
  %v235 = vpack.c.b16 %v171, %v167
  %v236 = vpack.c.b16 %v172, %v168
  %v237 = vpack.c.b16 %v173, %v169
  %v238 = vpack.c.b16 %v178, %v174
  %v239 = vpack.c.b16 %v179, %v175
  %v240 = vpack.c.b16 %v180, %v176
  %v241 = vpack.c.b16 %v181, %v177
  %v242 = vpack.c.b16 %v186, %v182
  %v243 = vpack.c.b16 %v187, %v183
  %v244 = vpack.c.b16 %v188, %v184
  %v245 = vpack.c.b16 %v189, %v185
  %v246 = vpack.c.b16 %v194, %v190
  %v247 = vpack.c.b16 %v195, %v191
  %v248 = vpack.c.b16 %v196, %v192
  %v249 = vpack.c.b16 %v197, %v193
  %v250 = vpack.c.b16 %v202, %v198
  %v251 = vpack.c.b16 %v203, %v199
  %v252 = vpack.c.b16 %v204, %v200
  %v253 = vpack.c.b16 %v205, %v201
  %v254 = vpack.c.b16 %v210, %v206
  %v255 = vpack.c.b16 %v211, %v207
  %v256 = vpack.c.b16 %v212, %v208
  %v257 = vpack.c.b16 %v213, %v209
  %v258 = vpack.c.b16 %v218, %v214
  %v259 = vpack.c.b16 %v219, %v215
  %v260 = vpack.c.b16 %v220, %v216
  %v261 = vpack.c.b16 %v221, %v217
  %v262 = vpack.c.b16 %v226, %v222
  %v263 = vpack.c.b16 %v227, %v223
  %v264 = vpack.c.b16 %v228, %v224
  %v265 = vpack.c.b16 %v229, %v225
  %v366 = vunpack.c.l.b16 %v51
  %v367 = vunpack.c.l.b16 %v52
  %v368 = vunpack.c.l.b16 %v53
  %v369 = vunpack.c.l.b16 %v54
  %v370 = vunpack.c.l.b16 %v55
  %v371 = vunpack.c.l.b16 %v56
  %v372 = vunpack.c.l.b16 %v57
  %v373 = vunpack.c.l.b16 %v58
  %v374 = vunpack.c.l.b16 %v59
  %v375 = vunpack.c.l.b16 %v60
  %v376 = vunpack.c.l.b16 %v61
  %v377 = vunpack.c.l.b16 %v62
  %v378 = vunpack.c.l.b16 %v63
  %v379 = vunpack.c.l.b16 %v64
  %v380 = vunpack.c.l.b16 %v65
  %v381 = vunpack.c.l.b16 %v66
  %v382 = vunpack.c.l.b16 %v67
  %v383 = vunpack.c.l.b16 %v68
  %v384 = vunpack.c.l.b16 %v69
  %v385 = vunpack.c.l.b16 %v70
  %v386 = vunpack.c.l.b16 %v71
  %v387 = vunpack.c.l.b16 %v72
  %v388 = vunpack.c.l.b16 %v73
  %v389 = vunpack.c.l.b16 %v74
  %v390 = vunpack.c.l.b16 %v75
  %v391 = vunpack.c.l.b16 %v76
  %v392 = vunpack.c.l.b16 %v77
  %v393 = vunpack.c.l.b16 %v78
  %v394 = vunpack.c.l.b16 %v79
  %v395 = vunpack.c.l.b16 %v80
  %v396 = vunpack.c.l.b16 %v81
  %v397 = vunpack.c.l.b16 %v82
  %v398 = vunpack.c.l.b16 %v83
  %v399 = vunpack.c.l.b16 %v84
  %v400 = vunpack.c.l.b16 %v85
  %v401 = vunpack.c.l.b16 %v86
  %v402 = vunpack.c.l.b16 %v87
  %v403 = vunpack.c.l.b16 %v88
  %v404 = vunpack.c.l.b16 %v89
  %v405 = vunpack.c.l.b16 %v90
  %v406 = vunpack.c.l.b16 %v91
  %v407 = vunpack.c.l.b16 %v92
  %v408 = vunpack.c.l.b16 %v93
  %v409 = vunpack.c.l.b16 %v94
  %v410 = vunpack.c.l.b16 %v95
  %v411 = vunpack.c.l.b16 %v96
  %v412 = vunpack.c.l.b16 %v97
  %v413 = vunpack.c.l.b16 %v98
  %v414 = vunpack.c.l.b16 %v99
  %v415 = vunpack.c.l.b16 %v100
  %v416 = vunpack.c.l.b16 %v101
  %v417 = vunpack.c.l.b16 %v102
  %v418 = vunpack.c.l.b16 %v103
  %v419 = vunpack.c.l.b16 %v104
  %v420 = vunpack.c.l.b16 %v105
  %v421 = vunpack.c.l.b16 %v106
  %v422 = vunpack.c.l.b16 %v107
  %v423 = vunpack.c.l.b16 %v108
  %v424 = vunpack.c.l.b16 %v109
  %v425 = vunpack.c.l.b16 %v110
  %v426 = vunpack.c.l.b16 %v111
  %v427 = vunpack.c.l.b16 %v112
  %v428 = vunpack.c.l.b16 %v113
  %v429 = vunpack.c.l.b16 %v114
  %v430 = vpack.c.b16 %v367, %v366
  %v431 = vpack.c.b16 %v369, %v368
  %v432 = vpack.c.b16 %v371, %v370
  %v433 = vpack.c.b16 %v373, %v372
  %v434 = vpack.c.b16 %v375, %v374
  %v435 = vpack.c.b16 %v377, %v376
  %v436 = vpack.c.b16 %v379, %v378
  %v437 = vpack.c.b16 %v381, %v380
  %v438 = vpack.c.b16 %v383, %v382
  %v439 = vpack.c.b16 %v385, %v384
  %v440 = vpack.c.b16 %v387, %v386
  %v441 = vpack.c.b16 %v389, %v388
  %v442 = vpack.c.b16 %v391, %v390
  %v443 = vpack.c.b16 %v393, %v392
  %v444 = vpack.c.b16 %v395, %v394
  %v445 = vpack.c.b16 %v397, %v396
  %v446 = vpack.c.b16 %v399, %v398
  %v447 = vpack.c.b16 %v401, %v400
  %v448 = vpack.c.b16 %v403, %v402
  %v449 = vpack.c.b16 %v405, %v404
  %v450 = vpack.c.b16 %v407, %v406
  %v451 = vpack.c.b16 %v409, %v408
  %v452 = vpack.c.b16 %v411, %v410
  %v453 = vpack.c.b16 %v413, %v412
  %v454 = vpack.c.b16 %v415, %v414
  %v455 = vpack.c.b16 %v417, %v416
  %v456 = vpack.c.b16 %v419, %v418
  %v457 = vpack.c.b16 %v421, %v420
  %v458 = vpack.c.b16 %v423, %v422
  %v459 = vpack.c.b16 %v425, %v424
  %v460 = vpack.c.b16 %v427, %v426
  %v461 = vpack.c.b16 %v429, %v428
  %494 = vmatprep.subr.bf16.mxu0 0
  %495 = vmatpush1.bf16.msra.mxu0 %v437
  %496 = vmatprep.subr.bf16.mxu0 0
  %497 = vmatpush1.bf16.msra.mxu0 %v436
  %498 = vmatprep.subr.bf16.mxu0 0
  %499 = vmatpush1.bf16.msra.mxu0 %v435
  %500 = vmatprep.subr.bf16.mxu0 0
  %501 = vmatpush1.bf16.msra.mxu0 %v434
  %502 = vmatprep.subr.bf16.mxu0 0
  %503 = vmatpush1.bf16.msra.mxu0 %v433
  %504 = vmatprep.subr.bf16.mxu0 0
  %505 = vmatpush1.bf16.msra.mxu0 %v432
  %506 = vmatprep.subr.bf16.mxu0 0
  %507 = vmatpush1.bf16.msra.mxu0 %v431
  %508 = vmatprep.subr.bf16.mxu0 0
  %509 = vmatpush1.bf16.msra.mxu0 %v430
  %510 = vmatprep.subr.bf16.mxu0 0
  %511 = vmatpush2.bf16.msra.mxu0 %v445
  %512 = vmatprep.subr.bf16.mxu0 0
  %513 = vmatpush2.bf16.msra.mxu0 %v444
  %514 = vmatprep.subr.bf16.mxu0 0
  %515 = vmatpush2.bf16.msra.mxu0 %v443
  %516 = vmatprep.subr.bf16.mxu0 0
  %517 = vmatpush2.bf16.msra.mxu0 %v442
  %518 = vmatprep.subr.bf16.mxu0 0
  %519 = vmatpush2.bf16.msra.mxu0 %v441
  %520 = vmatprep.subr.bf16.mxu0 0
  %521 = vmatpush2.bf16.msra.mxu0 %v440
  %522 = vmatprep.subr.bf16.mxu0 0
  %523 = vmatpush2.bf16.msra.mxu0 %v439
  %524 = vmatprep.subr.bf16.mxu0 0
  %525 = vmatpush2.bf16.msra.mxu0 %v438
  %526 = vmatprep.mubr.bf16.mxu0 %v231
  %527 = vmatmul.mubr.bf16.gmra.mxu0 %v230
  %v528 = vpop.f32.mrf.mxu0
  %v529 = vadd.f32 %v120, %v528
  %v530 = vpop.f32.mrf.mxu0
  %v531 = vpop.f32.mrf.mxu0
  %v532 = vadd.f32 %v120, %v531
  %v533 = vpop.f32.mrf.mxu0
  %534 = vmatprep.mubr.bf16.mxu0 %v235
  %535 = vmatmul.mubr.bf16.gmra.mxu0 %v234
  %v536 = vpop.f32.mrf.mxu0
  %v537 = vadd.f32 %v120, %v536
  %v538 = vpop.f32.mrf.mxu0
  %v539 = vpop.f32.mrf.mxu0
  %v540 = vadd.f32 %v120, %v539
  %v541 = vpop.f32.mrf.mxu0
  %542 = vmatprep.mubr.bf16.mxu0 %v239
  %543 = vmatmul.mubr.bf16.gmra.mxu0 %v238
  %v544 = vpop.f32.mrf.mxu0
  %v545 = vadd.f32 %v120, %v544
  %v546 = vpop.f32.mrf.mxu0
  %v547 = vpop.f32.mrf.mxu0
  %v548 = vadd.f32 %v120, %v547
  %v549 = vpop.f32.mrf.mxu0
  %550 = vmatprep.mubr.bf16.mxu0 %v243
  %551 = vmatmul.mubr.bf16.gmra.mxu0 %v242
  %v552 = vpop.f32.mrf.mxu0
  %v553 = vadd.f32 %v120, %v552
  %v554 = vpop.f32.mrf.mxu0
  %v555 = vpop.f32.mrf.mxu0
  %v556 = vadd.f32 %v120, %v555
  %v557 = vpop.f32.mrf.mxu0
  %558 = vmatprep.mubr.bf16.mxu0 %v247
  %559 = vmatmul.mubr.bf16.gmra.mxu0 %v246
  %v560 = vpop.f32.mrf.mxu0
  %v561 = vadd.f32 %v120, %v560
  %v562 = vpop.f32.mrf.mxu0
  %v563 = vpop.f32.mrf.mxu0
  %v564 = vadd.f32 %v120, %v563
  %v565 = vpop.f32.mrf.mxu0
  %566 = vmatprep.mubr.bf16.mxu0 %v251
  %567 = vmatmul.mubr.bf16.gmra.mxu0 %v250
  %v568 = vpop.f32.mrf.mxu0
  %v569 = vadd.f32 %v120, %v568
  %v570 = vpop.f32.mrf.mxu0
  %v571 = vpop.f32.mrf.mxu0
  %v572 = vadd.f32 %v120, %v571
  %v573 = vpop.f32.mrf.mxu0
  %574 = vmatprep.mubr.bf16.mxu0 %v255
  %575 = vmatmul.mubr.bf16.gmra.mxu0 %v254
  %v576 = vpop.f32.mrf.mxu0
  %v577 = vadd.f32 %v120, %v576
  %v578 = vpop.f32.mrf.mxu0
  %v579 = vpop.f32.mrf.mxu0
  %v580 = vadd.f32 %v120, %v579
  %v581 = vpop.f32.mrf.mxu0
  %582 = vmatprep.mubr.bf16.mxu0 %v259
  %583 = vmatmul.mubr.bf16.gmra.mxu0 %v258
  %v584 = vpop.f32.mrf.mxu0
  %v585 = vadd.f32 %v120, %v584
  %v586 = vpop.f32.mrf.mxu0
  %v587 = vpop.f32.mrf.mxu0
  %v588 = vadd.f32 %v120, %v587
  %v589 = vpop.f32.mrf.mxu0
  %590 = vmatprep.mubr.bf16.mxu0 %v263
  %591 = vmatmul.mubr.bf16.gmra.mxu0 %v262
  %v592 = vpop.f32.mrf.mxu0
  %v593 = vadd.f32 %v120, %v592
  %v594 = vpop.f32.mrf.mxu0
  %v595 = vpop.f32.mrf.mxu0
  %v596 = vadd.f32 %v120, %v595
  %v597 = vpop.f32.mrf.mxu0
  %598 = vdwg.mxu0
  %599 = vmatprep.subr.bf16.mxu0 0
  %600 = vmatpush1.bf16.msra.mxu0 %v453
  %601 = vmatprep.subr.bf16.mxu0 0
  %602 = vmatpush1.bf16.msra.mxu0 %v452
  %603 = vmatprep.subr.bf16.mxu0 0
  %604 = vmatpush1.bf16.msra.mxu0 %v451
  %605 = vmatprep.subr.bf16.mxu0 0
  %606 = vmatpush1.bf16.msra.mxu0 %v450
  %607 = vmatprep.subr.bf16.mxu0 0
  %608 = vmatpush1.bf16.msra.mxu0 %v449
  %609 = vmatprep.subr.bf16.mxu0 0
  %610 = vmatpush1.bf16.msra.mxu0 %v448
  %611 = vmatprep.subr.bf16.mxu0 0
  %612 = vmatpush1.bf16.msra.mxu0 %v447
  %613 = vmatprep.subr.bf16.mxu0 0
  %614 = vmatpush1.bf16.msra.mxu0 %v446
  %615 = vmatprep.subr.bf16.mxu0 0
  %616 = vmatpush2.bf16.msra.mxu0 %v461
  %617 = vmatprep.subr.bf16.mxu0 0
  %618 = vmatpush2.bf16.msra.mxu0 %v460
  %619 = vmatprep.subr.bf16.mxu0 0
  %620 = vmatpush2.bf16.msra.mxu0 %v459
  %621 = vmatprep.subr.bf16.mxu0 0
  %622 = vmatpush2.bf16.msra.mxu0 %v458
  %623 = vmatprep.subr.bf16.mxu0 0
  %624 = vmatpush2.bf16.msra.mxu0 %v457
  %625 = vmatprep.subr.bf16.mxu0 0
  %626 = vmatpush2.bf16.msra.mxu0 %v456
  %627 = vmatprep.subr.bf16.mxu0 0
  %628 = vmatpush2.bf16.msra.mxu0 %v455
  %629 = vmatprep.subr.bf16.mxu0 0
  %630 = vmatpush2.bf16.msra.mxu0 %v454
  %631 = vmatprep.mubr.bf16.mxu0 %v233
  %632 = vmatmul.mubr.bf16.gmra.mxu0 %v232
  %v633 = vpop.f32.mrf.mxu0
  %v634 = vadd.f32 %v529, %v633
  %v635 = vpop.f32.mrf.mxu0
  %v636 = vpop.f32.mrf.mxu0
  %v637 = vadd.f32 %v532, %v636
  %v638 = vpop.f32.mrf.mxu0
  %639 = vmatprep.mubr.bf16.mxu0 %v237
  %640 = vmatmul.mubr.bf16.gmra.mxu0 %v236
  %v641 = vpop.f32.mrf.mxu0
  %v642 = vadd.f32 %v537, %v641
  %v643 = vpop.f32.mrf.mxu0
  %v644 = vpop.f32.mrf.mxu0
  %v645 = vadd.f32 %v540, %v644
  %v646 = vpop.f32.mrf.mxu0
  %647 = vmatprep.mubr.bf16.mxu0 %v241
  %648 = vmatmul.mubr.bf16.gmra.mxu0 %v240
  %v649 = vpop.f32.mrf.mxu0
  %v650 = vadd.f32 %v545, %v649
  %v651 = vpop.f32.mrf.mxu0
  %v652 = vpop.f32.mrf.mxu0
  %v653 = vadd.f32 %v548, %v652
  %v654 = vpop.f32.mrf.mxu0
  %655 = vmatprep.mubr.bf16.mxu0 %v245
  %656 = vmatmul.mubr.bf16.gmra.mxu0 %v244
  %v657 = vpop.f32.mrf.mxu0
  %v658 = vadd.f32 %v553, %v657
  %v659 = vpop.f32.mrf.mxu0
  %v660 = vpop.f32.mrf.mxu0
  %v661 = vadd.f32 %v556, %v660
  %v662 = vpop.f32.mrf.mxu0
  %663 = vmatprep.mubr.bf16.mxu0 %v249
  %664 = vmatmul.mubr.bf16.gmra.mxu0 %v248
  %v665 = vpop.f32.mrf.mxu0
  %v666 = vadd.f32 %v561, %v665
  %v667 = vpop.f32.mrf.mxu0
  %v668 = vpop.f32.mrf.mxu0
  %v669 = vadd.f32 %v564, %v668
  %v670 = vpop.f32.mrf.mxu0
  %671 = vmatprep.mubr.bf16.mxu0 %v253
  %672 = vmatmul.mubr.bf16.gmra.mxu0 %v252
  %v673 = vpop.f32.mrf.mxu0
  %v674 = vadd.f32 %v569, %v673
  %v675 = vpop.f32.mrf.mxu0
  %v676 = vpop.f32.mrf.mxu0
  %v677 = vadd.f32 %v572, %v676
  %v678 = vpop.f32.mrf.mxu0
  %679 = vmatprep.mubr.bf16.mxu0 %v257
  %680 = vmatmul.mubr.bf16.gmra.mxu0 %v256
  %v681 = vpop.f32.mrf.mxu0
  %v682 = vadd.f32 %v577, %v681
  %v683 = vpop.f32.mrf.mxu0
  %v684 = vpop.f32.mrf.mxu0
  %v685 = vadd.f32 %v580, %v684
  %v686 = vpop.f32.mrf.mxu0
  %687 = vmatprep.mubr.bf16.mxu0 %v261
  %688 = vmatmul.mubr.bf16.gmra.mxu0 %v260
  %v689 = vpop.f32.mrf.mxu0
  %v690 = vadd.f32 %v585, %v689
  %v691 = vpop.f32.mrf.mxu0
  %v692 = vpop.f32.mrf.mxu0
  %v693 = vadd.f32 %v588, %v692
  %v694 = vpop.f32.mrf.mxu0
  %695 = vmatprep.mubr.bf16.mxu0 %v265
  %696 = vmatmul.mubr.bf16.gmra.mxu0 %v264
  %v697 = vpop.f32.mrf.mxu0
  %v698 = vadd.f32 %v593, %v697
  %v699 = vpop.f32.mrf.mxu0
  %v700 = vpop.f32.mrf.mxu0
  %v701 = vadd.f32 %v596, %v700
  %v702 = vpop.f32.mrf.mxu0
  %703 = vdwg.mxu0
  %vm704 = vcmp.ge.f32.partialorder %v634, 0.0
  %vm705 = vcmp.ge.f32.partialorder %v637, 0.0
  %vm706 = vcmp.ge.f32.partialorder %v642, 0.0
  %vm707 = vcmp.ge.f32.partialorder %v645, 0.0
  %vm708 = vcmp.ge.f32.partialorder %v650, 0.0
  %vm709 = vcmp.ge.f32.partialorder %v653, 0.0
  %vm710 = vcmp.ge.f32.partialorder %v658, 0.0
  %vm711 = vcmp.ge.f32.partialorder %v661, 0.0
  %vm712 = vcmp.ge.f32.partialorder %v666, 0.0
  %vm713 = vcmp.ge.f32.partialorder %v669, 0.0
  %vm714 = vcmp.ge.f32.partialorder %v674, 0.0
  %vm715 = vcmp.ge.f32.partialorder %v677, 0.0
  %vm716 = vcmp.ge.f32.partialorder %v682, 0.0
  %vm717 = vcmp.ge.f32.partialorder %v685, 0.0
  %vm718 = vcmp.ge.f32.partialorder %v690, 0.0
  %vm719 = vcmp.ge.f32.partialorder %v693, 0.0
  %vm720 = vcmp.ge.f32.partialorder %v698, 0.0
  %vm721 = vcmp.ge.f32.partialorder %v701, 0.0
  %v722 = vmul.f32 %v634, 0.01
  %v723 = vmul.f32 %v637, 0.01
  %v724 = vmul.f32 %v642, 0.01
  %v725 = vmul.f32 %v645, 0.01
  %v726 = vmul.f32 %v650, 0.01
  %v727 = vmul.f32 %v653, 0.01
  %v728 = vmul.f32 %v658, 0.01
  %v729 = vmul.f32 %v661, 0.01
  %v730 = vmul.f32 %v666, 0.01
  %v731 = vmul.f32 %v669, 0.01
  %v732 = vmul.f32 %v674, 0.01
  %v733 = vmul.f32 %v677, 0.01
  %v734 = vmul.f32 %v682, 0.01
  %v735 = vmul.f32 %v685, 0.01
  %v736 = vmul.f32 %v690, 0.01
  %v737 = vmul.f32 %v693, 0.01
  %v738 = vmul.f32 %v698, 0.01
  %v739 = vmul.f32 %v701, 0.01
  %v740 = vsel %vm704, %v634, %v722
  %v741 = vsel %vm705, %v637, %v723
  %v742 = vsel %vm706, %v642, %v724
  %v743 = vsel %vm707, %v645, %v725
  %v744 = vsel %vm708, %v650, %v726
  %v745 = vsel %vm709, %v653, %v727
  %v746 = vsel %vm710, %v658, %v728
  %v747 = vsel %vm711, %v661, %v729
  %v748 = vsel %vm712, %v666, %v730
  %v749 = vsel %vm713, %v669, %v731
  %v750 = vsel %vm714, %v674, %v732
  %v751 = vsel %vm715, %v677, %v733
  %v752 = vsel %vm716, %v682, %v734
  %v753 = vsel %vm717, %v685, %v735
  %v754 = vsel %vm718, %v690, %v736
  %v755 = vsel %vm719, %v693, %v737
  %v756 = vsel %vm720, %v698, %v738
  %v757 = vsel %vm721, %v701, %v739
  %v758 = vpack.c.bf16 %v741, %v740
  %v759 = vpack.c.bf16 %v743, %v742
  %v760 = vpack.c.bf16 %v745, %v744
  %v761 = vpack.c.bf16 %v747, %v746
  %v762 = vpack.c.bf16 %v749, %v748
  %v763 = vpack.c.bf16 %v751, %v750
  %v764 = vpack.c.bf16 %v753, %v752
  %v765 = vpack.c.bf16 %v755, %v754
  %v766 = vpack.c.bf16 %v757, %v756
  %v776 = vunpack.c.l.b16 %v758
  %v777 = vunpack.c.h.b16 %v758
  %v778 = vunpack.c.l.b16 %v759
  %v779 = vunpack.c.h.b16 %v759
  %v780 = vunpack.c.l.b16 %v760
  %v781 = vunpack.c.h.b16 %v760
  %v782 = vunpack.c.l.b16 %v761
  %v783 = vunpack.c.h.b16 %v761
  %v784 = vunpack.c.l.b16 %v762
  %v785 = vunpack.c.h.b16 %v762
  %v786 = vunpack.c.l.b16 %v763
  %v787 = vunpack.c.h.b16 %v763
  %v788 = vunpack.c.l.b16 %v764
  %v789 = vunpack.c.h.b16 %v764
  %v790 = vunpack.c.l.b16 %v765
  %v791 = vunpack.c.h.b16 %v765
  %v792 = vunpack.c.l.b16 %v766
  %v793 = vunpack.c.h.b16 %v766
  %v794 = vpack.c.b16 %v776, %v776
  %v795 = vpack.c.b16 %v777, %v777
  %v796 = vpack.c.b16 %v778, %v778
  %v797 = vpack.c.b16 %v779, %v779
  %v798 = vpack.c.b16 %v780, %v780
  %v799 = vpack.c.b16 %v781, %v781
  %v800 = vpack.c.b16 %v782, %v782
  %v801 = vpack.c.b16 %v783, %v783
  %v802 = vpack.c.b16 %v784, %v784
  %v803 = vpack.c.b16 %v785, %v785
  %v804 = vpack.c.b16 %v786, %v786
  %v805 = vpack.c.b16 %v787, %v787
  %v806 = vpack.c.b16 %v788, %v788
  %v807 = vpack.c.b16 %v789, %v789
  %v808 = vpack.c.b16 %v790, %v790
  %v809 = vpack.c.b16 %v791, %v791
  %v810 = vpack.c.b16 %v792, %v792
  %v811 = vpack.c.b16 %v793, %v793
  %vm830 = vcmask 519168
  %831 = vst.msk [vmem:[%s3] sm:$0xf] %vm830, %v794
  %832 = vst.msk [vmem:[%s3 + $0x4] sm:$0xf] %vm830, %v795
  %833 = vst.msk [vmem:[%s3 + $0x8] sm:$0xf] %vm830, %v796
  %834 = vst.msk [vmem:[%s3 + $0xc] sm:$0xf] %vm830, %v797
  %835 = vst.msk [vmem:[%s3 + $0x10] sm:$0xf] %vm830, %v798
  %836 = vst.msk [vmem:[%s3 + $0x14] sm:$0xf] %vm830, %v799
  %837 = vst.msk [vmem:[%s3 + $0x18] sm:$0xf] %vm830, %v800
  %838 = vst.msk [vmem:[%s3 + $0x1c] sm:$0xf] %vm830, %v801
  %839 = vst.msk [vmem:[%s3 + $0x20] sm:$0xf] %vm830, %v802
  %840 = vst.msk [vmem:[%s3 + $0x24] sm:$0xf] %vm830, %v803
  %841 = vst.msk [vmem:[%s3 + $0x28] sm:$0xf] %vm830, %v804
  %842 = vst.msk [vmem:[%s3 + $0x2c] sm:$0xf] %vm830, %v805
  %843 = vst.msk [vmem:[%s3 + $0x30] sm:$0xf] %vm830, %v806
  %844 = vst.msk [vmem:[%s3 + $0x34] sm:$0xf] %vm830, %v807
  %845 = vst.msk [vmem:[%s3 + $0x38] sm:$0xf] %vm830, %v808
  %846 = vst.msk [vmem:[%s3 + $0x3c] sm:$0xf] %vm830, %v809
  %847 = vst.msk [vmem:[%s3 + $0x40] sm:$0xf] %vm830, %v810
  %848 = vst.msk [vmem:[%s3 + $0x44] sm:$0xf] %vm830, %v811
  // Predicated region
  $region14: #{episodic_curiosity_forward.6} parent=0 // pred_check
    _
  $region15: #{episodic_curiosity_forward.6} parent=0 // pred_check_branch
    %850 = sbr.rel (0) target = $region17
  $region16: #{episodic_curiosity_forward.6} parent=0 // pred_region
    _
  $region17: #{episodic_curiosity_forward.6} parent=0 // pred_fallthru
    _
  // Predicated region
  $region18: #{episodic_curiosity_forward.6} parent=0 // pred_check
    _
  $region19: #{episodic_curiosity_forward.6} parent=0 // pred_check_branch
    %852 = sbr.rel (0) target = $region21
  $region20: #{episodic_curiosity_forward.6} parent=0 // pred_region
    _
  $region21: #{episodic_curiosity_forward.6} parent=0 // pred_fallthru
    _

// kernel: episodic_curiosity_forward.8
$region0: #{episodic_curiosity_forward.8}
  #allocation0 [shape = 'u32[]', space=smem, size = 0x4, offset = 0x4, fixed_abs, tag = 'smem constant byte address 0x4 - core index']
  #allocation1 [shape = 'u32[144,128]{1,0:T(1,128)}', space=vmem, size = 0x12000, scoped, tag = 'internal scratch']
  %s0 = inlined_call_operand.vmem [shape: bf16[16,64], index: 0, kind: input, shape index: {}]
  %s1 = inlined_call_operand.vmem [shape: bf16[64,512], index: 1, kind: input, shape index: {}]
  %s2 = inlined_call_operand.vmem [shape: f32[1,512], index: 2, kind: input, shape index: {}]
  %s3 = inlined_call_operand.vmem [shape: f32[16,512], index: 3, kind: output, shape index: {}]
  %s4 = sld [smem:[#allocation0]]
  $region22: #{episodic_curiosity_forward.8} parent=0
    _
  %s6 = ssub.s32 1, %s4
  %s7 = scalar_select 0, %s6, %s4
  // Predicated region
  $region2: #{episodic_curiosity_forward.8} parent=0 // pred_check
    _
  $region3: #{episodic_curiosity_forward.8} parent=0 // pred_check_branch
    %9 = sbr.rel (0) target = $region5
  $region4: #{episodic_curiosity_forward.8} parent=0 // pred_region
    _
  $region5: #{episodic_curiosity_forward.8} parent=0 // pred_fallthru
    _
  // Predicated region
  $region6: #{episodic_curiosity_forward.8} parent=0 // pred_check
    _
  $region7: #{episodic_curiosity_forward.8} parent=0 // pred_check_branch
    %11 = sbr.rel (0) target = $region9
  $region8: #{episodic_curiosity_forward.8} parent=0 // pred_region
    _
  $region9: #{episodic_curiosity_forward.8} parent=0 // pred_fallthru
    _
  // Predicated region
  $region10: #{episodic_curiosity_forward.8} parent=0 // pred_check
    _
  $region11: #{episodic_curiosity_forward.8} parent=0 // pred_check_branch
    %13 = sbr.rel (0) target = $region13
  $region12: #{episodic_curiosity_forward.8} parent=0 // pred_region
    _
  $region13: #{episodic_curiosity_forward.8} parent=0 // pred_fallthru
    _
  %v15 = vld [vmem:[%s0] sm:$0xf]
  %v16 = vld [vmem:[%s0 + $0x4] sm:$0xf]
  %v17 = vld [vmem:[%s1] sm:$0xff]
  %v18 = vld [vmem:[%s1 + $0x8] sm:$0xff]
  %v19 = vld [vmem:[%s1 + $0x10] sm:$0xff]
  %v20 = vld [vmem:[%s1 + $0x18] sm:$0xff]
  %v21 = vld [vmem:[%s1 + $0x20] sm:$0xff]
  %v22 = vld [vmem:[%s1 + $0x28] sm:$0xff]
  %v23 = vld [vmem:[%s1 + $0x30] sm:$0xff]
  %v24 = vld [vmem:[%s1 + $0x38] sm:$0xff]
  %v25 = vld [vmem:[%s1 + $0x40] sm:$0xff]
  %v26 = vld [vmem:[%s1 + $0x48] sm:$0xff]
  %v27 = vld [vmem:[%s1 + $0x50] sm:$0xff]
  %v28 = vld [vmem:[%s1 + $0x58] sm:$0xff]
  %v29 = vld [vmem:[%s1 + $0x60] sm:$0xff]
  %v30 = vld [vmem:[%s1 + $0x68] sm:$0xff]
  %v31 = vld [vmem:[%s1 + $0x70] sm:$0xff]
  %v32 = vld [vmem:[%s1 + $0x78] sm:$0xff]
  %v33 = vld [vmem:[%s2] sm:$0xf]
  %v35 = vlaneseq
  %v36 = vshrl.u32 %v35, 7
  %v37 = vsub.s32 0, %v36
  %v38 = vrot.slane %v33, %v37
  %v39 = vlaneseq
  %v40 = vshrl.u32 %v39, 7
  %v41 = vsub.s32 1, %v40
  %v42 = vrot.slane %v33, %v41
  %v43 = vlaneseq
  %v44 = vshrl.u32 %v43, 7
  %v45 = vsub.s32 2, %v44
  %v46 = vrot.slane %v33, %v45
  %v47 = vlaneseq
  %v48 = vshrl.u32 %v47, 7
  %v49 = vsub.s32 3, %v48
  %v50 = vrot.slane %v33, %v49
  %v57 = vunpack.c.l.b16 %v15
  %v58 = vunpack.c.l.b16 %v16
  %v59 = vpack.c.b16 %v58, %v57
  %v76 = vunpack.c.l.b16 %v17
  %v77 = vunpack.c.h.b16 %v17
  %v78 = vunpack.c.l.b16 %v18
  %v79 = vunpack.c.h.b16 %v18
  %v80 = vunpack.c.l.b16 %v19
  %v81 = vunpack.c.h.b16 %v19
  %v82 = vunpack.c.l.b16 %v20
  %v83 = vunpack.c.h.b16 %v20
  %v84 = vunpack.c.l.b16 %v21
  %v85 = vunpack.c.h.b16 %v21
  %v86 = vunpack.c.l.b16 %v22
  %v87 = vunpack.c.h.b16 %v22
  %v88 = vunpack.c.l.b16 %v23
  %v89 = vunpack.c.h.b16 %v23
  %v90 = vunpack.c.l.b16 %v24
  %v91 = vunpack.c.h.b16 %v24
  %v92 = vunpack.c.l.b16 %v25
  %v93 = vunpack.c.h.b16 %v25
  %v94 = vunpack.c.l.b16 %v26
  %v95 = vunpack.c.h.b16 %v26
  %v96 = vunpack.c.l.b16 %v27
  %v97 = vunpack.c.h.b16 %v27
  %v98 = vunpack.c.l.b16 %v28
  %v99 = vunpack.c.h.b16 %v28
  %v100 = vunpack.c.l.b16 %v29
  %v101 = vunpack.c.h.b16 %v29
  %v102 = vunpack.c.l.b16 %v30
  %v103 = vunpack.c.h.b16 %v30
  %v104 = vunpack.c.l.b16 %v31
  %v105 = vunpack.c.h.b16 %v31
  %v106 = vunpack.c.l.b16 %v32
  %v107 = vunpack.c.h.b16 %v32
  %v108 = vpack.c.b16 %v80, %v76
  %v109 = vpack.c.b16 %v81, %v77
  %v110 = vpack.c.b16 %v82, %v78
  %v111 = vpack.c.b16 %v83, %v79
  %v112 = vpack.c.b16 %v88, %v84
  %v113 = vpack.c.b16 %v89, %v85
  %v114 = vpack.c.b16 %v90, %v86
  %v115 = vpack.c.b16 %v91, %v87
  %v116 = vpack.c.b16 %v96, %v92
  %v117 = vpack.c.b16 %v97, %v93
  %v118 = vpack.c.b16 %v98, %v94
  %v119 = vpack.c.b16 %v99, %v95
  %v120 = vpack.c.b16 %v104, %v100
  %v121 = vpack.c.b16 %v105, %v101
  %v122 = vpack.c.b16 %v106, %v102
  %v123 = vpack.c.b16 %v107, %v103
  %vm140 = vcmask 523264
  %v142 = vsel %vm140, %v59, 0
  %144 = vmatprep.subr.bf16.mxu0 0
  %145 = vmatpush1.bf16.msra.mxu0 0
  %146 = vmatprep.subr.bf16.mxu0 0
  %147 = vmatpush1.bf16.msra.mxu0 0
  %148 = vmatprep.subr.bf16.mxu0 0
  %149 = vmatpush1.bf16.msra.mxu0 0
  %150 = vmatprep.subr.bf16.mxu0 0
  %151 = vmatpush1.bf16.msra.mxu0 0
  %152 = vmatprep.subr.bf16.mxu0 %v121
  %153 = vmatpush1.bf16.msra.mxu0 %v120
  %154 = vmatprep.subr.bf16.mxu0 %v117
  %155 = vmatpush1.bf16.msra.mxu0 %v116
  %156 = vmatprep.subr.bf16.mxu0 %v113
  %157 = vmatpush1.bf16.msra.mxu0 %v112
  %158 = vmatprep.subr.bf16.mxu0 %v109
  %159 = vmatpush1.bf16.msra.mxu0 %v108
  %160 = vmatprep.subr.bf16.mxu0 0
  %161 = vmatpush2.bf16.msra.mxu0 0
  %162 = vmatprep.subr.bf16.mxu0 0
  %163 = vmatpush2.bf16.msra.mxu0 0
  %164 = vmatprep.subr.bf16.mxu0 0
  %165 = vmatpush2.bf16.msra.mxu0 0
  %166 = vmatprep.subr.bf16.mxu0 0
  %167 = vmatpush2.bf16.msra.mxu0 0
  %168 = vmatprep.subr.bf16.mxu0 0
  %169 = vmatpush2.bf16.msra.mxu0 0
  %170 = vmatprep.subr.bf16.mxu0 0
  %171 = vmatpush2.bf16.msra.mxu0 0
  %172 = vmatprep.subr.bf16.mxu0 0
  %173 = vmatpush2.bf16.msra.mxu0 0
  %174 = vmatprep.subr.bf16.mxu0 0
  %175 = vmatpush2.bf16.msra.mxu0 0
  %176 = vmatprep.mubr.bf16.mxu0 0
  %177 = vmatmul.mubr.bf16.gmra.mxu0 %v142
  %v178 = vpop.f32.mrf.mxu0
  %v179 = vadd.f32 %v38, %v178
  %v180 = vpop.f32.mrf.mxu0
  %v181 = vadd.f32 %v42, %v180
  %v182 = vpop.f32.mrf.mxu0
  %v183 = vadd.f32 %v38, %v182
  %v184 = vpop.f32.mrf.mxu0
  %v185 = vadd.f32 %v42, %v184
  %186 = vdwg.mxu0
  %187 = vmatprep.subr.bf16.mxu0 0
  %188 = vmatpush1.bf16.msra.mxu0 0
  %189 = vmatprep.subr.bf16.mxu0 0
  %190 = vmatpush1.bf16.msra.mxu0 0
  %191 = vmatprep.subr.bf16.mxu0 0
  %192 = vmatpush1.bf16.msra.mxu0 0
  %193 = vmatprep.subr.bf16.mxu0 0
  %194 = vmatpush1.bf16.msra.mxu0 0
  %195 = vmatprep.subr.bf16.mxu0 %v123
  %196 = vmatpush1.bf16.msra.mxu0 %v122
  %197 = vmatprep.subr.bf16.mxu0 %v119
  %198 = vmatpush1.bf16.msra.mxu0 %v118
  %199 = vmatprep.subr.bf16.mxu0 %v115
  %200 = vmatpush1.bf16.msra.mxu0 %v114
  %201 = vmatprep.subr.bf16.mxu0 %v111
  %202 = vmatpush1.bf16.msra.mxu0 %v110
  %203 = vmatprep.subr.bf16.mxu0 0
  %204 = vmatpush2.bf16.msra.mxu0 0
  %205 = vmatprep.subr.bf16.mxu0 0
  %206 = vmatpush2.bf16.msra.mxu0 0
  %207 = vmatprep.subr.bf16.mxu0 0
  %208 = vmatpush2.bf16.msra.mxu0 0
  %209 = vmatprep.subr.bf16.mxu0 0
  %210 = vmatpush2.bf16.msra.mxu0 0
  %211 = vmatprep.subr.bf16.mxu0 0
  %212 = vmatpush2.bf16.msra.mxu0 0
  %213 = vmatprep.subr.bf16.mxu0 0
  %214 = vmatpush2.bf16.msra.mxu0 0
  %215 = vmatprep.subr.bf16.mxu0 0
  %216 = vmatpush2.bf16.msra.mxu0 0
  %217 = vmatprep.subr.bf16.mxu0 0
  %218 = vmatpush2.bf16.msra.mxu0 0
  %219 = vmatprep.mubr.bf16.mxu0 0
  %220 = vmatmul.mubr.bf16.gmra.mxu0 %v142
  %v221 = vpop.f32.mrf.mxu0
  %v222 = vadd.f32 %v46, %v221
  %v223 = vpop.f32.mrf.mxu0
  %v224 = vadd.f32 %v50, %v223
  %v225 = vpop.f32.mrf.mxu0
  %v226 = vadd.f32 %v46, %v225
  %v227 = vpop.f32.mrf.mxu0
  %v228 = vadd.f32 %v50, %v227
  %229 = vdwg.mxu0
  %230 = vst [vmem:[%s3] sm:$0xff] %v179
  %231 = vst [vmem:[%s3 + $0x8] sm:$0xff] %v181
  %232 = vst [vmem:[%s3 + $0x10] sm:$0xff] %v222
  %233 = vst [vmem:[%s3 + $0x18] sm:$0xff] %v224
  %234 = vst [vmem:[%s3 + $0x20] sm:$0xff] %v183
  %235 = vst [vmem:[%s3 + $0x28] sm:$0xff] %v185
  %236 = vst [vmem:[%s3 + $0x30] sm:$0xff] %v226
  %237 = vst [vmem:[%s3 + $0x38] sm:$0xff] %v228
  // Predicated region
  $region14: #{episodic_curiosity_forward.8} parent=0 // pred_check
    _
  $region15: #{episodic_curiosity_forward.8} parent=0 // pred_check_branch
    %239 = sbr.rel (0) target = $region17
  $region16: #{episodic_curiosity_forward.8} parent=0 // pred_region
    _
  $region17: #{episodic_curiosity_forward.8} parent=0 // pred_fallthru
    _
  // Predicated region
  $region18: #{episodic_curiosity_forward.8} parent=0 // pred_check
    _
  $region19: #{episodic_curiosity_forward.8} parent=0 // pred_check_branch
    %241 = sbr.rel (0) target = $region21
  $region20: #{episodic_curiosity_forward.8} parent=0 // pred_region
    _
  $region21: #{episodic_curiosity_forward.8} parent=0 // pred_fallthru
    _

// kernel: episodic_curiosity_forward.7
$region0: #{episodic_curiosity_forward.7}
  #allocation0 [shape = 'u32[]', space=smem, size = 0x4, offset = 0x4, fixed_abs, tag = 'smem constant byte address 0x4 - core index']
  #allocation1 [shape = 'u32[144,128]{1,0:T(1,128)}', space=vmem, size = 0x12000, scoped, tag = 'internal scratch']
  %s0 = inlined_call_operand.vmem [shape: bf16[16,576], index: 0, kind: input, shape index: {}]
  %s1 = inlined_call_operand.vmem [shape: bf16[576,64], index: 1, kind: input, shape index: {}]
  %s2 = inlined_call_operand.vmem [shape: f32[1,64], index: 2, kind: input, shape index: {}]
  %s3 = inlined_call_operand.vmem [shape: bf16[16,64], index: 3, kind: output, shape index: {}]
  %s4 = sld [smem:[#allocation0]]
  $region22: #{episodic_curiosity_forward.7} parent=0
    _
  %s6 = ssub.s32 1, %s4
  %s7 = scalar_select 0, %s6, %s4
  // Predicated region
  $region2: #{episodic_curiosity_forward.7} parent=0 // pred_check
    _
  $region3: #{episodic_curiosity_forward.7} parent=0 // pred_check_branch
    %9 = sbr.rel (0) target = $region5
  $region4: #{episodic_curiosity_forward.7} parent=0 // pred_region
    _
  $region5: #{episodic_curiosity_forward.7} parent=0 // pred_fallthru
    _
  // Predicated region
  $region6: #{episodic_curiosity_forward.7} parent=0 // pred_check
    _
  $region7: #{episodic_curiosity_forward.7} parent=0 // pred_check_branch
    %11 = sbr.rel (0) target = $region9
  $region8: #{episodic_curiosity_forward.7} parent=0 // pred_region
    _
  $region9: #{episodic_curiosity_forward.7} parent=0 // pred_fallthru
    _
  // Predicated region
  $region10: #{episodic_curiosity_forward.7} parent=0 // pred_check
    _
  $region11: #{episodic_curiosity_forward.7} parent=0 // pred_check_branch
    %13 = sbr.rel (0) target = $region13
  $region12: #{episodic_curiosity_forward.7} parent=0 // pred_region
    _
  $region13: #{episodic_curiosity_forward.7} parent=0 // pred_fallthru
    _
  %v15 = vld [vmem:[%s0] sm:$0xff]
  %v16 = vld [vmem:[%s0 + $0x8] sm:$0xff]
  %v17 = vld [vmem:[%s0 + $0x10] sm:$0xf]
  %v18 = vld [vmem:[%s0 + $0x14] sm:$0xff]
  %v19 = vld [vmem:[%s0 + $0x1c] sm:$0xff]
  %v20 = vld [vmem:[%s0 + $0x24] sm:$0xf]
  %v21 = vld [vmem:[%s1] sm:$0xf]
  %v22 = vld [vmem:[%s1 + $0x4] sm:$0xf]
  %v23 = vld [vmem:[%s1 + $0x8] sm:$0xf]
  %v24 = vld [vmem:[%s1 + $0xc] sm:$0xf]
  %v25 = vld [vmem:[%s1 + $0x10] sm:$0xf]
  %v26 = vld [vmem:[%s1 + $0x14] sm:$0xf]
  %v27 = vld [vmem:[%s1 + $0x18] sm:$0xf]
  %v28 = vld [vmem:[%s1 + $0x1c] sm:$0xf]
  %v29 = vld [vmem:[%s1 + $0x20] sm:$0xf]
  %v30 = vld [vmem:[%s1 + $0x24] sm:$0xf]
  %v31 = vld [vmem:[%s1 + $0x28] sm:$0xf]
  %v32 = vld [vmem:[%s1 + $0x2c] sm:$0xf]
  %v33 = vld [vmem:[%s1 + $0x30] sm:$0xf]
  %v34 = vld [vmem:[%s1 + $0x34] sm:$0xf]
  %v35 = vld [vmem:[%s1 + $0x38] sm:$0xf]
  %v36 = vld [vmem:[%s1 + $0x3c] sm:$0xf]
  %v37 = vld [vmem:[%s1 + $0x40] sm:$0xf]
  %v38 = vld [vmem:[%s1 + $0x44] sm:$0xf]
  %v39 = vld [vmem:[%s1 + $0x48] sm:$0xf]
  %v40 = vld [vmem:[%s1 + $0x4c] sm:$0xf]
  %v41 = vld [vmem:[%s1 + $0x50] sm:$0xf]
  %v42 = vld [vmem:[%s1 + $0x54] sm:$0xf]
  %v43 = vld [vmem:[%s1 + $0x58] sm:$0xf]
  %v44 = vld [vmem:[%s1 + $0x5c] sm:$0xf]
  %v45 = vld [vmem:[%s1 + $0x60] sm:$0xf]
  %v46 = vld [vmem:[%s1 + $0x64] sm:$0xf]
  %v47 = vld [vmem:[%s1 + $0x68] sm:$0xf]
  %v48 = vld [vmem:[%s1 + $0x6c] sm:$0xf]
  %v49 = vld [vmem:[%s1 + $0x70] sm:$0xf]
  %v50 = vld [vmem:[%s1 + $0x74] sm:$0xf]
  %v51 = vld [vmem:[%s1 + $0x78] sm:$0xf]
  %v52 = vld [vmem:[%s1 + $0x7c] sm:$0xf]
  %v53 = vld [vmem:[%s1 + $0x80] sm:$0xf]
  %v54 = vld [vmem:[%s1 + $0x84] sm:$0xf]
  %v55 = vld [vmem:[%s1 + $0x88] sm:$0xf]
  %v56 = vld [vmem:[%s1 + $0x8c] sm:$0xf]
  %v57 = vld [vmem:[%s1 + $0x90] sm:$0xf]
  %v58 = vld [vmem:[%s1 + $0x94] sm:$0xf]
  %v59 = vld [vmem:[%s1 + $0x98] sm:$0xf]
  %v60 = vld [vmem:[%s1 + $0x9c] sm:$0xf]
  %v61 = vld [vmem:[%s1 + $0xa0] sm:$0xf]
  %v62 = vld [vmem:[%s1 + $0xa4] sm:$0xf]
  %v63 = vld [vmem:[%s1 + $0xa8] sm:$0xf]
  %v64 = vld [vmem:[%s1 + $0xac] sm:$0xf]
  %v65 = vld [vmem:[%s1 + $0xb0] sm:$0xf]
  %v66 = vld [vmem:[%s1 + $0xb4] sm:$0xf]
  %v67 = vld [vmem:[%s1 + $0xb8] sm:$0xf]
  %v68 = vld [vmem:[%s1 + $0xbc] sm:$0xf]
  %v69 = vld [vmem:[%s1 + $0xc0] sm:$0xf]
  %v70 = vld [vmem:[%s1 + $0xc4] sm:$0xf]
  %v71 = vld [vmem:[%s1 + $0xc8] sm:$0xf]
  %v72 = vld [vmem:[%s1 + $0xcc] sm:$0xf]
  %v73 = vld [vmem:[%s1 + $0xd0] sm:$0xf]
  %v74 = vld [vmem:[%s1 + $0xd4] sm:$0xf]
  %v75 = vld [vmem:[%s1 + $0xd8] sm:$0xf]
  %v76 = vld [vmem:[%s1 + $0xdc] sm:$0xf]
  %v77 = vld [vmem:[%s1 + $0xe0] sm:$0xf]
  %v78 = vld [vmem:[%s1 + $0xe4] sm:$0xf]
  %v79 = vld [vmem:[%s1 + $0xe8] sm:$0xf]
  %v80 = vld [vmem:[%s1 + $0xec] sm:$0xf]
  %v81 = vld [vmem:[%s1 + $0xf0] sm:$0xf]
  %v82 = vld [vmem:[%s1 + $0xf4] sm:$0xf]
  %v83 = vld [vmem:[%s1 + $0xf8] sm:$0xf]
  %v84 = vld [vmem:[%s1 + $0xfc] sm:$0xf]
  %v85 = vld [vmem:[%s1 + $0x100] sm:$0xf]
  %v86 = vld [vmem:[%s1 + $0x104] sm:$0xf]
  %v87 = vld [vmem:[%s1 + $0x108] sm:$0xf]
  %v88 = vld [vmem:[%s1 + $0x10c] sm:$0xf]
  %v89 = vld [vmem:[%s1 + $0x110] sm:$0xf]
  %v90 = vld [vmem:[%s1 + $0x114] sm:$0xf]
  %v91 = vld [vmem:[%s1 + $0x118] sm:$0xf]
  %v92 = vld [vmem:[%s1 + $0x11c] sm:$0xf]
  %v93 = vld [vmem:[%s2] sm:$0x1]
  %v95 = vlaneseq
  %v96 = vshrl.u32 %v95, 7
  %v97 = vsub.s32 0, %v96
  %v98 = vrot.slane %v93, %v97
  %v106 = vunpack.c.l.b16 %v15
  %v107 = vunpack.c.h.b16 %v15
  %v108 = vunpack.c.l.b16 %v16
  %v109 = vunpack.c.h.b16 %v16
  %v110 = vunpack.c.l.b16 %v17
  %v111 = vunpack.c.l.b16 %v18
  %v112 = vunpack.c.h.b16 %v18
  %v113 = vunpack.c.l.b16 %v19
  %v114 = vunpack.c.h.b16 %v19
  %v115 = vunpack.c.l.b16 %v20
  %v116 = vpack.c.b16 %v111, %v106
  %v117 = vpack.c.b16 %v112, %v107
  %v118 = vpack.c.b16 %v113, %v108
  %v119 = vpack.c.b16 %v114, %v109
  %v120 = vpack.c.b16 %v115, %v110
  %v197 = vunpack.c.l.b16 %v21
  %v198 = vunpack.c.l.b16 %v22
  %v199 = vunpack.c.l.b16 %v23
  %v200 = vunpack.c.l.b16 %v24
  %v201 = vunpack.c.l.b16 %v25
  %v202 = vunpack.c.l.b16 %v26
  %v203 = vunpack.c.l.b16 %v27
  %v204 = vunpack.c.l.b16 %v28
  %v205 = vunpack.c.l.b16 %v29
  %v206 = vunpack.c.l.b16 %v30
  %v207 = vunpack.c.l.b16 %v31
  %v208 = vunpack.c.l.b16 %v32
  %v209 = vunpack.c.l.b16 %v33
  %v210 = vunpack.c.l.b16 %v34
  %v211 = vunpack.c.l.b16 %v35
  %v212 = vunpack.c.l.b16 %v36
  %v213 = vunpack.c.l.b16 %v37
  %v214 = vunpack.c.l.b16 %v38
  %v215 = vunpack.c.l.b16 %v39
  %v216 = vunpack.c.l.b16 %v40
  %v217 = vunpack.c.l.b16 %v41
  %v218 = vunpack.c.l.b16 %v42
  %v219 = vunpack.c.l.b16 %v43
  %v220 = vunpack.c.l.b16 %v44
  %v221 = vunpack.c.l.b16 %v45
  %v222 = vunpack.c.l.b16 %v46
  %v223 = vunpack.c.l.b16 %v47
  %v224 = vunpack.c.l.b16 %v48
  %v225 = vunpack.c.l.b16 %v49
  %v226 = vunpack.c.l.b16 %v50
  %v227 = vunpack.c.l.b16 %v51
  %v228 = vunpack.c.l.b16 %v52
  %v229 = vunpack.c.l.b16 %v53
  %v230 = vunpack.c.l.b16 %v54
  %v231 = vunpack.c.l.b16 %v55
  %v232 = vunpack.c.l.b16 %v56
  %v233 = vunpack.c.l.b16 %v57
  %v234 = vunpack.c.l.b16 %v58
  %v235 = vunpack.c.l.b16 %v59
  %v236 = vunpack.c.l.b16 %v60
  %v237 = vunpack.c.l.b16 %v61
  %v238 = vunpack.c.l.b16 %v62
  %v239 = vunpack.c.l.b16 %v63
  %v240 = vunpack.c.l.b16 %v64
  %v241 = vunpack.c.l.b16 %v65
  %v242 = vunpack.c.l.b16 %v66
  %v243 = vunpack.c.l.b16 %v67
  %v244 = vunpack.c.l.b16 %v68
  %v245 = vunpack.c.l.b16 %v69
  %v246 = vunpack.c.l.b16 %v70
  %v247 = vunpack.c.l.b16 %v71
  %v248 = vunpack.c.l.b16 %v72
  %v249 = vunpack.c.l.b16 %v73
  %v250 = vunpack.c.l.b16 %v74
  %v251 = vunpack.c.l.b16 %v75
  %v252 = vunpack.c.l.b16 %v76
  %v253 = vunpack.c.l.b16 %v77
  %v254 = vunpack.c.l.b16 %v78
  %v255 = vunpack.c.l.b16 %v79
  %v256 = vunpack.c.l.b16 %v80
  %v257 = vunpack.c.l.b16 %v81
  %v258 = vunpack.c.l.b16 %v82
  %v259 = vunpack.c.l.b16 %v83
  %v260 = vunpack.c.l.b16 %v84
  %v261 = vunpack.c.l.b16 %v85
  %v262 = vunpack.c.l.b16 %v86
  %v263 = vunpack.c.l.b16 %v87
  %v264 = vunpack.c.l.b16 %v88
  %v265 = vunpack.c.l.b16 %v89
  %v266 = vunpack.c.l.b16 %v90
  %v267 = vunpack.c.l.b16 %v91
  %v268 = vunpack.c.l.b16 %v92
  %v269 = vpack.c.b16 %v198, %v197
  %v270 = vpack.c.b16 %v200, %v199
  %v271 = vpack.c.b16 %v202, %v201
  %v272 = vpack.c.b16 %v204, %v203
  %v273 = vpack.c.b16 %v206, %v205
  %v274 = vpack.c.b16 %v208, %v207
  %v275 = vpack.c.b16 %v210, %v209
  %v276 = vpack.c.b16 %v212, %v211
  %v277 = vpack.c.b16 %v214, %v213
  %v278 = vpack.c.b16 %v216, %v215
  %v279 = vpack.c.b16 %v218, %v217
  %v280 = vpack.c.b16 %v220, %v219
  %v281 = vpack.c.b16 %v222, %v221
  %v282 = vpack.c.b16 %v224, %v223
  %v283 = vpack.c.b16 %v226, %v225
  %v284 = vpack.c.b16 %v228, %v227
  %v285 = vpack.c.b16 %v230, %v229
  %v286 = vpack.c.b16 %v232, %v231
  %v287 = vpack.c.b16 %v234, %v233
  %v288 = vpack.c.b16 %v236, %v235
  %v289 = vpack.c.b16 %v238, %v237
  %v290 = vpack.c.b16 %v240, %v239
  %v291 = vpack.c.b16 %v242, %v241
  %v292 = vpack.c.b16 %v244, %v243
  %v293 = vpack.c.b16 %v246, %v245
  %v294 = vpack.c.b16 %v248, %v247
  %v295 = vpack.c.b16 %v250, %v249
  %v296 = vpack.c.b16 %v252, %v251
  %v297 = vpack.c.b16 %v254, %v253
  %v298 = vpack.c.b16 %v256, %v255
  %v299 = vpack.c.b16 %v258, %v257
  %v300 = vpack.c.b16 %v260, %v259
  %v301 = vpack.c.b16 %v262, %v261
  %v302 = vpack.c.b16 %v264, %v263
  %v303 = vpack.c.b16 %v266, %v265
  %v304 = vpack.c.b16 %v268, %v267
  %vm341 = vcmask 523264
  %v343 = vsel %vm341, %v120, 0
  %345 = vmatprep.subr.bf16.mxu0 0
  %346 = vmatpush1.bf16.msra.mxu0 %v276
  %347 = vmatprep.subr.bf16.mxu0 0
  %348 = vmatpush1.bf16.msra.mxu0 %v275
  %349 = vmatprep.subr.bf16.mxu0 0
  %350 = vmatpush1.bf16.msra.mxu0 %v274
  %351 = vmatprep.subr.bf16.mxu0 0
  %352 = vmatpush1.bf16.msra.mxu0 %v273
  %353 = vmatprep.subr.bf16.mxu0 0
  %354 = vmatpush1.bf16.msra.mxu0 %v272
  %355 = vmatprep.subr.bf16.mxu0 0
  %356 = vmatpush1.bf16.msra.mxu0 %v271
  %357 = vmatprep.subr.bf16.mxu0 0
  %358 = vmatpush1.bf16.msra.mxu0 %v270
  %359 = vmatprep.subr.bf16.mxu0 0
  %360 = vmatpush1.bf16.msra.mxu0 %v269
  %361 = vmatprep.subr.bf16.mxu0 0
  %362 = vmatpush2.bf16.msra.mxu0 %v284
  %363 = vmatprep.subr.bf16.mxu0 0
  %364 = vmatpush2.bf16.msra.mxu0 %v283
  %365 = vmatprep.subr.bf16.mxu0 0
  %366 = vmatpush2.bf16.msra.mxu0 %v282
  %367 = vmatprep.subr.bf16.mxu0 0
  %368 = vmatpush2.bf16.msra.mxu0 %v281
  %369 = vmatprep.subr.bf16.mxu0 0
  %370 = vmatpush2.bf16.msra.mxu0 %v280
  %371 = vmatprep.subr.bf16.mxu0 0
  %372 = vmatpush2.bf16.msra.mxu0 %v279
  %373 = vmatprep.subr.bf16.mxu0 0
  %374 = vmatpush2.bf16.msra.mxu0 %v278
  %375 = vmatprep.subr.bf16.mxu0 0
  %376 = vmatpush2.bf16.msra.mxu0 %v277
  %377 = vmatprep.mubr.bf16.mxu0 %v117
  %378 = vmatmul.mubr.bf16.gmra.mxu0 %v116
  %v379 = vpop.f32.mrf.mxu0
  %v380 = vadd.f32 %v98, %v379
  %v381 = vpop.f32.mrf.mxu0
  %v382 = vpop.f32.mrf.mxu0
  %v383 = vadd.f32 %v98, %v382
  %v384 = vpop.f32.mrf.mxu0
  %385 = vdwg.mxu0
  %386 = vmatprep.subr.bf16.mxu0 0
  %387 = vmatpush1.bf16.msra.mxu0 %v292
  %388 = vmatprep.subr.bf16.mxu0 0
  %389 = vmatpush1.bf16.msra.mxu0 %v291
  %390 = vmatprep.subr.bf16.mxu0 0
  %391 = vmatpush1.bf16.msra.mxu0 %v290
  %392 = vmatprep.subr.bf16.mxu0 0
  %393 = vmatpush1.bf16.msra.mxu0 %v289
  %394 = vmatprep.subr.bf16.mxu0 0
  %395 = vmatpush1.bf16.msra.mxu0 %v288
  %396 = vmatprep.subr.bf16.mxu0 0
  %397 = vmatpush1.bf16.msra.mxu0 %v287
  %398 = vmatprep.subr.bf16.mxu0 0
  %399 = vmatpush1.bf16.msra.mxu0 %v286
  %400 = vmatprep.subr.bf16.mxu0 0
  %401 = vmatpush1.bf16.msra.mxu0 %v285
  %402 = vmatprep.subr.bf16.mxu0 0
  %403 = vmatpush2.bf16.msra.mxu0 %v300
  %404 = vmatprep.subr.bf16.mxu0 0
  %405 = vmatpush2.bf16.msra.mxu0 %v299
  %406 = vmatprep.subr.bf16.mxu0 0
  %407 = vmatpush2.bf16.msra.mxu0 %v298
  %408 = vmatprep.subr.bf16.mxu0 0
  %409 = vmatpush2.bf16.msra.mxu0 %v297
  %410 = vmatprep.subr.bf16.mxu0 0
  %411 = vmatpush2.bf16.msra.mxu0 %v296
  %412 = vmatprep.subr.bf16.mxu0 0
  %413 = vmatpush2.bf16.msra.mxu0 %v295
  %414 = vmatprep.subr.bf16.mxu0 0
  %415 = vmatpush2.bf16.msra.mxu0 %v294
  %416 = vmatprep.subr.bf16.mxu0 0
  %417 = vmatpush2.bf16.msra.mxu0 %v293
  %418 = vmatprep.mubr.bf16.mxu0 %v119
  %419 = vmatmul.mubr.bf16.gmra.mxu0 %v118
  %v420 = vpop.f32.mrf.mxu0
  %v421 = vadd.f32 %v380, %v420
  %v422 = vpop.f32.mrf.mxu0
  %v423 = vpop.f32.mrf.mxu0
  %v424 = vadd.f32 %v383, %v423
  %v425 = vpop.f32.mrf.mxu0
  %426 = vdwg.mxu0
  %427 = vmatprep.subr.bf16.mxu0 0
  %428 = vmatpush1.bf16.msra.mxu0 0
  %429 = vmatprep.subr.bf16.mxu0 0
  %430 = vmatpush1.bf16.msra.mxu0 0
  %431 = vmatprep.subr.bf16.mxu0 0
  %432 = vmatpush1.bf16.msra.mxu0 0
  %433 = vmatprep.subr.bf16.mxu0 0
  %434 = vmatpush1.bf16.msra.mxu0 0
  %435 = vmatprep.subr.bf16.mxu0 0
  %436 = vmatpush1.bf16.msra.mxu0 %v304
  %437 = vmatprep.subr.bf16.mxu0 0
  %438 = vmatpush1.bf16.msra.mxu0 %v303
  %439 = vmatprep.subr.bf16.mxu0 0
  %440 = vmatpush1.bf16.msra.mxu0 %v302
  %441 = vmatprep.subr.bf16.mxu0 0
  %442 = vmatpush1.bf16.msra.mxu0 %v301
  %443 = vmatprep.subr.bf16.mxu0 0
  %444 = vmatpush2.bf16.msra.mxu0 0
  %445 = vmatprep.subr.bf16.mxu0 0
  %446 = vmatpush2.bf16.msra.mxu0 0
  %447 = vmatprep.subr.bf16.mxu0 0
  %448 = vmatpush2.bf16.msra.mxu0 0
  %449 = vmatprep.subr.bf16.mxu0 0
  %450 = vmatpush2.bf16.msra.mxu0 0
  %451 = vmatprep.subr.bf16.mxu0 0
  %452 = vmatpush2.bf16.msra.mxu0 0
  %453 = vmatprep.subr.bf16.mxu0 0
  %454 = vmatpush2.bf16.msra.mxu0 0
  %455 = vmatprep.subr.bf16.mxu0 0
  %456 = vmatpush2.bf16.msra.mxu0 0
  %457 = vmatprep.subr.bf16.mxu0 0
  %458 = vmatpush2.bf16.msra.mxu0 0
  %459 = vmatprep.mubr.bf16.mxu0 0
  %460 = vmatmul.mubr.bf16.gmra.mxu0 %v343
  %v461 = vpop.f32.mrf.mxu0
  %v462 = vadd.f32 %v421, %v461
  %v463 = vpop.f32.mrf.mxu0
  %v464 = vpop.f32.mrf.mxu0
  %v465 = vadd.f32 %v424, %v464
  %v466 = vpop.f32.mrf.mxu0
  %467 = vdwg.mxu0
  %vm468 = vcmp.ge.f32.partialorder %v462, 0.0
  %vm469 = vcmp.ge.f32.partialorder %v465, 0.0
  %v470 = vmul.f32 %v462, 0.01
  %v471 = vmul.f32 %v465, 0.01
  %v472 = vsel %vm468, %v462, %v470
  %v473 = vsel %vm469, %v465, %v471
  %v474 = vpack.c.bf16 %v473, %v472
  %v476 = vunpack.c.l.b16 %v474
  %v477 = vunpack.c.h.b16 %v474
  %v478 = vpack.c.b16 %v476, %v476
  %v479 = vpack.c.b16 %v477, %v477
  %vm482 = vcmask 519168
  %483 = vst.msk [vmem:[%s3] sm:$0xf] %vm482, %v478
  %484 = vst.msk [vmem:[%s3 + $0x4] sm:$0xf] %vm482, %v479
  // Predicated region
  $region14: #{episodic_curiosity_forward.7} parent=0 // pred_check
    _
  $region15: #{episodic_curiosity_forward.7} parent=0 // pred_check_branch
    %486 = sbr.rel (0) target = $region17
  $region16: #{episodic_curiosity_forward.7} parent=0 // pred_region
    _
  $region17: #{episodic_curiosity_forward.7} parent=0 // pred_fallthru
    _
  // Predicated region
  $region18: #{episodic_curiosity_forward.7} parent=0 // pred_check
    _
  $region19: #{episodic_curiosity_forward.7} parent=0 // pred_check_branch
    %488 = sbr.rel (0) target = $region21
  $region20: #{episodic_curiosity_forward.7} parent=0 // pred_region
    _
  $region21: #{episodic_curiosity_forward.7} parent=0 // pred_fallthru
    _

// kernel: episodic_curiosity_forward.9
$region0: #{episodic_curiosity_forward.9}
  #allocation0 [shape = 'u32[]', space=smem, size = 0x4, offset = 0x4, fixed_abs, tag = 'smem constant byte address 0x4 - core index']
  #allocation1 [shape = 'u32[144,128]{1,0:T(1,128)}', space=vmem, size = 0x12000, scoped, tag = 'internal scratch']
  %s0 = inlined_call_operand.vmem [shape: f32[8,512], index: 0, kind: input, shape index: {}]
  %s1 = inlined_call_operand.vmem [shape: f32[8,512], index: 1, kind: input, shape index: {}]
  %s2 = inlined_call_operand.vmem [shape: bf16[512,512], index: 2, kind: input, shape index: {}]
  %s3 = inlined_call_operand.vmem [shape: bf16[512,512], index: 3, kind: input, shape index: {}]
  %s4 = inlined_call_operand.vmem [shape: f32[1,512], index: 4, kind: input, shape index: {}]
  %s5 = inlined_call_operand.vmem [shape: bf16[512,128], index: 5, kind: input, shape index: {}]
  %s6 = inlined_call_operand.vmem [shape: f32[1,128], index: 6, kind: input, shape index: {}]
  %s7 = inlined_call_operand.hbm [shape: f32[8,128], index: 7, kind: output, shape index: {}]
  %s8 = sld [smem:[#allocation0]]
  $region38: #{episodic_curiosity_forward.9} parent=0
    _
  %s10 = ssub.s32 1, %s8
  %s11 = scalar_select 0, %s10, %s8
  $region1: #{episodic_curiosity_forward.9} parent=0
    #allocation2 [shape = 'u8[4096]{0}', space=vmem, size = 0x1000, scoped, tag = 'output window, operand 0, single buffered']
    #allocation3 [shape = 's32[1]{0}', space=sflag, size = 0x4, scoped, tag = 'scoped memory for episodic_curiosity_forward.9']
    %12 = vsyncpa [#allocation3], 0
    // Predicated region
    $region2: #{episodic_curiosity_forward.9} parent=1 // pred_check
      _
    $region3: #{episodic_curiosity_forward.9} parent=1 // pred_check_branch
      %14 = sbr.rel (0) target = $region5
    $region4: #{episodic_curiosity_forward.9} parent=1 // pred_region
      _
    $region5: #{episodic_curiosity_forward.9} parent=1 // pred_fallthru
      _
    // Predicated region
    $region6: #{episodic_curiosity_forward.9} parent=1 // pred_check
      _
    $region7: #{episodic_curiosity_forward.9} parent=1 // pred_check_branch
      %16 = sbr.rel (0) target = $region9
    $region8: #{episodic_curiosity_forward.9} parent=1 // pred_region
      _
    $region9: #{episodic_curiosity_forward.9} parent=1 // pred_fallthru
      _
    // Predicated region
    $region10: #{episodic_curiosity_forward.9} parent=1 // pred_check
      _
    $region11: #{episodic_curiosity_forward.9} parent=1 // pred_check_branch
      %18 = sbr.rel (0) target = $region13
    $region12: #{episodic_curiosity_forward.9} parent=1 // pred_region
      _
    $region13: #{episodic_curiosity_forward.9} parent=1 // pred_fallthru
      _
    // Predicated region
    $region14: #{episodic_curiosity_forward.9} parent=1 // pred_check
      _
    $region15: #{episodic_curiosity_forward.9} parent=1 // pred_check_branch
      %20 = sbr.rel (0) target = $region17
    $region16: #{episodic_curiosity_forward.9} parent=1 // pred_region
      _
    $region17: #{episodic_curiosity_forward.9} parent=1 // pred_fallthru
      _
    // Predicated region
    $region18: #{episodic_curiosity_forward.9} parent=1 // pred_check
      _
    $region19: #{episodic_curiosity_forward.9} parent=1 // pred_check_branch
      %22 = sbr.rel (0) target = $region21
    $region20: #{episodic_curiosity_forward.9} parent=1 // pred_region
      _
    $region21: #{episodic_curiosity_forward.9} parent=1 // pred_fallthru
      _
    // Predicated region
    $region22: #{episodic_curiosity_forward.9} parent=1 // pred_check
      _
    $region23: #{episodic_curiosity_forward.9} parent=1 // pred_check_branch
      %24 = sbr.rel (0) target = $region25
    $region24: #{episodic_curiosity_forward.9} parent=1 // pred_region
      _
    $region25: #{episodic_curiosity_forward.9} parent=1 // pred_fallthru
      _
    // Predicated region
    $region26: #{episodic_curiosity_forward.9} parent=1 // pred_check
      _
    $region27: #{episodic_curiosity_forward.9} parent=1 // pred_check_branch
      %26 = sbr.rel (0) target = $region29
    $region28: #{episodic_curiosity_forward.9} parent=1 // pred_region
      _
    $region29: #{episodic_curiosity_forward.9} parent=1 // pred_fallthru
      _
    %v28 = vld [vmem:[%s0] sm:$0xff]
    %v29 = vld [vmem:[%s0 + $0x8] sm:$0xff]
    %v30 = vld [vmem:[%s0 + $0x10] sm:$0xff]
    %v31 = vld [vmem:[%s0 + $0x18] sm:$0xff]
    %v32 = vpack.c.bf16 %v28, %v28
    %v33 = vpack.c.bf16 %v29, %v29
    %v34 = vpack.c.bf16 %v30, %v30
    %v35 = vpack.c.bf16 %v31, %v31
    %v36 = vld [vmem:[%s2] sm:$0xff]
    %v37 = vld [vmem:[%s2 + $0x8] sm:$0xff]
    %v38 = vld [vmem:[%s2 + $0x10] sm:$0xff]
    %v39 = vld [vmem:[%s2 + $0x18] sm:$0xff]
    %v40 = vld [vmem:[%s2 + $0x20] sm:$0xff]
    %v41 = vld [vmem:[%s2 + $0x28] sm:$0xff]
    %v42 = vld [vmem:[%s2 + $0x30] sm:$0xff]
    %v43 = vld [vmem:[%s2 + $0x38] sm:$0xff]
    %v44 = vld [vmem:[%s2 + $0x40] sm:$0xff]
    %v45 = vld [vmem:[%s2 + $0x48] sm:$0xff]
    %v46 = vld [vmem:[%s2 + $0x50] sm:$0xff]
    %v47 = vld [vmem:[%s2 + $0x58] sm:$0xff]
    %v48 = vld [vmem:[%s2 + $0x60] sm:$0xff]
    %v49 = vld [vmem:[%s2 + $0x68] sm:$0xff]
    %v50 = vld [vmem:[%s2 + $0x70] sm:$0xff]
    %v51 = vld [vmem:[%s2 + $0x78] sm:$0xff]
    %v52 = vld [vmem:[%s2 + $0x80] sm:$0xff]
    %v53 = vld [vmem:[%s2 + $0x88] sm:$0xff]
    %v54 = vld [vmem:[%s2 + $0x90] sm:$0xff]
    %v55 = vld [vmem:[%s2 + $0x98] sm:$0xff]
    %v56 = vld [vmem:[%s2 + $0xa0] sm:$0xff]
    %v57 = vld [vmem:[%s2 + $0xa8] sm:$0xff]
    %v58 = vld [vmem:[%s2 + $0xb0] sm:$0xff]
    %v59 = vld [vmem:[%s2 + $0xb8] sm:$0xff]
    %v60 = vld [vmem:[%s2 + $0xc0] sm:$0xff]
    %v61 = vld [vmem:[%s2 + $0xc8] sm:$0xff]
    %v62 = vld [vmem:[%s2 + $0xd0] sm:$0xff]
    %v63 = vld [vmem:[%s2 + $0xd8] sm:$0xff]
    %v64 = vld [vmem:[%s2 + $0xe0] sm:$0xff]
    %v65 = vld [vmem:[%s2 + $0xe8] sm:$0xff]
    %v66 = vld [vmem:[%s2 + $0xf0] sm:$0xff]
    %v67 = vld [vmem:[%s2 + $0xf8] sm:$0xff]
    %v68 = vld [vmem:[%s2 + $0x100] sm:$0xff]
    %v69 = vld [vmem:[%s2 + $0x108] sm:$0xff]
    %v70 = vld [vmem:[%s2 + $0x110] sm:$0xff]
    %v71 = vld [vmem:[%s2 + $0x118] sm:$0xff]
    %v72 = vld [vmem:[%s2 + $0x120] sm:$0xff]
    %v73 = vld [vmem:[%s2 + $0x128] sm:$0xff]
    %v74 = vld [vmem:[%s2 + $0x130] sm:$0xff]
    %v75 = vld [vmem:[%s2 + $0x138] sm:$0xff]
    %v76 = vld [vmem:[%s2 + $0x140] sm:$0xff]
    %v77 = vld [vmem:[%s2 + $0x148] sm:$0xff]
    %v78 = vld [vmem:[%s2 + $0x150] sm:$0xff]
    %v79 = vld [vmem:[%s2 + $0x158] sm:$0xff]
    %v80 = vld [vmem:[%s2 + $0x160] sm:$0xff]
    %v81 = vld [vmem:[%s2 + $0x168] sm:$0xff]
    %v82 = vld [vmem:[%s2 + $0x170] sm:$0xff]
    %v83 = vld [vmem:[%s2 + $0x178] sm:$0xff]
    %v84 = vld [vmem:[%s2 + $0x180] sm:$0xff]
    %v85 = vld [vmem:[%s2 + $0x188] sm:$0xff]
    %v86 = vld [vmem:[%s2 + $0x190] sm:$0xff]
    %v87 = vld [vmem:[%s2 + $0x198] sm:$0xff]
    %v88 = vld [vmem:[%s2 + $0x1a0] sm:$0xff]
    %v89 = vld [vmem:[%s2 + $0x1a8] sm:$0xff]
    %v90 = vld [vmem:[%s2 + $0x1b0] sm:$0xff]
    %v91 = vld [vmem:[%s2 + $0x1b8] sm:$0xff]
    %v92 = vld [vmem:[%s2 + $0x1c0] sm:$0xff]
    %v93 = vld [vmem:[%s2 + $0x1c8] sm:$0xff]
    %v94 = vld [vmem:[%s2 + $0x1d0] sm:$0xff]
    %v95 = vld [vmem:[%s2 + $0x1d8] sm:$0xff]
    %v96 = vld [vmem:[%s2 + $0x1e0] sm:$0xff]
    %v97 = vld [vmem:[%s2 + $0x1e8] sm:$0xff]
    %v98 = vld [vmem:[%s2 + $0x1f0] sm:$0xff]
    %v99 = vld [vmem:[%s2 + $0x1f8] sm:$0xff]
    %v100 = vld [vmem:[%s2 + $0x200] sm:$0xff]
    %v101 = vld [vmem:[%s2 + $0x208] sm:$0xff]
    %v102 = vld [vmem:[%s2 + $0x210] sm:$0xff]
    %v103 = vld [vmem:[%s2 + $0x218] sm:$0xff]
    %v104 = vld [vmem:[%s2 + $0x220] sm:$0xff]
    %v105 = vld [vmem:[%s2 + $0x228] sm:$0xff]
    %v106 = vld [vmem:[%s2 + $0x230] sm:$0xff]
    %v107 = vld [vmem:[%s2 + $0x238] sm:$0xff]
    %v108 = vld [vmem:[%s2 + $0x240] sm:$0xff]
    %v109 = vld [vmem:[%s2 + $0x248] sm:$0xff]
    %v110 = vld [vmem:[%s2 + $0x250] sm:$0xff]
    %v111 = vld [vmem:[%s2 + $0x258] sm:$0xff]
    %v112 = vld [vmem:[%s2 + $0x260] sm:$0xff]
    %v113 = vld [vmem:[%s2 + $0x268] sm:$0xff]
    %v114 = vld [vmem:[%s2 + $0x270] sm:$0xff]
    %v115 = vld [vmem:[%s2 + $0x278] sm:$0xff]
    %v116 = vld [vmem:[%s2 + $0x280] sm:$0xff]
    %v117 = vld [vmem:[%s2 + $0x288] sm:$0xff]
    %v118 = vld [vmem:[%s2 + $0x290] sm:$0xff]
    %v119 = vld [vmem:[%s2 + $0x298] sm:$0xff]
    %v120 = vld [vmem:[%s2 + $0x2a0] sm:$0xff]
    %v121 = vld [vmem:[%s2 + $0x2a8] sm:$0xff]
    %v122 = vld [vmem:[%s2 + $0x2b0] sm:$0xff]
    %v123 = vld [vmem:[%s2 + $0x2b8] sm:$0xff]
    %v124 = vld [vmem:[%s2 + $0x2c0] sm:$0xff]
    %v125 = vld [vmem:[%s2 + $0x2c8] sm:$0xff]
    %v126 = vld [vmem:[%s2 + $0x2d0] sm:$0xff]
    %v127 = vld [vmem:[%s2 + $0x2d8] sm:$0xff]
    %v128 = vld [vmem:[%s2 + $0x2e0] sm:$0xff]
    %v129 = vld [vmem:[%s2 + $0x2e8] sm:$0xff]
    %v130 = vld [vmem:[%s2 + $0x2f0] sm:$0xff]
    %v131 = vld [vmem:[%s2 + $0x2f8] sm:$0xff]
    %v132 = vld [vmem:[%s2 + $0x300] sm:$0xff]
    %v133 = vld [vmem:[%s2 + $0x308] sm:$0xff]
    %v134 = vld [vmem:[%s2 + $0x310] sm:$0xff]
    %v135 = vld [vmem:[%s2 + $0x318] sm:$0xff]
    %v136 = vld [vmem:[%s2 + $0x320] sm:$0xff]
    %v137 = vld [vmem:[%s2 + $0x328] sm:$0xff]
    %v138 = vld [vmem:[%s2 + $0x330] sm:$0xff]
    %v139 = vld [vmem:[%s2 + $0x338] sm:$0xff]
    %v140 = vld [vmem:[%s2 + $0x340] sm:$0xff]
    %v141 = vld [vmem:[%s2 + $0x348] sm:$0xff]
    %v142 = vld [vmem:[%s2 + $0x350] sm:$0xff]
    %v143 = vld [vmem:[%s2 + $0x358] sm:$0xff]
    %v144 = vld [vmem:[%s2 + $0x360] sm:$0xff]
    %v145 = vld [vmem:[%s2 + $0x368] sm:$0xff]
    %v146 = vld [vmem:[%s2 + $0x370] sm:$0xff]
    %v147 = vld [vmem:[%s2 + $0x378] sm:$0xff]
    %v148 = vld [vmem:[%s2 + $0x380] sm:$0xff]
    %v149 = vld [vmem:[%s2 + $0x388] sm:$0xff]
    %v150 = vld [vmem:[%s2 + $0x390] sm:$0xff]
    %v151 = vld [vmem:[%s2 + $0x398] sm:$0xff]
    %v152 = vld [vmem:[%s2 + $0x3a0] sm:$0xff]
    %v153 = vld [vmem:[%s2 + $0x3a8] sm:$0xff]
    %v154 = vld [vmem:[%s2 + $0x3b0] sm:$0xff]
    %v155 = vld [vmem:[%s2 + $0x3b8] sm:$0xff]
    %v156 = vld [vmem:[%s2 + $0x3c0] sm:$0xff]
    %v157 = vld [vmem:[%s2 + $0x3c8] sm:$0xff]
    %v158 = vld [vmem:[%s2 + $0x3d0] sm:$0xff]
    %v159 = vld [vmem:[%s2 + $0x3d8] sm:$0xff]
    %v160 = vld [vmem:[%s2 + $0x3e0] sm:$0xff]
    %v161 = vld [vmem:[%s2 + $0x3e8] sm:$0xff]
    %v162 = vld [vmem:[%s2 + $0x3f0] sm:$0xff]
    %v163 = vld [vmem:[%s2 + $0x3f8] sm:$0xff]
    %v164 = vld [vmem:[%s1] sm:$0xff]
    %v165 = vld [vmem:[%s1 + $0x8] sm:$0xff]
    %v166 = vld [vmem:[%s1 + $0x10] sm:$0xff]
    %v167 = vld [vmem:[%s1 + $0x18] sm:$0xff]
    %v168 = vpack.c.bf16 %v164, %v164
    %v169 = vpack.c.bf16 %v165, %v165
    %v170 = vpack.c.bf16 %v166, %v166
    %v171 = vpack.c.bf16 %v167, %v167
    %v172 = vld [vmem:[%s3] sm:$0xff]
    %v173 = vld [vmem:[%s3 + $0x8] sm:$0xff]
    %v174 = vld [vmem:[%s3 + $0x10] sm:$0xff]
    %v175 = vld [vmem:[%s3 + $0x18] sm:$0xff]
    %v176 = vld [vmem:[%s3 + $0x20] sm:$0xff]
    %v177 = vld [vmem:[%s3 + $0x28] sm:$0xff]
    %v178 = vld [vmem:[%s3 + $0x30] sm:$0xff]
    %v179 = vld [vmem:[%s3 + $0x38] sm:$0xff]
    %v180 = vld [vmem:[%s3 + $0x40] sm:$0xff]
    %v181 = vld [vmem:[%s3 + $0x48] sm:$0xff]
    %v182 = vld [vmem:[%s3 + $0x50] sm:$0xff]
    %v183 = vld [vmem:[%s3 + $0x58] sm:$0xff]
    %v184 = vld [vmem:[%s3 + $0x60] sm:$0xff]
    %v185 = vld [vmem:[%s3 + $0x68] sm:$0xff]
    %v186 = vld [vmem:[%s3 + $0x70] sm:$0xff]
    %v187 = vld [vmem:[%s3 + $0x78] sm:$0xff]
    %v188 = vld [vmem:[%s3 + $0x80] sm:$0xff]
    %v189 = vld [vmem:[%s3 + $0x88] sm:$0xff]
    %v190 = vld [vmem:[%s3 + $0x90] sm:$0xff]
    %v191 = vld [vmem:[%s3 + $0x98] sm:$0xff]
    %v192 = vld [vmem:[%s3 + $0xa0] sm:$0xff]
    %v193 = vld [vmem:[%s3 + $0xa8] sm:$0xff]
    %v194 = vld [vmem:[%s3 + $0xb0] sm:$0xff]
    %v195 = vld [vmem:[%s3 + $0xb8] sm:$0xff]
    %v196 = vld [vmem:[%s3 + $0xc0] sm:$0xff]
    %v197 = vld [vmem:[%s3 + $0xc8] sm:$0xff]
    %v198 = vld [vmem:[%s3 + $0xd0] sm:$0xff]
    %v199 = vld [vmem:[%s3 + $0xd8] sm:$0xff]
    %v200 = vld [vmem:[%s3 + $0xe0] sm:$0xff]
    %v201 = vld [vmem:[%s3 + $0xe8] sm:$0xff]
    %v202 = vld [vmem:[%s3 + $0xf0] sm:$0xff]
    %v203 = vld [vmem:[%s3 + $0xf8] sm:$0xff]
    %v204 = vld [vmem:[%s3 + $0x100] sm:$0xff]
    %v205 = vld [vmem:[%s3 + $0x108] sm:$0xff]
    %v206 = vld [vmem:[%s3 + $0x110] sm:$0xff]
    %v207 = vld [vmem:[%s3 + $0x118] sm:$0xff]
    %v208 = vld [vmem:[%s3 + $0x120] sm:$0xff]
    %v209 = vld [vmem:[%s3 + $0x128] sm:$0xff]
    %v210 = vld [vmem:[%s3 + $0x130] sm:$0xff]
    %v211 = vld [vmem:[%s3 + $0x138] sm:$0xff]
    %v212 = vld [vmem:[%s3 + $0x140] sm:$0xff]
    %v213 = vld [vmem:[%s3 + $0x148] sm:$0xff]
    %v214 = vld [vmem:[%s3 + $0x150] sm:$0xff]
    %v215 = vld [vmem:[%s3 + $0x158] sm:$0xff]
    %v216 = vld [vmem:[%s3 + $0x160] sm:$0xff]
    %v217 = vld [vmem:[%s3 + $0x168] sm:$0xff]
    %v218 = vld [vmem:[%s3 + $0x170] sm:$0xff]
    %v219 = vld [vmem:[%s3 + $0x178] sm:$0xff]
    %v220 = vld [vmem:[%s3 + $0x180] sm:$0xff]
    %v221 = vld [vmem:[%s3 + $0x188] sm:$0xff]
    %v222 = vld [vmem:[%s3 + $0x190] sm:$0xff]
    %v223 = vld [vmem:[%s3 + $0x198] sm:$0xff]
    %v224 = vld [vmem:[%s3 + $0x1a0] sm:$0xff]
    %v225 = vld [vmem:[%s3 + $0x1a8] sm:$0xff]
    %v226 = vld [vmem:[%s3 + $0x1b0] sm:$0xff]
    %v227 = vld [vmem:[%s3 + $0x1b8] sm:$0xff]
    %v228 = vld [vmem:[%s3 + $0x1c0] sm:$0xff]
    %v229 = vld [vmem:[%s3 + $0x1c8] sm:$0xff]
    %v230 = vld [vmem:[%s3 + $0x1d0] sm:$0xff]
    %v231 = vld [vmem:[%s3 + $0x1d8] sm:$0xff]
    %v232 = vld [vmem:[%s3 + $0x1e0] sm:$0xff]
    %v233 = vld [vmem:[%s3 + $0x1e8] sm:$0xff]
    %v234 = vld [vmem:[%s3 + $0x1f0] sm:$0xff]
    %v235 = vld [vmem:[%s3 + $0x1f8] sm:$0xff]
    %v236 = vld [vmem:[%s3 + $0x200] sm:$0xff]
    %v237 = vld [vmem:[%s3 + $0x208] sm:$0xff]
    %v238 = vld [vmem:[%s3 + $0x210] sm:$0xff]
    %v239 = vld [vmem:[%s3 + $0x218] sm:$0xff]
    %v240 = vld [vmem:[%s3 + $0x220] sm:$0xff]
    %v241 = vld [vmem:[%s3 + $0x228] sm:$0xff]
    %v242 = vld [vmem:[%s3 + $0x230] sm:$0xff]
    %v243 = vld [vmem:[%s3 + $0x238] sm:$0xff]
    %v244 = vld [vmem:[%s3 + $0x240] sm:$0xff]
    %v245 = vld [vmem:[%s3 + $0x248] sm:$0xff]
    %v246 = vld [vmem:[%s3 + $0x250] sm:$0xff]
    %v247 = vld [vmem:[%s3 + $0x258] sm:$0xff]
    %v248 = vld [vmem:[%s3 + $0x260] sm:$0xff]
    %v249 = vld [vmem:[%s3 + $0x268] sm:$0xff]
    %v250 = vld [vmem:[%s3 + $0x270] sm:$0xff]
    %v251 = vld [vmem:[%s3 + $0x278] sm:$0xff]
    %v252 = vld [vmem:[%s3 + $0x280] sm:$0xff]
    %v253 = vld [vmem:[%s3 + $0x288] sm:$0xff]
    %v254 = vld [vmem:[%s3 + $0x290] sm:$0xff]
    %v255 = vld [vmem:[%s3 + $0x298] sm:$0xff]
    %v256 = vld [vmem:[%s3 + $0x2a0] sm:$0xff]
    %v257 = vld [vmem:[%s3 + $0x2a8] sm:$0xff]
    %v258 = vld [vmem:[%s3 + $0x2b0] sm:$0xff]
    %v259 = vld [vmem:[%s3 + $0x2b8] sm:$0xff]
    %v260 = vld [vmem:[%s3 + $0x2c0] sm:$0xff]
    %v261 = vld [vmem:[%s3 + $0x2c8] sm:$0xff]
    %v262 = vld [vmem:[%s3 + $0x2d0] sm:$0xff]
    %v263 = vld [vmem:[%s3 + $0x2d8] sm:$0xff]
    %v264 = vld [vmem:[%s3 + $0x2e0] sm:$0xff]
    %v265 = vld [vmem:[%s3 + $0x2e8] sm:$0xff]
    %v266 = vld [vmem:[%s3 + $0x2f0] sm:$0xff]
    %v267 = vld [vmem:[%s3 + $0x2f8] sm:$0xff]
    %v268 = vld [vmem:[%s3 + $0x300] sm:$0xff]
    %v269 = vld [vmem:[%s3 + $0x308] sm:$0xff]
    %v270 = vld [vmem:[%s3 + $0x310] sm:$0xff]
    %v271 = vld [vmem:[%s3 + $0x318] sm:$0xff]
    %v272 = vld [vmem:[%s3 + $0x320] sm:$0xff]
    %v273 = vld [vmem:[%s3 + $0x328] sm:$0xff]
    %v274 = vld [vmem:[%s3 + $0x330] sm:$0xff]
    %v275 = vld [vmem:[%s3 + $0x338] sm:$0xff]
    %v276 = vld [vmem:[%s3 + $0x340] sm:$0xff]
    %v277 = vld [vmem:[%s3 + $0x348] sm:$0xff]
    %v278 = vld [vmem:[%s3 + $0x350] sm:$0xff]
    %v279 = vld [vmem:[%s3 + $0x358] sm:$0xff]
    %v280 = vld [vmem:[%s3 + $0x360] sm:$0xff]
    %v281 = vld [vmem:[%s3 + $0x368] sm:$0xff]
    %v282 = vld [vmem:[%s3 + $0x370] sm:$0xff]
    %v283 = vld [vmem:[%s3 + $0x378] sm:$0xff]
    %v284 = vld [vmem:[%s3 + $0x380] sm:$0xff]
    %v285 = vld [vmem:[%s3 + $0x388] sm:$0xff]
    %v286 = vld [vmem:[%s3 + $0x390] sm:$0xff]
    %v287 = vld [vmem:[%s3 + $0x398] sm:$0xff]
    %v288 = vld [vmem:[%s3 + $0x3a0] sm:$0xff]
    %v289 = vld [vmem:[%s3 + $0x3a8] sm:$0xff]
    %v290 = vld [vmem:[%s3 + $0x3b0] sm:$0xff]
    %v291 = vld [vmem:[%s3 + $0x3b8] sm:$0xff]
    %v292 = vld [vmem:[%s3 + $0x3c0] sm:$0xff]
    %v293 = vld [vmem:[%s3 + $0x3c8] sm:$0xff]
    %v294 = vld [vmem:[%s3 + $0x3d0] sm:$0xff]
    %v295 = vld [vmem:[%s3 + $0x3d8] sm:$0xff]
    %v296 = vld [vmem:[%s3 + $0x3e0] sm:$0xff]
    %v297 = vld [vmem:[%s3 + $0x3e8] sm:$0xff]
    %v298 = vld [vmem:[%s3 + $0x3f0] sm:$0xff]
    %v299 = vld [vmem:[%s3 + $0x3f8] sm:$0xff]
    %v428 = vunpack.c.l.b16 %v172
    %v429 = vunpack.c.h.b16 %v172
    %v430 = vunpack.c.l.b16 %v173
    %v431 = vunpack.c.h.b16 %v173
    %v432 = vunpack.c.l.b16 %v174
    %v433 = vunpack.c.h.b16 %v174
    %v434 = vunpack.c.l.b16 %v175
    %v435 = vunpack.c.h.b16 %v175
    %v436 = vunpack.c.l.b16 %v176
    %v437 = vunpack.c.h.b16 %v176
    %v438 = vunpack.c.l.b16 %v177
    %v439 = vunpack.c.h.b16 %v177
    %v440 = vunpack.c.l.b16 %v178
    %v441 = vunpack.c.h.b16 %v178
    %v442 = vunpack.c.l.b16 %v179
    %v443 = vunpack.c.h.b16 %v179
    %v444 = vunpack.c.l.b16 %v180
    %v445 = vunpack.c.h.b16 %v180
    %v446 = vunpack.c.l.b16 %v181
    %v447 = vunpack.c.h.b16 %v181
    %v448 = vunpack.c.l.b16 %v182
    %v449 = vunpack.c.h.b16 %v182
    %v450 = vunpack.c.l.b16 %v183
    %v451 = vunpack.c.h.b16 %v183
    %v452 = vunpack.c.l.b16 %v184
    %v453 = vunpack.c.h.b16 %v184
    %v454 = vunpack.c.l.b16 %v185
    %v455 = vunpack.c.h.b16 %v185
    %v456 = vunpack.c.l.b16 %v186
    %v457 = vunpack.c.h.b16 %v186
    %v458 = vunpack.c.l.b16 %v187
    %v459 = vunpack.c.h.b16 %v187
    %v460 = vunpack.c.l.b16 %v188
    %v461 = vunpack.c.h.b16 %v188
    %v462 = vunpack.c.l.b16 %v189
    %v463 = vunpack.c.h.b16 %v189
    %v464 = vunpack.c.l.b16 %v190
    %v465 = vunpack.c.h.b16 %v190
    %v466 = vunpack.c.l.b16 %v191
    %v467 = vunpack.c.h.b16 %v191
    %v468 = vunpack.c.l.b16 %v192
    %v469 = vunpack.c.h.b16 %v192
    %v470 = vunpack.c.l.b16 %v193
    %v471 = vunpack.c.h.b16 %v193
    %v472 = vunpack.c.l.b16 %v194
    %v473 = vunpack.c.h.b16 %v194
    %v474 = vunpack.c.l.b16 %v195
    %v475 = vunpack.c.h.b16 %v195
    %v476 = vunpack.c.l.b16 %v196
    %v477 = vunpack.c.h.b16 %v196
    %v478 = vunpack.c.l.b16 %v197
    %v479 = vunpack.c.h.b16 %v197
    %v480 = vunpack.c.l.b16 %v198
    %v481 = vunpack.c.h.b16 %v198
    %v482 = vunpack.c.l.b16 %v199
    %v483 = vunpack.c.h.b16 %v199
    %v484 = vunpack.c.l.b16 %v200
    %v485 = vunpack.c.h.b16 %v200
    %v486 = vunpack.c.l.b16 %v201
    %v487 = vunpack.c.h.b16 %v201
    %v488 = vunpack.c.l.b16 %v202
    %v489 = vunpack.c.h.b16 %v202
    %v490 = vunpack.c.l.b16 %v203
    %v491 = vunpack.c.h.b16 %v203
    %v492 = vunpack.c.l.b16 %v204
    %v493 = vunpack.c.h.b16 %v204
    %v494 = vunpack.c.l.b16 %v205
    %v495 = vunpack.c.h.b16 %v205
    %v496 = vunpack.c.l.b16 %v206
    %v497 = vunpack.c.h.b16 %v206
    %v498 = vunpack.c.l.b16 %v207
    %v499 = vunpack.c.h.b16 %v207
    %v500 = vunpack.c.l.b16 %v208
    %v501 = vunpack.c.h.b16 %v208
    %v502 = vunpack.c.l.b16 %v209
    %v503 = vunpack.c.h.b16 %v209
    %v504 = vunpack.c.l.b16 %v210
    %v505 = vunpack.c.h.b16 %v210
    %v506 = vunpack.c.l.b16 %v211
    %v507 = vunpack.c.h.b16 %v211
    %v508 = vunpack.c.l.b16 %v212
    %v509 = vunpack.c.h.b16 %v212
    %v510 = vunpack.c.l.b16 %v213
    %v511 = vunpack.c.h.b16 %v213
    %v512 = vunpack.c.l.b16 %v214
    %v513 = vunpack.c.h.b16 %v214
    %v514 = vunpack.c.l.b16 %v215
    %v515 = vunpack.c.h.b16 %v215
    %v516 = vunpack.c.l.b16 %v216
    %v517 = vunpack.c.h.b16 %v216
    %v518 = vunpack.c.l.b16 %v217
    %v519 = vunpack.c.h.b16 %v217
    %v520 = vunpack.c.l.b16 %v218
    %v521 = vunpack.c.h.b16 %v218
    %v522 = vunpack.c.l.b16 %v219
    %v523 = vunpack.c.h.b16 %v219
    %v524 = vunpack.c.l.b16 %v220
    %v525 = vunpack.c.h.b16 %v220
    %v526 = vunpack.c.l.b16 %v221
    %v527 = vunpack.c.h.b16 %v221
    %v528 = vunpack.c.l.b16 %v222
    %v529 = vunpack.c.h.b16 %v222
    %v530 = vunpack.c.l.b16 %v223
    %v531 = vunpack.c.h.b16 %v223
    %v532 = vunpack.c.l.b16 %v224
    %v533 = vunpack.c.h.b16 %v224
    %v534 = vunpack.c.l.b16 %v225
    %v535 = vunpack.c.h.b16 %v225
    %v536 = vunpack.c.l.b16 %v226
    %v537 = vunpack.c.h.b16 %v226
    %v538 = vunpack.c.l.b16 %v227
    %v539 = vunpack.c.h.b16 %v227
    %v540 = vunpack.c.l.b16 %v228
    %v541 = vunpack.c.h.b16 %v228
    %v542 = vunpack.c.l.b16 %v229
    %v543 = vunpack.c.h.b16 %v229
    %v544 = vunpack.c.l.b16 %v230
    %v545 = vunpack.c.h.b16 %v230
    %v546 = vunpack.c.l.b16 %v231
    %v547 = vunpack.c.h.b16 %v231
    %v548 = vunpack.c.l.b16 %v232
    %v549 = vunpack.c.h.b16 %v232
    %v550 = vunpack.c.l.b16 %v233
    %v551 = vunpack.c.h.b16 %v233
    %v552 = vunpack.c.l.b16 %v234
    %v553 = vunpack.c.h.b16 %v234
    %v554 = vunpack.c.l.b16 %v235
    %v555 = vunpack.c.h.b16 %v235
    %v556 = vunpack.c.l.b16 %v236
    %v557 = vunpack.c.h.b16 %v236
    %v558 = vunpack.c.l.b16 %v237
    %v559 = vunpack.c.h.b16 %v237
    %v560 = vunpack.c.l.b16 %v238
    %v561 = vunpack.c.h.b16 %v238
    %v562 = vunpack.c.l.b16 %v239
    %v563 = vunpack.c.h.b16 %v239
    %v564 = vunpack.c.l.b16 %v240
    %v565 = vunpack.c.h.b16 %v240
    %v566 = vunpack.c.l.b16 %v241
    %v567 = vunpack.c.h.b16 %v241
    %v568 = vunpack.c.l.b16 %v242
    %v569 = vunpack.c.h.b16 %v242
    %v570 = vunpack.c.l.b16 %v243
    %v571 = vunpack.c.h.b16 %v243
    %v572 = vunpack.c.l.b16 %v244
    %v573 = vunpack.c.h.b16 %v244
    %v574 = vunpack.c.l.b16 %v245
    %v575 = vunpack.c.h.b16 %v245
    %v576 = vunpack.c.l.b16 %v246
    %v577 = vunpack.c.h.b16 %v246
    %v578 = vunpack.c.l.b16 %v247
    %v579 = vunpack.c.h.b16 %v247
    %v580 = vunpack.c.l.b16 %v248
    %v581 = vunpack.c.h.b16 %v248
    %v582 = vunpack.c.l.b16 %v249
    %v583 = vunpack.c.h.b16 %v249
    %v584 = vunpack.c.l.b16 %v250
    %v585 = vunpack.c.h.b16 %v250
    %v586 = vunpack.c.l.b16 %v251
    %v587 = vunpack.c.h.b16 %v251
    %v588 = vunpack.c.l.b16 %v252
    %v589 = vunpack.c.h.b16 %v252
    %v590 = vunpack.c.l.b16 %v253
    %v591 = vunpack.c.h.b16 %v253
    %v592 = vunpack.c.l.b16 %v254
    %v593 = vunpack.c.h.b16 %v254
    %v594 = vunpack.c.l.b16 %v255
    %v595 = vunpack.c.h.b16 %v255
    %v596 = vunpack.c.l.b16 %v256
    %v597 = vunpack.c.h.b16 %v256
    %v598 = vunpack.c.l.b16 %v257
    %v599 = vunpack.c.h.b16 %v257
    %v600 = vunpack.c.l.b16 %v258
    %v601 = vunpack.c.h.b16 %v258
    %v602 = vunpack.c.l.b16 %v259
    %v603 = vunpack.c.h.b16 %v259
    %v604 = vunpack.c.l.b16 %v260
    %v605 = vunpack.c.h.b16 %v260
    %v606 = vunpack.c.l.b16 %v261
    %v607 = vunpack.c.h.b16 %v261
    %v608 = vunpack.c.l.b16 %v262
    %v609 = vunpack.c.h.b16 %v262
    %v610 = vunpack.c.l.b16 %v263
    %v611 = vunpack.c.h.b16 %v263
    %v612 = vunpack.c.l.b16 %v264
    %v613 = vunpack.c.h.b16 %v264
    %v614 = vunpack.c.l.b16 %v265
    %v615 = vunpack.c.h.b16 %v265
    %v616 = vunpack.c.l.b16 %v266
    %v617 = vunpack.c.h.b16 %v266
    %v618 = vunpack.c.l.b16 %v267
    %v619 = vunpack.c.h.b16 %v267
    %v620 = vunpack.c.l.b16 %v268
    %v621 = vunpack.c.h.b16 %v268
    %v622 = vunpack.c.l.b16 %v269
    %v623 = vunpack.c.h.b16 %v269
    %v624 = vunpack.c.l.b16 %v270
    %v625 = vunpack.c.h.b16 %v270
    %v626 = vunpack.c.l.b16 %v271
    %v627 = vunpack.c.h.b16 %v271
    %v628 = vunpack.c.l.b16 %v272
    %v629 = vunpack.c.h.b16 %v272
    %v630 = vunpack.c.l.b16 %v273
    %v631 = vunpack.c.h.b16 %v273
    %v632 = vunpack.c.l.b16 %v274
    %v633 = vunpack.c.h.b16 %v274
    %v634 = vunpack.c.l.b16 %v275
    %v635 = vunpack.c.h.b16 %v275
    %v636 = vunpack.c.l.b16 %v276
    %v637 = vunpack.c.h.b16 %v276
    %v638 = vunpack.c.l.b16 %v277
    %v639 = vunpack.c.h.b16 %v277
    %v640 = vunpack.c.l.b16 %v278
    %v641 = vunpack.c.h.b16 %v278
    %v642 = vunpack.c.l.b16 %v279
    %v643 = vunpack.c.h.b16 %v279
    %v644 = vunpack.c.l.b16 %v280
    %v645 = vunpack.c.h.b16 %v280
    %v646 = vunpack.c.l.b16 %v281
    %v647 = vunpack.c.h.b16 %v281
    %v648 = vunpack.c.l.b16 %v282
    %v649 = vunpack.c.h.b16 %v282
    %v650 = vunpack.c.l.b16 %v283
    %v651 = vunpack.c.h.b16 %v283
    %v652 = vunpack.c.l.b16 %v284
    %v653 = vunpack.c.h.b16 %v284
    %v654 = vunpack.c.l.b16 %v285
    %v655 = vunpack.c.h.b16 %v285
    %v656 = vunpack.c.l.b16 %v286
    %v657 = vunpack.c.h.b16 %v286
    %v658 = vunpack.c.l.b16 %v287
    %v659 = vunpack.c.h.b16 %v287
    %v660 = vunpack.c.l.b16 %v288
    %v661 = vunpack.c.h.b16 %v288
    %v662 = vunpack.c.l.b16 %v289
    %v663 = vunpack.c.h.b16 %v289
    %v664 = vunpack.c.l.b16 %v290
    %v665 = vunpack.c.h.b16 %v290
    %v666 = vunpack.c.l.b16 %v291
    %v667 = vunpack.c.h.b16 %v291
    %v668 = vunpack.c.l.b16 %v292
    %v669 = vunpack.c.h.b16 %v292
    %v670 = vunpack.c.l.b16 %v293
    %v671 = vunpack.c.h.b16 %v293
    %v672 = vunpack.c.l.b16 %v294
    %v673 = vunpack.c.h.b16 %v294
    %v674 = vunpack.c.l.b16 %v295
    %v675 = vunpack.c.h.b16 %v295
    %v676 = vunpack.c.l.b16 %v296
    %v677 = vunpack.c.h.b16 %v296
    %v678 = vunpack.c.l.b16 %v297
    %v679 = vunpack.c.h.b16 %v297
    %v680 = vunpack.c.l.b16 %v298
    %v681 = vunpack.c.h.b16 %v298
    %v682 = vunpack.c.l.b16 %v299
    %v683 = vunpack.c.h.b16 %v299
    %v684 = vpack.c.b16 %v432, %v428
    %v685 = vpack.c.b16 %v433, %v429
    %v686 = vpack.c.b16 %v434, %v430
    %v687 = vpack.c.b16 %v435, %v431
    %v688 = vpack.c.b16 %v440, %v436
    %v689 = vpack.c.b16 %v441, %v437
    %v690 = vpack.c.b16 %v442, %v438
    %v691 = vpack.c.b16 %v443, %v439
    %v692 = vpack.c.b16 %v448, %v444
    %v693 = vpack.c.b16 %v449, %v445
    %v694 = vpack.c.b16 %v450, %v446
    %v695 = vpack.c.b16 %v451, %v447
    %v696 = vpack.c.b16 %v456, %v452
    %v697 = vpack.c.b16 %v457, %v453
    %v698 = vpack.c.b16 %v458, %v454
    %v699 = vpack.c.b16 %v459, %v455
    %v700 = vpack.c.b16 %v464, %v460
    %v701 = vpack.c.b16 %v465, %v461
    %v702 = vpack.c.b16 %v466, %v462
    %v703 = vpack.c.b16 %v467, %v463
    %v704 = vpack.c.b16 %v472, %v468
    %v705 = vpack.c.b16 %v473, %v469
    %v706 = vpack.c.b16 %v474, %v470
    %v707 = vpack.c.b16 %v475, %v471
    %v708 = vpack.c.b16 %v480, %v476
    %v709 = vpack.c.b16 %v481, %v477
    %v710 = vpack.c.b16 %v482, %v478
    %v711 = vpack.c.b16 %v483, %v479
    %v712 = vpack.c.b16 %v488, %v484
    %v713 = vpack.c.b16 %v489, %v485
    %v714 = vpack.c.b16 %v490, %v486
    %v715 = vpack.c.b16 %v491, %v487
    %v716 = vpack.c.b16 %v496, %v492
    %v717 = vpack.c.b16 %v497, %v493
    %v718 = vpack.c.b16 %v498, %v494
    %v719 = vpack.c.b16 %v499, %v495
    %v720 = vpack.c.b16 %v504, %v500
    %v721 = vpack.c.b16 %v505, %v501
    %v722 = vpack.c.b16 %v506, %v502
    %v723 = vpack.c.b16 %v507, %v503
    %v724 = vpack.c.b16 %v512, %v508
    %v725 = vpack.c.b16 %v513, %v509
    %v726 = vpack.c.b16 %v514, %v510
    %v727 = vpack.c.b16 %v515, %v511
    %v728 = vpack.c.b16 %v520, %v516
    %v729 = vpack.c.b16 %v521, %v517
    %v730 = vpack.c.b16 %v522, %v518
    %v731 = vpack.c.b16 %v523, %v519
    %v732 = vpack.c.b16 %v528, %v524
    %v733 = vpack.c.b16 %v529, %v525
    %v734 = vpack.c.b16 %v530, %v526
    %v735 = vpack.c.b16 %v531, %v527
    %v736 = vpack.c.b16 %v536, %v532
    %v737 = vpack.c.b16 %v537, %v533
    %v738 = vpack.c.b16 %v538, %v534
    %v739 = vpack.c.b16 %v539, %v535
    %v740 = vpack.c.b16 %v544, %v540
    %v741 = vpack.c.b16 %v545, %v541
    %v742 = vpack.c.b16 %v546, %v542
    %v743 = vpack.c.b16 %v547, %v543
    %v744 = vpack.c.b16 %v552, %v548
    %v745 = vpack.c.b16 %v553, %v549
    %v746 = vpack.c.b16 %v554, %v550
    %v747 = vpack.c.b16 %v555, %v551
    %v748 = vpack.c.b16 %v560, %v556
    %v749 = vpack.c.b16 %v561, %v557
    %v750 = vpack.c.b16 %v562, %v558
    %v751 = vpack.c.b16 %v563, %v559
    %v752 = vpack.c.b16 %v568, %v564
    %v753 = vpack.c.b16 %v569, %v565
    %v754 = vpack.c.b16 %v570, %v566
    %v755 = vpack.c.b16 %v571, %v567
    %v756 = vpack.c.b16 %v576, %v572
    %v757 = vpack.c.b16 %v577, %v573
    %v758 = vpack.c.b16 %v578, %v574
    %v759 = vpack.c.b16 %v579, %v575
    %v760 = vpack.c.b16 %v584, %v580
    %v761 = vpack.c.b16 %v585, %v581
    %v762 = vpack.c.b16 %v586, %v582
    %v763 = vpack.c.b16 %v587, %v583
    %v764 = vpack.c.b16 %v592, %v588
    %v765 = vpack.c.b16 %v593, %v589
    %v766 = vpack.c.b16 %v594, %v590
    %v767 = vpack.c.b16 %v595, %v591
    %v768 = vpack.c.b16 %v600, %v596
    %v769 = vpack.c.b16 %v601, %v597
    %v770 = vpack.c.b16 %v602, %v598
    %v771 = vpack.c.b16 %v603, %v599
    %v772 = vpack.c.b16 %v608, %v604
    %v773 = vpack.c.b16 %v609, %v605
    %v774 = vpack.c.b16 %v610, %v606
    %v775 = vpack.c.b16 %v611, %v607
    %v776 = vpack.c.b16 %v616, %v612
    %v777 = vpack.c.b16 %v617, %v613
    %v778 = vpack.c.b16 %v618, %v614
    %v779 = vpack.c.b16 %v619, %v615
    %v780 = vpack.c.b16 %v624, %v620
    %v781 = vpack.c.b16 %v625, %v621
    %v782 = vpack.c.b16 %v626, %v622
    %v783 = vpack.c.b16 %v627, %v623
    %v784 = vpack.c.b16 %v632, %v628
    %v785 = vpack.c.b16 %v633, %v629
    %v786 = vpack.c.b16 %v634, %v630
    %v787 = vpack.c.b16 %v635, %v631
    %v788 = vpack.c.b16 %v640, %v636
    %v789 = vpack.c.b16 %v641, %v637
    %v790 = vpack.c.b16 %v642, %v638
    %v791 = vpack.c.b16 %v643, %v639
    %v792 = vpack.c.b16 %v648, %v644
    %v793 = vpack.c.b16 %v649, %v645
    %v794 = vpack.c.b16 %v650, %v646
    %v795 = vpack.c.b16 %v651, %v647
    %v796 = vpack.c.b16 %v656, %v652
    %v797 = vpack.c.b16 %v657, %v653
    %v798 = vpack.c.b16 %v658, %v654
    %v799 = vpack.c.b16 %v659, %v655
    %v800 = vpack.c.b16 %v664, %v660
    %v801 = vpack.c.b16 %v665, %v661
    %v802 = vpack.c.b16 %v666, %v662
    %v803 = vpack.c.b16 %v667, %v663
    %v804 = vpack.c.b16 %v672, %v668
    %v805 = vpack.c.b16 %v673, %v669
    %v806 = vpack.c.b16 %v674, %v670
    %v807 = vpack.c.b16 %v675, %v671
    %v808 = vpack.c.b16 %v680, %v676
    %v809 = vpack.c.b16 %v681, %v677
    %v810 = vpack.c.b16 %v682, %v678
    %v811 = vpack.c.b16 %v683, %v679
    %940 = vmatprep.subr.bf16.mxu0 %v713
    %941 = vmatpush1.bf16.msra.mxu0 %v712
    %942 = vmatprep.subr.bf16.mxu0 %v709
    %943 = vmatpush1.bf16.msra.mxu0 %v708
    %944 = vmatprep.subr.bf16.mxu0 %v705
    %945 = vmatpush1.bf16.msra.mxu0 %v704
    %946 = vmatprep.subr.bf16.mxu0 %v701
    %947 = vmatpush1.bf16.msra.mxu0 %v700
    %948 = vmatprep.subr.bf16.mxu0 %v697
    %949 = vmatpush1.bf16.msra.mxu0 %v696
    %950 = vmatprep.subr.bf16.mxu0 %v693
    %951 = vmatpush1.bf16.msra.mxu0 %v692
    %952 = vmatprep.subr.bf16.mxu0 %v689
    %953 = vmatpush1.bf16.msra.mxu0 %v688
    %954 = vmatprep.subr.bf16.mxu0 %v685
    %955 = vmatpush1.bf16.msra.mxu0 %v684
    %956 = vmatprep.subr.bf16.mxu0 %v745
    %957 = vmatpush2.bf16.msra.mxu0 %v744
    %958 = vmatprep.subr.bf16.mxu0 %v741
    %959 = vmatpush2.bf16.msra.mxu0 %v740
    %960 = vmatprep.subr.bf16.mxu0 %v737
    %961 = vmatpush2.bf16.msra.mxu0 %v736
    %962 = vmatprep.subr.bf16.mxu0 %v733
    %963 = vmatpush2.bf16.msra.mxu0 %v732
    %964 = vmatprep.subr.bf16.mxu0 %v729
    %965 = vmatpush2.bf16.msra.mxu0 %v728
    %966 = vmatprep.subr.bf16.mxu0 %v725
    %967 = vmatpush2.bf16.msra.mxu0 %v724
    %968 = vmatprep.subr.bf16.mxu0 %v721
    %969 = vmatpush2.bf16.msra.mxu0 %v720
    %970 = vmatprep.subr.bf16.mxu0 %v717
    %971 = vmatpush2.bf16.msra.mxu0 %v716
    %972 = vmatprep.mubr.bf16.mxu0 %v169
    %973 = vmatmul.mubr.bf16.gmra.mxu0 %v168
    %v974 = vpop.f32.mrf.mxu0
    %v975 = vadd.f32 0.0, %v974
    %v976 = vpop.f32.mrf.mxu0
    %v977 = vadd.f32 0.0, %v976
    %v978 = vpop.f32.mrf.mxu0
    %v979 = vpop.f32.mrf.mxu0
    %980 = vdwg.mxu0
    %981 = vmatprep.subr.bf16.mxu0 %v777
    %982 = vmatpush1.bf16.msra.mxu0 %v776
    %983 = vmatprep.subr.bf16.mxu0 %v773
    %984 = vmatpush1.bf16.msra.mxu0 %v772
    %985 = vmatprep.subr.bf16.mxu0 %v769
    %986 = vmatpush1.bf16.msra.mxu0 %v768
    %987 = vmatprep.subr.bf16.mxu0 %v765
    %988 = vmatpush1.bf16.msra.mxu0 %v764
    %989 = vmatprep.subr.bf16.mxu0 %v761
    %990 = vmatpush1.bf16.msra.mxu0 %v760
    %991 = vmatprep.subr.bf16.mxu0 %v757
    %992 = vmatpush1.bf16.msra.mxu0 %v756
    %993 = vmatprep.subr.bf16.mxu0 %v753
    %994 = vmatpush1.bf16.msra.mxu0 %v752
    %995 = vmatprep.subr.bf16.mxu0 %v749
    %996 = vmatpush1.bf16.msra.mxu0 %v748
    %997 = vmatprep.subr.bf16.mxu0 %v809
    %998 = vmatpush2.bf16.msra.mxu0 %v808
    %999 = vmatprep.subr.bf16.mxu0 %v805
    %1000 = vmatpush2.bf16.msra.mxu0 %v804
    %1001 = vmatprep.subr.bf16.mxu0 %v801
    %1002 = vmatpush2.bf16.msra.mxu0 %v800
    %1003 = vmatprep.subr.bf16.mxu0 %v797
    %1004 = vmatpush2.bf16.msra.mxu0 %v796
    %1005 = vmatprep.subr.bf16.mxu0 %v793
    %1006 = vmatpush2.bf16.msra.mxu0 %v792
    %1007 = vmatprep.subr.bf16.mxu0 %v789
    %1008 = vmatpush2.bf16.msra.mxu0 %v788
    %1009 = vmatprep.subr.bf16.mxu0 %v785
    %1010 = vmatpush2.bf16.msra.mxu0 %v784
    %1011 = vmatprep.subr.bf16.mxu0 %v781
    %1012 = vmatpush2.bf16.msra.mxu0 %v780
    %1013 = vmatprep.mubr.bf16.mxu0 %v171
    %1014 = vmatmul.mubr.bf16.gmra.mxu0 %v170
    %v1015 = vpop.f32.mrf.mxu0
    %v1016 = vadd.f32 %v975, %v1015
    %v1017 = vpop.f32.mrf.mxu0
    %v1018 = vadd.f32 %v977, %v1017
    %v1019 = vpop.f32.mrf.mxu0
    %v1020 = vpop.f32.mrf.mxu0
    %1021 = vdwg.mxu0
    %1022 = vmatprep.subr.bf16.mxu0 %v715
    %1023 = vmatpush1.bf16.msra.mxu0 %v714
    %1024 = vmatprep.subr.bf16.mxu0 %v711
    %1025 = vmatpush1.bf16.msra.mxu0 %v710
    %1026 = vmatprep.subr.bf16.mxu0 %v707
    %1027 = vmatpush1.bf16.msra.mxu0 %v706
    %1028 = vmatprep.subr.bf16.mxu0 %v703
    %1029 = vmatpush1.bf16.msra.mxu0 %v702
    %1030 = vmatprep.subr.bf16.mxu0 %v699
    %1031 = vmatpush1.bf16.msra.mxu0 %v698
    %1032 = vmatprep.subr.bf16.mxu0 %v695
    %1033 = vmatpush1.bf16.msra.mxu0 %v694
    %1034 = vmatprep.subr.bf16.mxu0 %v691
    %1035 = vmatpush1.bf16.msra.mxu0 %v690
    %1036 = vmatprep.subr.bf16.mxu0 %v687
    %1037 = vmatpush1.bf16.msra.mxu0 %v686
    %1038 = vmatprep.subr.bf16.mxu0 %v747
    %1039 = vmatpush2.bf16.msra.mxu0 %v746
    %1040 = vmatprep.subr.bf16.mxu0 %v743
    %1041 = vmatpush2.bf16.msra.mxu0 %v742
    %1042 = vmatprep.subr.bf16.mxu0 %v739
    %1043 = vmatpush2.bf16.msra.mxu0 %v738
    %1044 = vmatprep.subr.bf16.mxu0 %v735
    %1045 = vmatpush2.bf16.msra.mxu0 %v734
    %1046 = vmatprep.subr.bf16.mxu0 %v731
    %1047 = vmatpush2.bf16.msra.mxu0 %v730
    %1048 = vmatprep.subr.bf16.mxu0 %v727
    %1049 = vmatpush2.bf16.msra.mxu0 %v726
    %1050 = vmatprep.subr.bf16.mxu0 %v723
    %1051 = vmatpush2.bf16.msra.mxu0 %v722
    %1052 = vmatprep.subr.bf16.mxu0 %v719
    %1053 = vmatpush2.bf16.msra.mxu0 %v718
    %1054 = vmatprep.mubr.bf16.mxu0 %v169
    %1055 = vmatmul.mubr.bf16.gmra.mxu0 %v168
    %v1056 = vpop.f32.mrf.mxu0
    %v1057 = vadd.f32 0.0, %v1056
    %v1058 = vpop.f32.mrf.mxu0
    %v1059 = vadd.f32 0.0, %v1058
    %v1060 = vpop.f32.mrf.mxu0
    %v1061 = vpop.f32.mrf.mxu0
    %1062 = vdwg.mxu0
    %1063 = vmatprep.subr.bf16.mxu0 %v779
    %1064 = vmatpush1.bf16.msra.mxu0 %v778
    %1065 = vmatprep.subr.bf16.mxu0 %v775
    %1066 = vmatpush1.bf16.msra.mxu0 %v774
    %1067 = vmatprep.subr.bf16.mxu0 %v771
    %1068 = vmatpush1.bf16.msra.mxu0 %v770
    %1069 = vmatprep.subr.bf16.mxu0 %v767
    %1070 = vmatpush1.bf16.msra.mxu0 %v766
    %1071 = vmatprep.subr.bf16.mxu0 %v763
    %1072 = vmatpush1.bf16.msra.mxu0 %v762
    %1073 = vmatprep.subr.bf16.mxu0 %v759
    %1074 = vmatpush1.bf16.msra.mxu0 %v758
    %1075 = vmatprep.subr.bf16.mxu0 %v755
    %1076 = vmatpush1.bf16.msra.mxu0 %v754
    %1077 = vmatprep.subr.bf16.mxu0 %v751
    %1078 = vmatpush1.bf16.msra.mxu0 %v750
    %1079 = vmatprep.subr.bf16.mxu0 %v811
    %1080 = vmatpush2.bf16.msra.mxu0 %v810
    %1081 = vmatprep.subr.bf16.mxu0 %v807
    %1082 = vmatpush2.bf16.msra.mxu0 %v806
    %1083 = vmatprep.subr.bf16.mxu0 %v803
    %1084 = vmatpush2.bf16.msra.mxu0 %v802
    %1085 = vmatprep.subr.bf16.mxu0 %v799
    %1086 = vmatpush2.bf16.msra.mxu0 %v798
    %1087 = vmatprep.subr.bf16.mxu0 %v795
    %1088 = vmatpush2.bf16.msra.mxu0 %v794
    %1089 = vmatprep.subr.bf16.mxu0 %v791
    %1090 = vmatpush2.bf16.msra.mxu0 %v790
    %1091 = vmatprep.subr.bf16.mxu0 %v787
    %1092 = vmatpush2.bf16.msra.mxu0 %v786
    %1093 = vmatprep.subr.bf16.mxu0 %v783
    %1094 = vmatpush2.bf16.msra.mxu0 %v782
    %1095 = vmatprep.mubr.bf16.mxu0 %v171
    %1096 = vmatmul.mubr.bf16.gmra.mxu0 %v170
    %v1097 = vpop.f32.mrf.mxu0
    %v1098 = vadd.f32 %v1057, %v1097
    %v1099 = vpop.f32.mrf.mxu0
    %v1100 = vadd.f32 %v1059, %v1099
    %v1101 = vpop.f32.mrf.mxu0
    %v1102 = vpop.f32.mrf.mxu0
    %1103 = vdwg.mxu0
    %v1232 = vunpack.c.l.b16 %v36
    %v1233 = vunpack.c.h.b16 %v36
    %v1234 = vunpack.c.l.b16 %v37
    %v1235 = vunpack.c.h.b16 %v37
    %v1236 = vunpack.c.l.b16 %v38
    %v1237 = vunpack.c.h.b16 %v38
    %v1238 = vunpack.c.l.b16 %v39
    %v1239 = vunpack.c.h.b16 %v39
    %v1240 = vunpack.c.l.b16 %v40
    %v1241 = vunpack.c.h.b16 %v40
    %v1242 = vunpack.c.l.b16 %v41
    %v1243 = vunpack.c.h.b16 %v41
    %v1244 = vunpack.c.l.b16 %v42
    %v1245 = vunpack.c.h.b16 %v42
    %v1246 = vunpack.c.l.b16 %v43
    %v1247 = vunpack.c.h.b16 %v43
    %v1248 = vunpack.c.l.b16 %v44
    %v1249 = vunpack.c.h.b16 %v44
    %v1250 = vunpack.c.l.b16 %v45
    %v1251 = vunpack.c.h.b16 %v45
    %v1252 = vunpack.c.l.b16 %v46
    %v1253 = vunpack.c.h.b16 %v46
    %v1254 = vunpack.c.l.b16 %v47
    %v1255 = vunpack.c.h.b16 %v47
    %v1256 = vunpack.c.l.b16 %v48
    %v1257 = vunpack.c.h.b16 %v48
    %v1258 = vunpack.c.l.b16 %v49
    %v1259 = vunpack.c.h.b16 %v49
    %v1260 = vunpack.c.l.b16 %v50
    %v1261 = vunpack.c.h.b16 %v50
    %v1262 = vunpack.c.l.b16 %v51
    %v1263 = vunpack.c.h.b16 %v51
    %v1264 = vunpack.c.l.b16 %v52
    %v1265 = vunpack.c.h.b16 %v52
    %v1266 = vunpack.c.l.b16 %v53
    %v1267 = vunpack.c.h.b16 %v53
    %v1268 = vunpack.c.l.b16 %v54
    %v1269 = vunpack.c.h.b16 %v54
    %v1270 = vunpack.c.l.b16 %v55
    %v1271 = vunpack.c.h.b16 %v55
    %v1272 = vunpack.c.l.b16 %v56
    %v1273 = vunpack.c.h.b16 %v56
    %v1274 = vunpack.c.l.b16 %v57
    %v1275 = vunpack.c.h.b16 %v57
    %v1276 = vunpack.c.l.b16 %v58
    %v1277 = vunpack.c.h.b16 %v58
    %v1278 = vunpack.c.l.b16 %v59
    %v1279 = vunpack.c.h.b16 %v59
    %v1280 = vunpack.c.l.b16 %v60
    %v1281 = vunpack.c.h.b16 %v60
    %v1282 = vunpack.c.l.b16 %v61
    %v1283 = vunpack.c.h.b16 %v61
    %v1284 = vunpack.c.l.b16 %v62
    %v1285 = vunpack.c.h.b16 %v62
    %v1286 = vunpack.c.l.b16 %v63
    %v1287 = vunpack.c.h.b16 %v63
    %v1288 = vunpack.c.l.b16 %v64
    %v1289 = vunpack.c.h.b16 %v64
    %v1290 = vunpack.c.l.b16 %v65
    %v1291 = vunpack.c.h.b16 %v65
    %v1292 = vunpack.c.l.b16 %v66
    %v1293 = vunpack.c.h.b16 %v66
    %v1294 = vunpack.c.l.b16 %v67
    %v1295 = vunpack.c.h.b16 %v67
    %v1296 = vunpack.c.l.b16 %v68
    %v1297 = vunpack.c.h.b16 %v68
    %v1298 = vunpack.c.l.b16 %v69
    %v1299 = vunpack.c.h.b16 %v69
    %v1300 = vunpack.c.l.b16 %v70
    %v1301 = vunpack.c.h.b16 %v70
    %v1302 = vunpack.c.l.b16 %v71
    %v1303 = vunpack.c.h.b16 %v71
    %v1304 = vunpack.c.l.b16 %v72
    %v1305 = vunpack.c.h.b16 %v72
    %v1306 = vunpack.c.l.b16 %v73
    %v1307 = vunpack.c.h.b16 %v73
    %v1308 = vunpack.c.l.b16 %v74
    %v1309 = vunpack.c.h.b16 %v74
    %v1310 = vunpack.c.l.b16 %v75
    %v1311 = vunpack.c.h.b16 %v75
    %v1312 = vunpack.c.l.b16 %v76
    %v1313 = vunpack.c.h.b16 %v76
    %v1314 = vunpack.c.l.b16 %v77
    %v1315 = vunpack.c.h.b16 %v77
    %v1316 = vunpack.c.l.b16 %v78
    %v1317 = vunpack.c.h.b16 %v78
    %v1318 = vunpack.c.l.b16 %v79
    %v1319 = vunpack.c.h.b16 %v79
    %v1320 = vunpack.c.l.b16 %v80
    %v1321 = vunpack.c.h.b16 %v80
    %v1322 = vunpack.c.l.b16 %v81
    %v1323 = vunpack.c.h.b16 %v81
    %v1324 = vunpack.c.l.b16 %v82
    %v1325 = vunpack.c.h.b16 %v82
    %v1326 = vunpack.c.l.b16 %v83
    %v1327 = vunpack.c.h.b16 %v83
    %v1328 = vunpack.c.l.b16 %v84
    %v1329 = vunpack.c.h.b16 %v84
    %v1330 = vunpack.c.l.b16 %v85
    %v1331 = vunpack.c.h.b16 %v85
    %v1332 = vunpack.c.l.b16 %v86
    %v1333 = vunpack.c.h.b16 %v86
    %v1334 = vunpack.c.l.b16 %v87
    %v1335 = vunpack.c.h.b16 %v87
    %v1336 = vunpack.c.l.b16 %v88
    %v1337 = vunpack.c.h.b16 %v88
    %v1338 = vunpack.c.l.b16 %v89
    %v1339 = vunpack.c.h.b16 %v89
    %v1340 = vunpack.c.l.b16 %v90
    %v1341 = vunpack.c.h.b16 %v90
    %v1342 = vunpack.c.l.b16 %v91
    %v1343 = vunpack.c.h.b16 %v91
    %v1344 = vunpack.c.l.b16 %v92
    %v1345 = vunpack.c.h.b16 %v92
    %v1346 = vunpack.c.l.b16 %v93
    %v1347 = vunpack.c.h.b16 %v93
    %v1348 = vunpack.c.l.b16 %v94
    %v1349 = vunpack.c.h.b16 %v94
    %v1350 = vunpack.c.l.b16 %v95
    %v1351 = vunpack.c.h.b16 %v95
    %v1352 = vunpack.c.l.b16 %v96
    %v1353 = vunpack.c.h.b16 %v96
    %v1354 = vunpack.c.l.b16 %v97
    %v1355 = vunpack.c.h.b16 %v97
    %v1356 = vunpack.c.l.b16 %v98
    %v1357 = vunpack.c.h.b16 %v98
    %v1358 = vunpack.c.l.b16 %v99
    %v1359 = vunpack.c.h.b16 %v99
    %v1360 = vunpack.c.l.b16 %v100
    %v1361 = vunpack.c.h.b16 %v100
    %v1362 = vunpack.c.l.b16 %v101
    %v1363 = vunpack.c.h.b16 %v101
    %v1364 = vunpack.c.l.b16 %v102
    %v1365 = vunpack.c.h.b16 %v102
    %v1366 = vunpack.c.l.b16 %v103
    %v1367 = vunpack.c.h.b16 %v103
    %v1368 = vunpack.c.l.b16 %v104
    %v1369 = vunpack.c.h.b16 %v104
    %v1370 = vunpack.c.l.b16 %v105
    %v1371 = vunpack.c.h.b16 %v105
    %v1372 = vunpack.c.l.b16 %v106
    %v1373 = vunpack.c.h.b16 %v106
    %v1374 = vunpack.c.l.b16 %v107
    %v1375 = vunpack.c.h.b16 %v107
    %v1376 = vunpack.c.l.b16 %v108
    %v1377 = vunpack.c.h.b16 %v108
    %v1378 = vunpack.c.l.b16 %v109
    %v1379 = vunpack.c.h.b16 %v109
    %v1380 = vunpack.c.l.b16 %v110
    %v1381 = vunpack.c.h.b16 %v110
    %v1382 = vunpack.c.l.b16 %v111
    %v1383 = vunpack.c.h.b16 %v111
    %v1384 = vunpack.c.l.b16 %v112
    %v1385 = vunpack.c.h.b16 %v112
    %v1386 = vunpack.c.l.b16 %v113
    %v1387 = vunpack.c.h.b16 %v113
    %v1388 = vunpack.c.l.b16 %v114
    %v1389 = vunpack.c.h.b16 %v114
    %v1390 = vunpack.c.l.b16 %v115
    %v1391 = vunpack.c.h.b16 %v115
    %v1392 = vunpack.c.l.b16 %v116
    %v1393 = vunpack.c.h.b16 %v116
    %v1394 = vunpack.c.l.b16 %v117
    %v1395 = vunpack.c.h.b16 %v117
    %v1396 = vunpack.c.l.b16 %v118
    %v1397 = vunpack.c.h.b16 %v118
    %v1398 = vunpack.c.l.b16 %v119
    %v1399 = vunpack.c.h.b16 %v119
    %v1400 = vunpack.c.l.b16 %v120
    %v1401 = vunpack.c.h.b16 %v120
    %v1402 = vunpack.c.l.b16 %v121
    %v1403 = vunpack.c.h.b16 %v121
    %v1404 = vunpack.c.l.b16 %v122
    %v1405 = vunpack.c.h.b16 %v122
    %v1406 = vunpack.c.l.b16 %v123
    %v1407 = vunpack.c.h.b16 %v123
    %v1408 = vunpack.c.l.b16 %v124
    %v1409 = vunpack.c.h.b16 %v124
    %v1410 = vunpack.c.l.b16 %v125
    %v1411 = vunpack.c.h.b16 %v125
    %v1412 = vunpack.c.l.b16 %v126
    %v1413 = vunpack.c.h.b16 %v126
    %v1414 = vunpack.c.l.b16 %v127
    %v1415 = vunpack.c.h.b16 %v127
    %v1416 = vunpack.c.l.b16 %v128
    %v1417 = vunpack.c.h.b16 %v128
    %v1418 = vunpack.c.l.b16 %v129
    %v1419 = vunpack.c.h.b16 %v129
    %v1420 = vunpack.c.l.b16 %v130
    %v1421 = vunpack.c.h.b16 %v130
    %v1422 = vunpack.c.l.b16 %v131
    %v1423 = vunpack.c.h.b16 %v131
    %v1424 = vunpack.c.l.b16 %v132
    %v1425 = vunpack.c.h.b16 %v132
    %v1426 = vunpack.c.l.b16 %v133
    %v1427 = vunpack.c.h.b16 %v133
    %v1428 = vunpack.c.l.b16 %v134
    %v1429 = vunpack.c.h.b16 %v134
    %v1430 = vunpack.c.l.b16 %v135
    %v1431 = vunpack.c.h.b16 %v135
    %v1432 = vunpack.c.l.b16 %v136
    %v1433 = vunpack.c.h.b16 %v136
    %v1434 = vunpack.c.l.b16 %v137
    %v1435 = vunpack.c.h.b16 %v137
    %v1436 = vunpack.c.l.b16 %v138
    %v1437 = vunpack.c.h.b16 %v138
    %v1438 = vunpack.c.l.b16 %v139
    %v1439 = vunpack.c.h.b16 %v139
    %v1440 = vunpack.c.l.b16 %v140
    %v1441 = vunpack.c.h.b16 %v140
    %v1442 = vunpack.c.l.b16 %v141
    %v1443 = vunpack.c.h.b16 %v141
    %v1444 = vunpack.c.l.b16 %v142
    %v1445 = vunpack.c.h.b16 %v142
    %v1446 = vunpack.c.l.b16 %v143
    %v1447 = vunpack.c.h.b16 %v143
    %v1448 = vunpack.c.l.b16 %v144
    %v1449 = vunpack.c.h.b16 %v144
    %v1450 = vunpack.c.l.b16 %v145
    %v1451 = vunpack.c.h.b16 %v145
    %v1452 = vunpack.c.l.b16 %v146
    %v1453 = vunpack.c.h.b16 %v146
    %v1454 = vunpack.c.l.b16 %v147
    %v1455 = vunpack.c.h.b16 %v147
    %v1456 = vunpack.c.l.b16 %v148
    %v1457 = vunpack.c.h.b16 %v148
    %v1458 = vunpack.c.l.b16 %v149
    %v1459 = vunpack.c.h.b16 %v149
    %v1460 = vunpack.c.l.b16 %v150
    %v1461 = vunpack.c.h.b16 %v150
    %v1462 = vunpack.c.l.b16 %v151
    %v1463 = vunpack.c.h.b16 %v151
    %v1464 = vunpack.c.l.b16 %v152
    %v1465 = vunpack.c.h.b16 %v152
    %v1466 = vunpack.c.l.b16 %v153
    %v1467 = vunpack.c.h.b16 %v153
    %v1468 = vunpack.c.l.b16 %v154
    %v1469 = vunpack.c.h.b16 %v154
    %v1470 = vunpack.c.l.b16 %v155
    %v1471 = vunpack.c.h.b16 %v155
    %v1472 = vunpack.c.l.b16 %v156
    %v1473 = vunpack.c.h.b16 %v156
    %v1474 = vunpack.c.l.b16 %v157
    %v1475 = vunpack.c.h.b16 %v157
    %v1476 = vunpack.c.l.b16 %v158
    %v1477 = vunpack.c.h.b16 %v158
    %v1478 = vunpack.c.l.b16 %v159
    %v1479 = vunpack.c.h.b16 %v159
    %v1480 = vunpack.c.l.b16 %v160
    %v1481 = vunpack.c.h.b16 %v160
    %v1482 = vunpack.c.l.b16 %v161
    %v1483 = vunpack.c.h.b16 %v161
    %v1484 = vunpack.c.l.b16 %v162
    %v1485 = vunpack.c.h.b16 %v162
    %v1486 = vunpack.c.l.b16 %v163
    %v1487 = vunpack.c.h.b16 %v163
    %v1488 = vpack.c.b16 %v1236, %v1232
    %v1489 = vpack.c.b16 %v1237, %v1233
    %v1490 = vpack.c.b16 %v1238, %v1234
    %v1491 = vpack.c.b16 %v1239, %v1235
    %v1492 = vpack.c.b16 %v1244, %v1240
    %v1493 = vpack.c.b16 %v1245, %v1241
    %v1494 = vpack.c.b16 %v1246, %v1242
    %v1495 = vpack.c.b16 %v1247, %v1243
    %v1496 = vpack.c.b16 %v1252, %v1248
    %v1497 = vpack.c.b16 %v1253, %v1249
    %v1498 = vpack.c.b16 %v1254, %v1250
    %v1499 = vpack.c.b16 %v1255, %v1251
    %v1500 = vpack.c.b16 %v1260, %v1256
    %v1501 = vpack.c.b16 %v1261, %v1257
    %v1502 = vpack.c.b16 %v1262, %v1258
    %v1503 = vpack.c.b16 %v1263, %v1259
    %v1504 = vpack.c.b16 %v1268, %v1264
    %v1505 = vpack.c.b16 %v1269, %v1265
    %v1506 = vpack.c.b16 %v1270, %v1266
    %v1507 = vpack.c.b16 %v1271, %v1267
    %v1508 = vpack.c.b16 %v1276, %v1272
    %v1509 = vpack.c.b16 %v1277, %v1273
    %v1510 = vpack.c.b16 %v1278, %v1274
    %v1511 = vpack.c.b16 %v1279, %v1275
    %v1512 = vpack.c.b16 %v1284, %v1280
    %v1513 = vpack.c.b16 %v1285, %v1281
    %v1514 = vpack.c.b16 %v1286, %v1282
    %v1515 = vpack.c.b16 %v1287, %v1283
    %v1516 = vpack.c.b16 %v1292, %v1288
    %v1517 = vpack.c.b16 %v1293, %v1289
    %v1518 = vpack.c.b16 %v1294, %v1290
    %v1519 = vpack.c.b16 %v1295, %v1291
    %v1520 = vpack.c.b16 %v1300, %v1296
    %v1521 = vpack.c.b16 %v1301, %v1297
    %v1522 = vpack.c.b16 %v1302, %v1298
    %v1523 = vpack.c.b16 %v1303, %v1299
    %v1524 = vpack.c.b16 %v1308, %v1304
    %v1525 = vpack.c.b16 %v1309, %v1305
    %v1526 = vpack.c.b16 %v1310, %v1306
    %v1527 = vpack.c.b16 %v1311, %v1307
    %v1528 = vpack.c.b16 %v1316, %v1312
    %v1529 = vpack.c.b16 %v1317, %v1313
    %v1530 = vpack.c.b16 %v1318, %v1314
    %v1531 = vpack.c.b16 %v1319, %v1315
    %v1532 = vpack.c.b16 %v1324, %v1320
    %v1533 = vpack.c.b16 %v1325, %v1321
    %v1534 = vpack.c.b16 %v1326, %v1322
    %v1535 = vpack.c.b16 %v1327, %v1323
    %v1536 = vpack.c.b16 %v1332, %v1328
    %v1537 = vpack.c.b16 %v1333, %v1329
    %v1538 = vpack.c.b16 %v1334, %v1330
    %v1539 = vpack.c.b16 %v1335, %v1331
    %v1540 = vpack.c.b16 %v1340, %v1336
    %v1541 = vpack.c.b16 %v1341, %v1337
    %v1542 = vpack.c.b16 %v1342, %v1338
    %v1543 = vpack.c.b16 %v1343, %v1339
    %v1544 = vpack.c.b16 %v1348, %v1344
    %v1545 = vpack.c.b16 %v1349, %v1345
    %v1546 = vpack.c.b16 %v1350, %v1346
    %v1547 = vpack.c.b16 %v1351, %v1347
    %v1548 = vpack.c.b16 %v1356, %v1352
    %v1549 = vpack.c.b16 %v1357, %v1353
    %v1550 = vpack.c.b16 %v1358, %v1354
    %v1551 = vpack.c.b16 %v1359, %v1355
    %v1552 = vpack.c.b16 %v1364, %v1360
    %v1553 = vpack.c.b16 %v1365, %v1361
    %v1554 = vpack.c.b16 %v1366, %v1362
    %v1555 = vpack.c.b16 %v1367, %v1363
    %v1556 = vpack.c.b16 %v1372, %v1368
    %v1557 = vpack.c.b16 %v1373, %v1369
    %v1558 = vpack.c.b16 %v1374, %v1370
    %v1559 = vpack.c.b16 %v1375, %v1371
    %v1560 = vpack.c.b16 %v1380, %v1376
    %v1561 = vpack.c.b16 %v1381, %v1377
    %v1562 = vpack.c.b16 %v1382, %v1378
    %v1563 = vpack.c.b16 %v1383, %v1379
    %v1564 = vpack.c.b16 %v1388, %v1384
    %v1565 = vpack.c.b16 %v1389, %v1385
    %v1566 = vpack.c.b16 %v1390, %v1386
    %v1567 = vpack.c.b16 %v1391, %v1387
    %v1568 = vpack.c.b16 %v1396, %v1392
    %v1569 = vpack.c.b16 %v1397, %v1393
    %v1570 = vpack.c.b16 %v1398, %v1394
    %v1571 = vpack.c.b16 %v1399, %v1395
    %v1572 = vpack.c.b16 %v1404, %v1400
    %v1573 = vpack.c.b16 %v1405, %v1401
    %v1574 = vpack.c.b16 %v1406, %v1402
    %v1575 = vpack.c.b16 %v1407, %v1403
    %v1576 = vpack.c.b16 %v1412, %v1408
    %v1577 = vpack.c.b16 %v1413, %v1409
    %v1578 = vpack.c.b16 %v1414, %v1410
    %v1579 = vpack.c.b16 %v1415, %v1411
    %v1580 = vpack.c.b16 %v1420, %v1416
    %v1581 = vpack.c.b16 %v1421, %v1417
    %v1582 = vpack.c.b16 %v1422, %v1418
    %v1583 = vpack.c.b16 %v1423, %v1419
    %v1584 = vpack.c.b16 %v1428, %v1424
    %v1585 = vpack.c.b16 %v1429, %v1425
    %v1586 = vpack.c.b16 %v1430, %v1426
    %v1587 = vpack.c.b16 %v1431, %v1427
    %v1588 = vpack.c.b16 %v1436, %v1432
    %v1589 = vpack.c.b16 %v1437, %v1433
    %v1590 = vpack.c.b16 %v1438, %v1434
    %v1591 = vpack.c.b16 %v1439, %v1435
    %v1592 = vpack.c.b16 %v1444, %v1440
    %v1593 = vpack.c.b16 %v1445, %v1441
    %v1594 = vpack.c.b16 %v1446, %v1442
    %v1595 = vpack.c.b16 %v1447, %v1443
    %v1596 = vpack.c.b16 %v1452, %v1448
    %v1597 = vpack.c.b16 %v1453, %v1449
    %v1598 = vpack.c.b16 %v1454, %v1450
    %v1599 = vpack.c.b16 %v1455, %v1451
    %v1600 = vpack.c.b16 %v1460, %v1456
    %v1601 = vpack.c.b16 %v1461, %v1457
    %v1602 = vpack.c.b16 %v1462, %v1458
    %v1603 = vpack.c.b16 %v1463, %v1459
    %v1604 = vpack.c.b16 %v1468, %v1464
    %v1605 = vpack.c.b16 %v1469, %v1465
    %v1606 = vpack.c.b16 %v1470, %v1466
    %v1607 = vpack.c.b16 %v1471, %v1467
    %v1608 = vpack.c.b16 %v1476, %v1472
    %v1609 = vpack.c.b16 %v1477, %v1473
    %v1610 = vpack.c.b16 %v1478, %v1474
    %v1611 = vpack.c.b16 %v1479, %v1475
    %v1612 = vpack.c.b16 %v1484, %v1480
    %v1613 = vpack.c.b16 %v1485, %v1481
    %v1614 = vpack.c.b16 %v1486, %v1482
    %v1615 = vpack.c.b16 %v1487, %v1483
    %1744 = vmatprep.subr.bf16.mxu0 %v1517
    %1745 = vmatpush1.bf16.msra.mxu0 %v1516
    %1746 = vmatprep.subr.bf16.mxu0 %v1513
    %1747 = vmatpush1.bf16.msra.mxu0 %v1512
    %1748 = vmatprep.subr.bf16.mxu0 %v1509
    %1749 = vmatpush1.bf16.msra.mxu0 %v1508
    %1750 = vmatprep.subr.bf16.mxu0 %v1505
    %1751 = vmatpush1.bf16.msra.mxu0 %v1504
    %1752 = vmatprep.subr.bf16.mxu0 %v1501
    %1753 = vmatpush1.bf16.msra.mxu0 %v1500
    %1754 = vmatprep.subr.bf16.mxu0 %v1497
    %1755 = vmatpush1.bf16.msra.mxu0 %v1496
    %1756 = vmatprep.subr.bf16.mxu0 %v1493
    %1757 = vmatpush1.bf16.msra.mxu0 %v1492
    %1758 = vmatprep.subr.bf16.mxu0 %v1489
    %1759 = vmatpush1.bf16.msra.mxu0 %v1488
    %1760 = vmatprep.subr.bf16.mxu0 %v1549
    %1761 = vmatpush2.bf16.msra.mxu0 %v1548
    %1762 = vmatprep.subr.bf16.mxu0 %v1545
    %1763 = vmatpush2.bf16.msra.mxu0 %v1544
    %1764 = vmatprep.subr.bf16.mxu0 %v1541
    %1765 = vmatpush2.bf16.msra.mxu0 %v1540
    %1766 = vmatprep.subr.bf16.mxu0 %v1537
    %1767 = vmatpush2.bf16.msra.mxu0 %v1536
    %1768 = vmatprep.subr.bf16.mxu0 %v1533
    %1769 = vmatpush2.bf16.msra.mxu0 %v1532
    %1770 = vmatprep.subr.bf16.mxu0 %v1529
    %1771 = vmatpush2.bf16.msra.mxu0 %v1528
    %1772 = vmatprep.subr.bf16.mxu0 %v1525
    %1773 = vmatpush2.bf16.msra.mxu0 %v1524
    %1774 = vmatprep.subr.bf16.mxu0 %v1521
    %1775 = vmatpush2.bf16.msra.mxu0 %v1520
    %1776 = vmatprep.mubr.bf16.mxu0 %v33
    %1777 = vmatmul.mubr.bf16.gmra.mxu0 %v32
    %v1778 = vpop.f32.mrf.mxu0
    %v1779 = vadd.f32 %v1016, %v1778
    %v1780 = vpop.f32.mrf.mxu0
    %v1781 = vadd.f32 %v1018, %v1780
    %v1782 = vpop.f32.mrf.mxu0
    %v1783 = vpop.f32.mrf.mxu0
    %1784 = vdwg.mxu0
    %1785 = vmatprep.subr.bf16.mxu0 %v1581
    %1786 = vmatpush1.bf16.msra.mxu0 %v1580
    %1787 = vmatprep.subr.bf16.mxu0 %v1577
    %1788 = vmatpush1.bf16.msra.mxu0 %v1576
    %1789 = vmatprep.subr.bf16.mxu0 %v1573
    %1790 = vmatpush1.bf16.msra.mxu0 %v1572
    %1791 = vmatprep.subr.bf16.mxu0 %v1569
    %1792 = vmatpush1.bf16.msra.mxu0 %v1568
    %1793 = vmatprep.subr.bf16.mxu0 %v1565
    %1794 = vmatpush1.bf16.msra.mxu0 %v1564
    %1795 = vmatprep.subr.bf16.mxu0 %v1561
    %1796 = vmatpush1.bf16.msra.mxu0 %v1560
    %1797 = vmatprep.subr.bf16.mxu0 %v1557
    %1798 = vmatpush1.bf16.msra.mxu0 %v1556
    %1799 = vmatprep.subr.bf16.mxu0 %v1553
    %1800 = vmatpush1.bf16.msra.mxu0 %v1552
    %1801 = vmatprep.subr.bf16.mxu0 %v1613
    %1802 = vmatpush2.bf16.msra.mxu0 %v1612
    %1803 = vmatprep.subr.bf16.mxu0 %v1609
    %1804 = vmatpush2.bf16.msra.mxu0 %v1608
    %1805 = vmatprep.subr.bf16.mxu0 %v1605
    %1806 = vmatpush2.bf16.msra.mxu0 %v1604
    %1807 = vmatprep.subr.bf16.mxu0 %v1601
    %1808 = vmatpush2.bf16.msra.mxu0 %v1600
    %1809 = vmatprep.subr.bf16.mxu0 %v1597
    %1810 = vmatpush2.bf16.msra.mxu0 %v1596
    %1811 = vmatprep.subr.bf16.mxu0 %v1593
    %1812 = vmatpush2.bf16.msra.mxu0 %v1592
    %1813 = vmatprep.subr.bf16.mxu0 %v1589
    %1814 = vmatpush2.bf16.msra.mxu0 %v1588
    %1815 = vmatprep.subr.bf16.mxu0 %v1585
    %1816 = vmatpush2.bf16.msra.mxu0 %v1584
    %1817 = vmatprep.mubr.bf16.mxu0 %v35
    %1818 = vmatmul.mubr.bf16.gmra.mxu0 %v34
    %v1819 = vpop.f32.mrf.mxu0
    %v1820 = vadd.f32 %v1779, %v1819
    %v1821 = vpop.f32.mrf.mxu0
    %v1822 = vadd.f32 %v1781, %v1821
    %v1823 = vpop.f32.mrf.mxu0
    %v1824 = vpop.f32.mrf.mxu0
    %1825 = vdwg.mxu0
    %1826 = vmatprep.subr.bf16.mxu0 %v1519
    %1827 = vmatpush1.bf16.msra.mxu0 %v1518
    %1828 = vmatprep.subr.bf16.mxu0 %v1515
    %1829 = vmatpush1.bf16.msra.mxu0 %v1514
    %1830 = vmatprep.subr.bf16.mxu0 %v1511
    %1831 = vmatpush1.bf16.msra.mxu0 %v1510
    %1832 = vmatprep.subr.bf16.mxu0 %v1507
    %1833 = vmatpush1.bf16.msra.mxu0 %v1506
    %1834 = vmatprep.subr.bf16.mxu0 %v1503
    %1835 = vmatpush1.bf16.msra.mxu0 %v1502
    %1836 = vmatprep.subr.bf16.mxu0 %v1499
    %1837 = vmatpush1.bf16.msra.mxu0 %v1498
    %1838 = vmatprep.subr.bf16.mxu0 %v1495
    %1839 = vmatpush1.bf16.msra.mxu0 %v1494
    %1840 = vmatprep.subr.bf16.mxu0 %v1491
    %1841 = vmatpush1.bf16.msra.mxu0 %v1490
    %1842 = vmatprep.subr.bf16.mxu0 %v1551
    %1843 = vmatpush2.bf16.msra.mxu0 %v1550
    %1844 = vmatprep.subr.bf16.mxu0 %v1547
    %1845 = vmatpush2.bf16.msra.mxu0 %v1546
    %1846 = vmatprep.subr.bf16.mxu0 %v1543
    %1847 = vmatpush2.bf16.msra.mxu0 %v1542
    %1848 = vmatprep.subr.bf16.mxu0 %v1539
    %1849 = vmatpush2.bf16.msra.mxu0 %v1538
    %1850 = vmatprep.subr.bf16.mxu0 %v1535
    %1851 = vmatpush2.bf16.msra.mxu0 %v1534
    %1852 = vmatprep.subr.bf16.mxu0 %v1531
    %1853 = vmatpush2.bf16.msra.mxu0 %v1530
    %1854 = vmatprep.subr.bf16.mxu0 %v1527
    %1855 = vmatpush2.bf16.msra.mxu0 %v1526
    %1856 = vmatprep.subr.bf16.mxu0 %v1523
    %1857 = vmatpush2.bf16.msra.mxu0 %v1522
    %1858 = vmatprep.mubr.bf16.mxu0 %v33
    %1859 = vmatmul.mubr.bf16.gmra.mxu0 %v32
    %v1860 = vpop.f32.mrf.mxu0
    %v1861 = vadd.f32 %v1098, %v1860
    %v1862 = vpop.f32.mrf.mxu0
    %v1863 = vadd.f32 %v1100, %v1862
    %v1864 = vpop.f32.mrf.mxu0
    %v1865 = vpop.f32.mrf.mxu0
    %1866 = vdwg.mxu0
    %1867 = vmatprep.subr.bf16.mxu0 %v1583
    %1868 = vmatpush1.bf16.msra.mxu0 %v1582
    %1869 = vmatprep.subr.bf16.mxu0 %v1579
    %1870 = vmatpush1.bf16.msra.mxu0 %v1578
    %1871 = vmatprep.subr.bf16.mxu0 %v1575
    %1872 = vmatpush1.bf16.msra.mxu0 %v1574
    %1873 = vmatprep.subr.bf16.mxu0 %v1571
    %1874 = vmatpush1.bf16.msra.mxu0 %v1570
    %1875 = vmatprep.subr.bf16.mxu0 %v1567
    %1876 = vmatpush1.bf16.msra.mxu0 %v1566
    %1877 = vmatprep.subr.bf16.mxu0 %v1563
    %1878 = vmatpush1.bf16.msra.mxu0 %v1562
    %1879 = vmatprep.subr.bf16.mxu0 %v1559
    %1880 = vmatpush1.bf16.msra.mxu0 %v1558
    %1881 = vmatprep.subr.bf16.mxu0 %v1555
    %1882 = vmatpush1.bf16.msra.mxu0 %v1554
    %1883 = vmatprep.subr.bf16.mxu0 %v1615
    %1884 = vmatpush2.bf16.msra.mxu0 %v1614
    %1885 = vmatprep.subr.bf16.mxu0 %v1611
    %1886 = vmatpush2.bf16.msra.mxu0 %v1610
    %1887 = vmatprep.subr.bf16.mxu0 %v1607
    %1888 = vmatpush2.bf16.msra.mxu0 %v1606
    %1889 = vmatprep.subr.bf16.mxu0 %v1603
    %1890 = vmatpush2.bf16.msra.mxu0 %v1602
    %1891 = vmatprep.subr.bf16.mxu0 %v1599
    %1892 = vmatpush2.bf16.msra.mxu0 %v1598
    %1893 = vmatprep.subr.bf16.mxu0 %v1595
    %1894 = vmatpush2.bf16.msra.mxu0 %v1594
    %1895 = vmatprep.subr.bf16.mxu0 %v1591
    %1896 = vmatpush2.bf16.msra.mxu0 %v1590
    %1897 = vmatprep.subr.bf16.mxu0 %v1587
    %1898 = vmatpush2.bf16.msra.mxu0 %v1586
    %1899 = vmatprep.mubr.bf16.mxu0 %v35
    %1900 = vmatmul.mubr.bf16.gmra.mxu0 %v34
    %v1901 = vpop.f32.mrf.mxu0
    %v1902 = vadd.f32 %v1861, %v1901
    %v1903 = vpop.f32.mrf.mxu0
    %v1904 = vadd.f32 %v1863, %v1903
    %v1905 = vpop.f32.mrf.mxu0
    %v1906 = vpop.f32.mrf.mxu0
    %1907 = vdwg.mxu0
    %v1908 = vld [vmem:[%s4] sm:$0xf]
    %v1910 = vlaneseq
    %v1911 = vshrl.u32 %v1910, 7
    %v1912 = vsub.s32 0, %v1911
    %v1913 = vrot.slane %v1908, %v1912
    %v1914 = vlaneseq
    %v1915 = vshrl.u32 %v1914, 7
    %v1916 = vsub.s32 1, %v1915
    %v1917 = vrot.slane %v1908, %v1916
    %v1918 = vlaneseq
    %v1919 = vshrl.u32 %v1918, 7
    %v1920 = vsub.s32 2, %v1919
    %v1921 = vrot.slane %v1908, %v1920
    %v1922 = vlaneseq
    %v1923 = vshrl.u32 %v1922, 7
    %v1924 = vsub.s32 3, %v1923
    %v1925 = vrot.slane %v1908, %v1924
    %v1930 = vadd.f32 %v1820, %v1913
    %v1931 = vadd.f32 %v1822, %v1917
    %v1932 = vadd.f32 %v1902, %v1921
    %v1933 = vadd.f32 %v1904, %v1925
    %v1934 = vmax.f32 %v1930, 0.0
    %v1935 = vmax.f32 %v1931, 0.0
    %v1936 = vmax.f32 %v1932, 0.0
    %v1937 = vmax.f32 %v1933, 0.0
    %v1938 = vpack.c.bf16 %v1934, %v1934
    %v1939 = vpack.c.bf16 %v1935, %v1935
    %v1940 = vpack.c.bf16 %v1936, %v1936
    %v1941 = vpack.c.bf16 %v1937, %v1937
    %v1942 = vld [vmem:[%s5] sm:$0xf]
    %v1943 = vld [vmem:[%s5 + $0x4] sm:$0xf]
    %v1944 = vld [vmem:[%s5 + $0x8] sm:$0xf]
    %v1945 = vld [vmem:[%s5 + $0xc] sm:$0xf]
    %v1946 = vld [vmem:[%s5 + $0x10] sm:$0xf]
    %v1947 = vld [vmem:[%s5 + $0x14] sm:$0xf]
    %v1948 = vld [vmem:[%s5 + $0x18] sm:$0xf]
    %v1949 = vld [vmem:[%s5 + $0x1c] sm:$0xf]
    %v1950 = vld [vmem:[%s5 + $0x20] sm:$0xf]
    %v1951 = vld [vmem:[%s5 + $0x24] sm:$0xf]
    %v1952 = vld [vmem:[%s5 + $0x28] sm:$0xf]
    %v1953 = vld [vmem:[%s5 + $0x2c] sm:$0xf]
    %v1954 = vld [vmem:[%s5 + $0x30] sm:$0xf]
    %v1955 = vld [vmem:[%s5 + $0x34] sm:$0xf]
    %v1956 = vld [vmem:[%s5 + $0x38] sm:$0xf]
    %v1957 = vld [vmem:[%s5 + $0x3c] sm:$0xf]
    %v1958 = vld [vmem:[%s5 + $0x40] sm:$0xf]
    %v1959 = vld [vmem:[%s5 + $0x44] sm:$0xf]
    %v1960 = vld [vmem:[%s5 + $0x48] sm:$0xf]
    %v1961 = vld [vmem:[%s5 + $0x4c] sm:$0xf]
    %v1962 = vld [vmem:[%s5 + $0x50] sm:$0xf]
    %v1963 = vld [vmem:[%s5 + $0x54] sm:$0xf]
    %v1964 = vld [vmem:[%s5 + $0x58] sm:$0xf]
    %v1965 = vld [vmem:[%s5 + $0x5c] sm:$0xf]
    %v1966 = vld [vmem:[%s5 + $0x60] sm:$0xf]
    %v1967 = vld [vmem:[%s5 + $0x64] sm:$0xf]
    %v1968 = vld [vmem:[%s5 + $0x68] sm:$0xf]
    %v1969 = vld [vmem:[%s5 + $0x6c] sm:$0xf]
    %v1970 = vld [vmem:[%s5 + $0x70] sm:$0xf]
    %v1971 = vld [vmem:[%s5 + $0x74] sm:$0xf]
    %v1972 = vld [vmem:[%s5 + $0x78] sm:$0xf]
    %v1973 = vld [vmem:[%s5 + $0x7c] sm:$0xf]
    %v1974 = vld [vmem:[%s5 + $0x80] sm:$0xf]
    %v1975 = vld [vmem:[%s5 + $0x84] sm:$0xf]
    %v1976 = vld [vmem:[%s5 + $0x88] sm:$0xf]
    %v1977 = vld [vmem:[%s5 + $0x8c] sm:$0xf]
    %v1978 = vld [vmem:[%s5 + $0x90] sm:$0xf]
    %v1979 = vld [vmem:[%s5 + $0x94] sm:$0xf]
    %v1980 = vld [vmem:[%s5 + $0x98] sm:$0xf]
    %v1981 = vld [vmem:[%s5 + $0x9c] sm:$0xf]
    %v1982 = vld [vmem:[%s5 + $0xa0] sm:$0xf]
    %v1983 = vld [vmem:[%s5 + $0xa4] sm:$0xf]
    %v1984 = vld [vmem:[%s5 + $0xa8] sm:$0xf]
    %v1985 = vld [vmem:[%s5 + $0xac] sm:$0xf]
    %v1986 = vld [vmem:[%s5 + $0xb0] sm:$0xf]
    %v1987 = vld [vmem:[%s5 + $0xb4] sm:$0xf]
    %v1988 = vld [vmem:[%s5 + $0xb8] sm:$0xf]
    %v1989 = vld [vmem:[%s5 + $0xbc] sm:$0xf]
    %v1990 = vld [vmem:[%s5 + $0xc0] sm:$0xf]
    %v1991 = vld [vmem:[%s5 + $0xc4] sm:$0xf]
    %v1992 = vld [vmem:[%s5 + $0xc8] sm:$0xf]
    %v1993 = vld [vmem:[%s5 + $0xcc] sm:$0xf]
    %v1994 = vld [vmem:[%s5 + $0xd0] sm:$0xf]
    %v1995 = vld [vmem:[%s5 + $0xd4] sm:$0xf]
    %v1996 = vld [vmem:[%s5 + $0xd8] sm:$0xf]
    %v1997 = vld [vmem:[%s5 + $0xdc] sm:$0xf]
    %v1998 = vld [vmem:[%s5 + $0xe0] sm:$0xf]
    %v1999 = vld [vmem:[%s5 + $0xe4] sm:$0xf]
    %v2000 = vld [vmem:[%s5 + $0xe8] sm:$0xf]
    %v2001 = vld [vmem:[%s5 + $0xec] sm:$0xf]
    %v2002 = vld [vmem:[%s5 + $0xf0] sm:$0xf]
    %v2003 = vld [vmem:[%s5 + $0xf4] sm:$0xf]
    %v2004 = vld [vmem:[%s5 + $0xf8] sm:$0xf]
    %v2005 = vld [vmem:[%s5 + $0xfc] sm:$0xf]
    %v2006 = vld [vmem:[%s6] sm:$0x1]
    %v2008 = vlaneseq
    %v2009 = vshrl.u32 %v2008, 7
    %v2010 = vsub.s32 0, %v2009
    %v2011 = vrot.slane %v2006, %v2010
    %v2077 = vunpack.c.l.b16 %v1942
    %v2078 = vunpack.c.l.b16 %v1943
    %v2079 = vunpack.c.l.b16 %v1944
    %v2080 = vunpack.c.l.b16 %v1945
    %v2081 = vunpack.c.l.b16 %v1946
    %v2082 = vunpack.c.l.b16 %v1947
    %v2083 = vunpack.c.l.b16 %v1948
    %v2084 = vunpack.c.l.b16 %v1949
    %v2085 = vunpack.c.l.b16 %v1950
    %v2086 = vunpack.c.l.b16 %v1951
    %v2087 = vunpack.c.l.b16 %v1952
    %v2088 = vunpack.c.l.b16 %v1953
    %v2089 = vunpack.c.l.b16 %v1954
    %v2090 = vunpack.c.l.b16 %v1955
    %v2091 = vunpack.c.l.b16 %v1956
    %v2092 = vunpack.c.l.b16 %v1957
    %v2093 = vunpack.c.l.b16 %v1958
    %v2094 = vunpack.c.l.b16 %v1959
    %v2095 = vunpack.c.l.b16 %v1960
    %v2096 = vunpack.c.l.b16 %v1961
    %v2097 = vunpack.c.l.b16 %v1962
    %v2098 = vunpack.c.l.b16 %v1963
    %v2099 = vunpack.c.l.b16 %v1964
    %v2100 = vunpack.c.l.b16 %v1965
    %v2101 = vunpack.c.l.b16 %v1966
    %v2102 = vunpack.c.l.b16 %v1967
    %v2103 = vunpack.c.l.b16 %v1968
    %v2104 = vunpack.c.l.b16 %v1969
    %v2105 = vunpack.c.l.b16 %v1970
    %v2106 = vunpack.c.l.b16 %v1971
    %v2107 = vunpack.c.l.b16 %v1972
    %v2108 = vunpack.c.l.b16 %v1973
    %v2109 = vunpack.c.l.b16 %v1974
    %v2110 = vunpack.c.l.b16 %v1975
    %v2111 = vunpack.c.l.b16 %v1976
    %v2112 = vunpack.c.l.b16 %v1977
    %v2113 = vunpack.c.l.b16 %v1978
    %v2114 = vunpack.c.l.b16 %v1979
    %v2115 = vunpack.c.l.b16 %v1980
    %v2116 = vunpack.c.l.b16 %v1981
    %v2117 = vunpack.c.l.b16 %v1982
    %v2118 = vunpack.c.l.b16 %v1983
    %v2119 = vunpack.c.l.b16 %v1984
    %v2120 = vunpack.c.l.b16 %v1985
    %v2121 = vunpack.c.l.b16 %v1986
    %v2122 = vunpack.c.l.b16 %v1987
    %v2123 = vunpack.c.l.b16 %v1988
    %v2124 = vunpack.c.l.b16 %v1989
    %v2125 = vunpack.c.l.b16 %v1990
    %v2126 = vunpack.c.l.b16 %v1991
    %v2127 = vunpack.c.l.b16 %v1992
    %v2128 = vunpack.c.l.b16 %v1993
    %v2129 = vunpack.c.l.b16 %v1994
    %v2130 = vunpack.c.l.b16 %v1995
    %v2131 = vunpack.c.l.b16 %v1996
    %v2132 = vunpack.c.l.b16 %v1997
    %v2133 = vunpack.c.l.b16 %v1998
    %v2134 = vunpack.c.l.b16 %v1999
    %v2135 = vunpack.c.l.b16 %v2000
    %v2136 = vunpack.c.l.b16 %v2001
    %v2137 = vunpack.c.l.b16 %v2002
    %v2138 = vunpack.c.l.b16 %v2003
    %v2139 = vunpack.c.l.b16 %v2004
    %v2140 = vunpack.c.l.b16 %v2005
    %v2141 = vpack.c.b16 %v2078, %v2077
    %v2142 = vpack.c.b16 %v2080, %v2079
    %v2143 = vpack.c.b16 %v2082, %v2081
    %v2144 = vpack.c.b16 %v2084, %v2083
    %v2145 = vpack.c.b16 %v2086, %v2085
    %v2146 = vpack.c.b16 %v2088, %v2087
    %v2147 = vpack.c.b16 %v2090, %v2089
    %v2148 = vpack.c.b16 %v2092, %v2091
    %v2149 = vpack.c.b16 %v2094, %v2093
    %v2150 = vpack.c.b16 %v2096, %v2095
    %v2151 = vpack.c.b16 %v2098, %v2097
    %v2152 = vpack.c.b16 %v2100, %v2099
    %v2153 = vpack.c.b16 %v2102, %v2101
    %v2154 = vpack.c.b16 %v2104, %v2103
    %v2155 = vpack.c.b16 %v2106, %v2105
    %v2156 = vpack.c.b16 %v2108, %v2107
    %v2157 = vpack.c.b16 %v2110, %v2109
    %v2158 = vpack.c.b16 %v2112, %v2111
    %v2159 = vpack.c.b16 %v2114, %v2113
    %v2160 = vpack.c.b16 %v2116, %v2115
    %v2161 = vpack.c.b16 %v2118, %v2117
    %v2162 = vpack.c.b16 %v2120, %v2119
    %v2163 = vpack.c.b16 %v2122, %v2121
    %v2164 = vpack.c.b16 %v2124, %v2123
    %v2165 = vpack.c.b16 %v2126, %v2125
    %v2166 = vpack.c.b16 %v2128, %v2127
    %v2167 = vpack.c.b16 %v2130, %v2129
    %v2168 = vpack.c.b16 %v2132, %v2131
    %v2169 = vpack.c.b16 %v2134, %v2133
    %v2170 = vpack.c.b16 %v2136, %v2135
    %v2171 = vpack.c.b16 %v2138, %v2137
    %v2172 = vpack.c.b16 %v2140, %v2139
    %2205 = vmatprep.subr.bf16.mxu0 0
    %2206 = vmatpush1.bf16.msra.mxu0 %v2148
    %2207 = vmatprep.subr.bf16.mxu0 0
    %2208 = vmatpush1.bf16.msra.mxu0 %v2147
    %2209 = vmatprep.subr.bf16.mxu0 0
    %2210 = vmatpush1.bf16.msra.mxu0 %v2146
    %2211 = vmatprep.subr.bf16.mxu0 0
    %2212 = vmatpush1.bf16.msra.mxu0 %v2145
    %2213 = vmatprep.subr.bf16.mxu0 0
    %2214 = vmatpush1.bf16.msra.mxu0 %v2144
    %2215 = vmatprep.subr.bf16.mxu0 0
    %2216 = vmatpush1.bf16.msra.mxu0 %v2143
    %2217 = vmatprep.subr.bf16.mxu0 0
    %2218 = vmatpush1.bf16.msra.mxu0 %v2142
    %2219 = vmatprep.subr.bf16.mxu0 0
    %2220 = vmatpush1.bf16.msra.mxu0 %v2141
    %2221 = vmatprep.subr.bf16.mxu0 0
    %2222 = vmatpush2.bf16.msra.mxu0 %v2156
    %2223 = vmatprep.subr.bf16.mxu0 0
    %2224 = vmatpush2.bf16.msra.mxu0 %v2155
    %2225 = vmatprep.subr.bf16.mxu0 0
    %2226 = vmatpush2.bf16.msra.mxu0 %v2154
    %2227 = vmatprep.subr.bf16.mxu0 0
    %2228 = vmatpush2.bf16.msra.mxu0 %v2153
    %2229 = vmatprep.subr.bf16.mxu0 0
    %2230 = vmatpush2.bf16.msra.mxu0 %v2152
    %2231 = vmatprep.subr.bf16.mxu0 0
    %2232 = vmatpush2.bf16.msra.mxu0 %v2151
    %2233 = vmatprep.subr.bf16.mxu0 0
    %2234 = vmatpush2.bf16.msra.mxu0 %v2150
    %2235 = vmatprep.subr.bf16.mxu0 0
    %2236 = vmatpush2.bf16.msra.mxu0 %v2149
    %2237 = vmatprep.mubr.bf16.mxu0 %v1939
    %2238 = vmatmul.mubr.bf16.gmra.mxu0 %v1938
    %v2239 = vpop.f32.mrf.mxu0
    %v2240 = vadd.f32 %v2011, %v2239
    %v2241 = vpop.f32.mrf.mxu0
    %v2242 = vpop.f32.mrf.mxu0
    %v2243 = vpop.f32.mrf.mxu0
    %2244 = vdwg.mxu0
    %2245 = vmatprep.subr.bf16.mxu0 0
    %2246 = vmatpush1.bf16.msra.mxu0 %v2164
    %2247 = vmatprep.subr.bf16.mxu0 0
    %2248 = vmatpush1.bf16.msra.mxu0 %v2163
    %2249 = vmatprep.subr.bf16.mxu0 0
    %2250 = vmatpush1.bf16.msra.mxu0 %v2162
    %2251 = vmatprep.subr.bf16.mxu0 0
    %2252 = vmatpush1.bf16.msra.mxu0 %v2161
    %2253 = vmatprep.subr.bf16.mxu0 0
    %2254 = vmatpush1.bf16.msra.mxu0 %v2160
    %2255 = vmatprep.subr.bf16.mxu0 0
    %2256 = vmatpush1.bf16.msra.mxu0 %v2159
    %2257 = vmatprep.subr.bf16.mxu0 0
    %2258 = vmatpush1.bf16.msra.mxu0 %v2158
    %2259 = vmatprep.subr.bf16.mxu0 0
    %2260 = vmatpush1.bf16.msra.mxu0 %v2157
    %2261 = vmatprep.subr.bf16.mxu0 0
    %2262 = vmatpush2.bf16.msra.mxu0 %v2172
    %2263 = vmatprep.subr.bf16.mxu0 0
    %2264 = vmatpush2.bf16.msra.mxu0 %v2171
    %2265 = vmatprep.subr.bf16.mxu0 0
    %2266 = vmatpush2.bf16.msra.mxu0 %v2170
    %2267 = vmatprep.subr.bf16.mxu0 0
    %2268 = vmatpush2.bf16.msra.mxu0 %v2169
    %2269 = vmatprep.subr.bf16.mxu0 0
    %2270 = vmatpush2.bf16.msra.mxu0 %v2168
    %2271 = vmatprep.subr.bf16.mxu0 0
    %2272 = vmatpush2.bf16.msra.mxu0 %v2167
    %2273 = vmatprep.subr.bf16.mxu0 0
    %2274 = vmatpush2.bf16.msra.mxu0 %v2166
    %2275 = vmatprep.subr.bf16.mxu0 0
    %2276 = vmatpush2.bf16.msra.mxu0 %v2165
    %2277 = vmatprep.mubr.bf16.mxu0 %v1941
    %2278 = vmatmul.mubr.bf16.gmra.mxu0 %v1940
    %v2279 = vpop.f32.mrf.mxu0
    %v2280 = vadd.f32 %v2240, %v2279
    %v2281 = vpop.f32.mrf.mxu0
    %v2282 = vpop.f32.mrf.mxu0
    %v2283 = vpop.f32.mrf.mxu0
    %2284 = vdwg.mxu0
    %2285 = vst [vmem:[#allocation2] sm:$0xff] %v2280
    // Predicated region
    $region30: #{episodic_curiosity_forward.9} parent=1 // pred_check
      _
    $region31: #{episodic_curiosity_forward.9} parent=1 // pred_check_branch
      %2287 = sbr.rel (0) target = $region33
    $region32: #{episodic_curiosity_forward.9} parent=1 // pred_region
      %s2289 = ssub.s32 128, 128
      %2290 = vsyncadd [#allocation3], %s2289
      %s2292 = sshll.u32 [#allocation2], 4
      %s2293 = int_to_ptr.vmem [resolvable:$true] %s2292
      %2295 = dma.vmem_to_hbm [thread:$0]  %s2293, 128, %s7, [#allocation3]
    $region33: #{episodic_curiosity_forward.9} parent=1 // pred_fallthru
      _
    // Predicated region
    $region34: #{episodic_curiosity_forward.9} parent=1 // pred_check
      _
    $region35: #{episodic_curiosity_forward.9} parent=1 // pred_check_branch
      %2297 = sbr.rel (0) target = $region37
    $region36: #{episodic_curiosity_forward.9} parent=1 // pred_region
      %2298 = dma.done [#allocation3], 128
    $region37: #{episodic_curiosity_forward.9} parent=1 // pred_fallthru
      _
    %2299 = vsyncpa [#allocation3], 1

</llo_original>
